<compile_context>
chip_gen: v5e
topology: v5e:2x2
jax: 0.10.0
libtpu: 0.0.40
codegen_flags: <defaults>
</compile_context>

<pallas_src>
import jax
import jax.numpy as jnp
from jax import lax
from jax.experimental import pallas as pl
from jax.experimental.pallas import tpu as pltpu


# ----------------------------------------------------------------------------
# Fused kernel: one batch sample per grid step.
# ----------------------------------------------------------------------------
def _fused_tiny_conv_kernel(p_ref, w1_ref, b1_ref, w2_ref, b2_ref,
                            wf_ref, bf_ref, y_ref, h1_ref):
    """Per-grid-step shapes:
      p_ref : (1, 9, 27, HW) bf16  im2col patches, conv2-tap major, HW on lanes
      w1_ref: (8, 27)        bf16  conv1 weight (Cout1, Cin*3*3)
      b1_ref: (8, 1)         f32
      w2_ref: (16, 72)       f32   conv2 weight, K tap-major: k = tap*8 + cin1
      b2_ref: (16, 1)        f32
      wf_ref: (16, 5, HW)    f32   fc weight, channel-major (contiguous slices)
      bf_ref: (5, 1)         f32
      y_ref : (1, 5, 1)      f32   logits for this sample
      h1_ref: (72, HW)       f32   VMEM scratch: stacked ReLU'd conv1 taps
    """
    n_taps = p_ref.shape[1]          # 9
    hw = p_ref.shape[3]              # 784
    cout1 = w1_ref.shape[0]          # 8
    cout2 = w2_ref.shape[0]          # 16
    ncls = bf_ref.shape[0]           # 5

    # ---- conv1 + ReLU: one small bf16 MXU matmul per conv2 tap -------------
    w1 = w1_ref[...]                                        # hoisted load
    b1b = jnp.broadcast_to(b1_ref[...], (cout1, hw))        # hoisted broadcast
    for k in range(n_taps):                                 # unrolled (9)
        g = jnp.dot(w1, p_ref[0, k],
                    preferred_element_type=jnp.float32) + b1b
        h1_ref[cout1 * k:cout1 * (k + 1), :] = jnp.maximum(g, 0.0)

    # ---- conv2 + ReLU: ONE K=72 MXU matmul over the stacked taps -----------
    b2b = jnp.broadcast_to(b2_ref[...], (cout2, hw))
    h2 = jnp.maximum(
        jnp.dot(w2_ref[...], h1_ref[...],
                preferred_element_type=jnp.float32) + b2b, 0.0)      # (16, HW)

    # ---- fc: channel-chunked VPU multiply + lane reduction ------------------
    # (never materializes a (5,16,HW) temporary; temps stay well under vreg budget)
    acc = jnp.zeros((ncls, 1), jnp.float32)
    for c in range(cout2):                                  # unrolled (16)
        acc = acc + jnp.sum(wf_ref[c] * h2[c:c + 1, :],
                            axis=-1, keepdims=True)         # (5, 1)
    y_ref[...] = (acc + bf_ref[...])[None]                  # (1, 5, 1)


# ----------------------------------------------------------------------------
# Wrapper: host-side layout plumbing + single pallas_call.
# ----------------------------------------------------------------------------
def tiny_conv_forward(x, params):
    """Forward pass matching TinyConvWithoutSequential. x: (N, 3, H, W)."""
    n, cin, h, w = x.shape
    assert h % 9 == 0 and w % 9 == 0, "H and W must be multiples of 9 (two stride-3 convs)"
    ho, wo = h // 9, w // 9                      # conv2 output spatial (28, 28)
    hw = ho * wo                                 # 784
    k1 = cin * 9                                 # 27
    cout1 = params["w1"].shape[0]                # 8
    cout2 = params["w2"].shape[0]                # 16
    ncls = params["wf"].shape[0]                 # 5
    assert params["wf"].shape[1] == cout2 * hw, (
        f"fc expects {params['wf'].shape[1]} features, input yields {cout2 * hw}")

    # bf16 BEFORE the space-to-depth transpose (halves transpose + patch DMA bytes).
    xb = x.astype(jnp.bfloat16)
    # Index math:  H = 9*ho2 + 3*kh2 + kh1 ,  W = 9*wo2 + 3*kw2 + kw1
    #   -> (n, kh2*3+kw2, c*9+kh1*3+kw1, ho2*wo + wo2)
    p = (xb.reshape(n, cin, ho, 3, 3, wo, 3, 3)
           .transpose(0, 3, 6, 1, 4, 7, 2, 5)    # n, kh2, kw2, c, kh1, kw1, ho2, wo2
           .reshape(n, 9, k1, hw))
    # TODO(synk): the space-to-depth rearrangement itself stays in XLA; an
    # in-kernel strided-DMA version would cut another HBM round-trip.

    w1m = params["w1"].reshape(cout1, k1).astype(jnp.bfloat16)             # (8, 27)
    b1c = params["b1"].reshape(cout1, 1)
    w2m = params["w2"].transpose(0, 2, 3, 1).reshape(cout2, 9 * cout1)     # (16, 72), K tap-major
    b2c = params["b2"].reshape(cout2, 1)
    wfc = params["wf"].reshape(ncls, cout2, hw).transpose(1, 0, 2)         # (16, 5, hw)
    bfc = params["bf"].reshape(ncls, 1)

    y = pl.pallas_call(
        _fused_tiny_conv_kernel,
        out_shape=jax.ShapeDtypeStruct((n, ncls, 1), jnp.float32),
        grid_spec=pltpu.PrefetchScalarGridSpec(
            num_scalar_prefetch=0,
            grid=(n,),
            in_specs=[
                pl.BlockSpec((1, 9, k1, hw),      lambda i: (i, 0, 0, 0)),  # patches
                pl.BlockSpec((cout1, k1),         lambda i: (0, 0)),        # w1
                pl.BlockSpec((cout1, 1),          lambda i: (0, 0)),        # b1
                pl.BlockSpec((cout2, 9 * cout1),  lambda i: (0, 0)),        # w2
                pl.BlockSpec((cout2, 1),          lambda i: (0, 0)),        # b2
                pl.BlockSpec((cout2, ncls, hw),   lambda i: (0, 0, 0)),     # wf
                pl.BlockSpec((ncls, 1),           lambda i: (0, 0)),        # bf
            ],
            out_specs=pl.BlockSpec((1, ncls, 1), lambda i: (i, 0, 0)),
            scratch_shapes=[pltpu.VMEM((9 * cout1, hw), jnp.float32)],      # h1 stack
        ),
        compiler_params=pltpu.CompilerParams(
            dimension_semantics=("parallel",),   # batch split across TCs on v7x
        ),
    )(p, w1m, b1c, w2m, b2c, wfc, bfc)

    return {"out": y.reshape(n, ncls)}


# ----------------------------------------------------------------------------
# Pure-JAX reference (correctness check only, full f32 / HIGHEST precision).
# ----------------------------------------------------------------------------
def reference_forward(x, params):
    dn1 = lax.conv_dimension_numbers(x.shape, params["w1"].shape,
                                     ("NCHW", "OIHW", "NCHW"))
    h = lax.conv_general_dilated(x, params["w1"], (3, 3), "VALID",
                                 dimension_numbers=dn1,
                                 precision=lax.Precision.HIGHEST)
    h = jnp.maximum(h + params["b1"][None, :, None, None], 0.0)
    dn2 = lax.conv_dimension_numbers(h.shape, params["w2"].shape,
                                     ("NCHW", "OIHW", "NCHW"))
    h = lax.conv_general_dilated(h, params["w2"], (3, 3), "VALID",
                                 dimension_numbers=dn2,
                                 precision=lax.Precision.HIGHEST)
    h = jnp.maximum(h + params["b2"][None, :, None, None], 0.0)
    flat = h.reshape(h.shape[0], -1)
    out = jnp.dot(flat, params["wf"].T,
                  precision=lax.Precision.HIGHEST) + params["bf"]
    return {"out": out}


def init_params(key):
    k1, k2, k3, k4, k5, k6 = jax.random.split(key, 6)
    # deterministic synthetic init (PyTorch-like scale: ~1/sqrt(fan_in))
    return {
        "w1": jax.random.normal(k1, (8, 3, 3, 3), jnp.float32) * (1.0 / (3 * 9) ** 0.5),
        "b1": jax.random.normal(k2, (8,), jnp.float32) * 0.01,
        "w2": jax.random.normal(k3, (16, 8, 3, 3), jnp.float32) * (1.0 / (8 * 9) ** 0.5),
        "b2": jax.random.normal(k4, (16,), jnp.float32) * 0.01,
        "wf": jax.random.normal(k5, (5, 12544), jnp.float32) * (1.0 / 12544 ** 0.5),
        "bf": jax.random.normal(k6, (5,), jnp.float32) * 0.01,
    }


if __name__ == "__main__":
    key = jax.random.PRNGKey(0)
    kx, kp = jax.random.split(key)
    # fc expects 12544 = 16*28*28 features -> input spatial must be 252x252.
    x = jax.random.normal(kx, (2, 3, 252, 252), jnp.float32)
    params = init_params(kp)

    fwd = jax.jit(tiny_conv_forward)
    out = jax.block_until_ready(fwd(x, params)["out"])
    ref = jax.block_until_ready(reference_forward(x, params)["out"])

    assert out.shape == (2, 5), out.shape
    err = float(jnp.max(jnp.abs(out - ref)))
    # Tolerance accounts for the bf16 cast of the input/patches/conv1 weights
    # (f32 accumulation everywhere, fc fully f32); reference is pure f32 HIGHEST.
    assert err < 2e-2, err
    print("KERNEL_OK")
</pallas_src>

<mosaic_0001>
module attributes {stable_mosaic.version = 11 : i64} {
  func.func @_fused_tiny_conv_kernel(%arg0: i32, %arg1: memref<1x9x27x784xbf16, #tpu.memory_space<vmem>>, %arg2: memref<8x27xbf16, #tpu.memory_space<vmem>>, %arg3: memref<8x1xf32, #tpu.memory_space<vmem>>, %arg4: memref<16x72xf32, #tpu.memory_space<vmem>>, %arg5: memref<16x1xf32, #tpu.memory_space<vmem>>, %arg6: memref<16x5x784xf32, #tpu.memory_space<vmem>>, %arg7: memref<5x1xf32, #tpu.memory_space<vmem>>, %arg8: memref<1x5x1xf32, #tpu.memory_space<vmem>>, %arg9: memref<72x784xf32, #tpu.memory_space<vmem>>) attributes {dimension_semantics = [#tpu.dimension_semantics<parallel>], iteration_bounds = array<i64: 2>, scalar_prefetch = 0 : i64, scratch_operands = 1 : i64, tpu.core_type = #tpu.core_type<tc>, window_params = [{transform_indices = @transform_0, window_bounds = array<i64: 1, 9, 27, 784>}, {pipeline_mode = #tpu.pipeline_mode<synchronous>, transform_indices = @transform_1, window_bounds = array<i64: 8, 27>}, {pipeline_mode = #tpu.pipeline_mode<synchronous>, transform_indices = @transform_2, window_bounds = array<i64: 8, 1>}, {pipeline_mode = #tpu.pipeline_mode<synchronous>, transform_indices = @transform_3, window_bounds = array<i64: 16, 72>}, {pipeline_mode = #tpu.pipeline_mode<synchronous>, transform_indices = @transform_4, window_bounds = array<i64: 16, 1>}, {pipeline_mode = #tpu.pipeline_mode<synchronous>, transform_indices = @transform_5, window_bounds = array<i64: 16, 5, 784>}, {pipeline_mode = #tpu.pipeline_mode<synchronous>, transform_indices = @transform_6, window_bounds = array<i64: 5, 1>}, {transform_indices = @transform_7, window_bounds = array<i64: 1, 5, 1>}]} {
    %c0 = arith.constant 0 : index
    %c0_0 = arith.constant 0 : index
    %0 = vector.load %arg2[%c0, %c0_0] : memref<8x27xbf16, #tpu.memory_space<vmem>>, vector<8x27xbf16>
    %c0_1 = arith.constant 0 : index
    %c0_2 = arith.constant 0 : index
    %1 = vector.load %arg3[%c0_1, %c0_2] : memref<8x1xf32, #tpu.memory_space<vmem>>, vector<8x1xf32>
    %2 = vector.shape_cast %1 : vector<8x1xf32> to vector<8x1xf32>
    %3 = vector.broadcast %2 : vector<8x1xf32> to vector<8x784xf32>
    %c0_3 = arith.constant 0 : index
    %c0_4 = arith.constant 0 : index
    %c0_5 = arith.constant 0 : index
    %c0_6 = arith.constant 0 : index
    %4 = vector.load %arg1[%c0_3, %c0_4, %c0_5, %c0_6] : memref<1x9x27x784xbf16, #tpu.memory_space<vmem>>, vector<1x1x27x784xbf16>
    %5 = vector.shape_cast %4 : vector<1x1x27x784xbf16> to vector<27x784xbf16>
    %cst = arith.constant dense<0.000000e+00> : vector<8x784xf32>
    %6 = tpu.matmul %0, %5, %cst {dimension_numbers = #tpu.dot_dimension_numbers<[1], [0], [0], [1], [0, 0, 1, 1], [], []>} : vector<8x27xbf16>, vector<27x784xbf16>, vector<8x784xf32> -> vector<8x784xf32>
    %7 = arith.addf %6, %3 : vector<8x784xf32>
    %cst_7 = arith.constant 0.000000e+00 : f32
    %8 = vector.broadcast %cst_7 : f32 to vector<8x784xf32>
    %9 = arith.maximumf %7, %8 : vector<8x784xf32>
    %c0_8 = arith.constant 0 : index
    %c0_9 = arith.constant 0 : index
    %10 = vector.load %arg9[%c0_8, %c0_9] : memref<72x784xf32, #tpu.memory_space<vmem>>, vector<8x784xf32>
    tpu.vector_store %arg9[%c0_8, %c0_9], %9 {strides = array<i32>} : memref<72x784xf32, #tpu.memory_space<vmem>>, vector<8x784xf32>,
    %c0_10 = arith.constant 0 : index
    %c1 = arith.constant 1 : index
    %c0_11 = arith.constant 0 : index
    %c0_12 = arith.constant 0 : index
    %11 = vector.load %arg1[%c0_10, %c1, %c0_11, %c0_12] : memref<1x9x27x784xbf16, #tpu.memory_space<vmem>>, vector<1x1x27x784xbf16>
    %12 = vector.shape_cast %11 : vector<1x1x27x784xbf16> to vector<27x784xbf16>
    %cst_13 = arith.constant dense<0.000000e+00> : vector<8x784xf32>
    %13 = tpu.matmul %0, %12, %cst_13 {dimension_numbers = #tpu.dot_dimension_numbers<[1], [0], [0], [1], [0, 0, 1, 1], [], []>} : vector<8x27xbf16>, vector<27x784xbf16>, vector<8x784xf32> -> vector<8x784xf32>
    %14 = arith.addf %13, %3 : vector<8x784xf32>
    %cst_14 = arith.constant 0.000000e+00 : f32
    %15 = vector.broadcast %cst_14 : f32 to vector<8x784xf32>
    %16 = arith.maximumf %14, %15 : vector<8x784xf32>
    %c8 = arith.constant 8 : index
    %c0_15 = arith.constant 0 : index
    %17 = vector.load %arg9[%c8, %c0_15] : memref<72x784xf32, #tpu.memory_space<vmem>>, vector<8x784xf32>
    tpu.vector_store %arg9[%c8, %c0_15], %16 {strides = array<i32>} : memref<72x784xf32, #tpu.memory_space<vmem>>, vector<8x784xf32>,
    %c0_16 = arith.constant 0 : index
    %c2 = arith.constant 2 : index
    %c0_17 = arith.constant 0 : index
    %c0_18 = arith.constant 0 : index
    %18 = vector.load %arg1[%c0_16, %c2, %c0_17, %c0_18] : memref<1x9x27x784xbf16, #tpu.memory_space<vmem>>, vector<1x1x27x784xbf16>
    %19 = vector.shape_cast %18 : vector<1x1x27x784xbf16> to vector<27x784xbf16>
    %cst_19 = arith.constant dense<0.000000e+00> : vector<8x784xf32>
    %20 = tpu.matmul %0, %19, %cst_19 {dimension_numbers = #tpu.dot_dimension_numbers<[1], [0], [0], [1], [0, 0, 1, 1], [], []>} : vector<8x27xbf16>, vector<27x784xbf16>, vector<8x784xf32> -> vector<8x784xf32>
    %21 = arith.addf %20, %3 : vector<8x784xf32>
    %cst_20 = arith.constant 0.000000e+00 : f32
    %22 = vector.broadcast %cst_20 : f32 to vector<8x784xf32>
    %23 = arith.maximumf %21, %22 : vector<8x784xf32>
    %c16 = arith.constant 16 : index
    %c0_21 = arith.constant 0 : index
    %24 = vector.load %arg9[%c16, %c0_21] : memref<72x784xf32, #tpu.memory_space<vmem>>, vector<8x784xf32>
    tpu.vector_store %arg9[%c16, %c0_21], %23 {strides = array<i32>} : memref<72x784xf32, #tpu.memory_space<vmem>>, vector<8x784xf32>,
    %c0_22 = arith.constant 0 : index
    %c3 = arith.constant 3 : index
    %c0_23 = arith.constant 0 : index
    %c0_24 = arith.constant 0 : index
    %25 = vector.load %arg1[%c0_22, %c3, %c0_23, %c0_24] : memref<1x9x27x784xbf16, #tpu.memory_space<vmem>>, vector<1x1x27x784xbf16>
    %26 = vector.shape_cast %25 : vector<1x1x27x784xbf16> to vector<27x784xbf16>
    %cst_25 = arith.constant dense<0.000000e+00> : vector<8x784xf32>
    %27 = tpu.matmul %0, %26, %cst_25 {dimension_numbers = #tpu.dot_dimension_numbers<[1], [0], [0], [1], [0, 0, 1, 1], [], []>} : vector<8x27xbf16>, vector<27x784xbf16>, vector<8x784xf32> -> vector<8x784xf32>
    %28 = arith.addf %27, %3 : vector<8x784xf32>
    %cst_26 = arith.constant 0.000000e+00 : f32
    %29 = vector.broadcast %cst_26 : f32 to vector<8x784xf32>
    %30 = arith.maximumf %28, %29 : vector<8x784xf32>
    %c24 = arith.constant 24 : index
    %c0_27 = arith.constant 0 : index
    %31 = vector.load %arg9[%c24, %c0_27] : memref<72x784xf32, #tpu.memory_space<vmem>>, vector<8x784xf32>
    tpu.vector_store %arg9[%c24, %c0_27], %30 {strides = array<i32>} : memref<72x784xf32, #tpu.memory_space<vmem>>, vector<8x784xf32>,
    %c0_28 = arith.constant 0 : index
    %c4 = arith.constant 4 : index
    %c0_29 = arith.constant 0 : index
    %c0_30 = arith.constant 0 : index
    %32 = vector.load %arg1[%c0_28, %c4, %c0_29, %c0_30] : memref<1x9x27x784xbf16, #tpu.memory_space<vmem>>, vector<1x1x27x784xbf16>
    %33 = vector.shape_cast %32 : vector<1x1x27x784xbf16> to vector<27x784xbf16>
    %cst_31 = arith.constant dense<0.000000e+00> : vector<8x784xf32>
    %34 = tpu.matmul %0, %33, %cst_31 {dimension_numbers = #tpu.dot_dimension_numbers<[1], [0], [0], [1], [0, 0, 1, 1], [], []>} : vector<8x27xbf16>, vector<27x784xbf16>, vector<8x784xf32> -> vector<8x784xf32>
    %35 = arith.addf %34, %3 : vector<8x784xf32>
    %cst_32 = arith.constant 0.000000e+00 : f32
    %36 = vector.broadcast %cst_32 : f32 to vector<8x784xf32>
    %37 = arith.maximumf %35, %36 : vector<8x784xf32>
    %c32 = arith.constant 32 : index
    %c0_33 = arith.constant 0 : index
    %38 = vector.load %arg9[%c32, %c0_33] : memref<72x784xf32, #tpu.memory_space<vmem>>, vector<8x784xf32>
    tpu.vector_store %arg9[%c32, %c0_33], %37 {strides = array<i32>} : memref<72x784xf32, #tpu.memory_space<vmem>>, vector<8x784xf32>,
    %c0_34 = arith.constant 0 : index
    %c5 = arith.constant 5 : index
    %c0_35 = arith.constant 0 : index
    %c0_36 = arith.constant 0 : index
    %39 = vector.load %arg1[%c0_34, %c5, %c0_35, %c0_36] : memref<1x9x27x784xbf16, #tpu.memory_space<vmem>>, vector<1x1x27x784xbf16>
    %40 = vector.shape_cast %39 : vector<1x1x27x784xbf16> to vector<27x784xbf16>
    %cst_37 = arith.constant dense<0.000000e+00> : vector<8x784xf32>
    %41 = tpu.matmul %0, %40, %cst_37 {dimension_numbers = #tpu.dot_dimension_numbers<[1], [0], [0], [1], [0, 0, 1, 1], [], []>} : vector<8x27xbf16>, vector<27x784xbf16>, vector<8x784xf32> -> vector<8x784xf32>
    %42 = arith.addf %41, %3 : vector<8x784xf32>
    %cst_38 = arith.constant 0.000000e+00 : f32
    %43 = vector.broadcast %cst_38 : f32 to vector<8x784xf32>
    %44 = arith.maximumf %42, %43 : vector<8x784xf32>
    %c40 = arith.constant 40 : index
    %c0_39 = arith.constant 0 : index
    %45 = vector.load %arg9[%c40, %c0_39] : memref<72x784xf32, #tpu.memory_space<vmem>>, vector<8x784xf32>
    tpu.vector_store %arg9[%c40, %c0_39], %44 {strides = array<i32>} : memref<72x784xf32, #tpu.memory_space<vmem>>, vector<8x784xf32>,
    %c0_40 = arith.constant 0 : index
    %c6 = arith.constant 6 : index
    %c0_41 = arith.constant 0 : index
    %c0_42 = arith.constant 0 : index
    %46 = vector.load %arg1[%c0_40, %c6, %c0_41, %c0_42] : memref<1x9x27x784xbf16, #tpu.memory_space<vmem>>, vector<1x1x27x784xbf16>
    %47 = vector.shape_cast %46 : vector<1x1x27x784xbf16> to vector<27x784xbf16>
    %cst_43 = arith.constant dense<0.000000e+00> : vector<8x784xf32>
    %48 = tpu.matmul %0, %47, %cst_43 {dimension_numbers = #tpu.dot_dimension_numbers<[1], [0], [0], [1], [0, 0, 1, 1], [], []>} : vector<8x27xbf16>, vector<27x784xbf16>, vector<8x784xf32> -> vector<8x784xf32>
    %49 = arith.addf %48, %3 : vector<8x784xf32>
    %cst_44 = arith.constant 0.000000e+00 : f32
    %50 = vector.broadcast %cst_44 : f32 to vector<8x784xf32>
    %51 = arith.maximumf %49, %50 : vector<8x784xf32>
    %c48 = arith.constant 48 : index
    %c0_45 = arith.constant 0 : index
    %52 = vector.load %arg9[%c48, %c0_45] : memref<72x784xf32, #tpu.memory_space<vmem>>, vector<8x784xf32>
    tpu.vector_store %arg9[%c48, %c0_45], %51 {strides = array<i32>} : memref<72x784xf32, #tpu.memory_space<vmem>>, vector<8x784xf32>,
    %c0_46 = arith.constant 0 : index
    %c7 = arith.constant 7 : index
    %c0_47 = arith.constant 0 : index
    %c0_48 = arith.constant 0 : index
    %53 = vector.load %arg1[%c0_46, %c7, %c0_47, %c0_48] : memref<1x9x27x784xbf16, #tpu.memory_space<vmem>>, vector<1x1x27x784xbf16>
    %54 = vector.shape_cast %53 : vector<1x1x27x784xbf16> to vector<27x784xbf16>
    %cst_49 = arith.constant dense<0.000000e+00> : vector<8x784xf32>
    %55 = tpu.matmul %0, %54, %cst_49 {dimension_numbers = #tpu.dot_dimension_numbers<[1], [0], [0], [1], [0, 0, 1, 1], [], []>} : vector<8x27xbf16>, vector<27x784xbf16>, vector<8x784xf32> -> vector<8x784xf32>
    %56 = arith.addf %55, %3 : vector<8x784xf32>
    %cst_50 = arith.constant 0.000000e+00 : f32
    %57 = vector.broadcast %cst_50 : f32 to vector<8x784xf32>
    %58 = arith.maximumf %56, %57 : vector<8x784xf32>
    %c56 = arith.constant 56 : index
    %c0_51 = arith.constant 0 : index
    %59 = vector.load %arg9[%c56, %c0_51] : memref<72x784xf32, #tpu.memory_space<vmem>>, vector<8x784xf32>
    tpu.vector_store %arg9[%c56, %c0_51], %58 {strides = array<i32>} : memref<72x784xf32, #tpu.memory_space<vmem>>, vector<8x784xf32>,
    %c0_52 = arith.constant 0 : index
    %c8_53 = arith.constant 8 : index
    %c0_54 = arith.constant 0 : index
    %c0_55 = arith.constant 0 : index
    %60 = vector.load %arg1[%c0_52, %c8_53, %c0_54, %c0_55] : memref<1x9x27x784xbf16, #tpu.memory_space<vmem>>, vector<1x1x27x784xbf16>
    %61 = vector.shape_cast %60 : vector<1x1x27x784xbf16> to vector<27x784xbf16>
    %cst_56 = arith.constant dense<0.000000e+00> : vector<8x784xf32>
    %62 = tpu.matmul %0, %61, %cst_56 {dimension_numbers = #tpu.dot_dimension_numbers<[1], [0], [0], [1], [0, 0, 1, 1], [], []>} : vector<8x27xbf16>, vector<27x784xbf16>, vector<8x784xf32> -> vector<8x784xf32>
    %63 = arith.addf %62, %3 : vector<8x784xf32>
    %cst_57 = arith.constant 0.000000e+00 : f32
    %64 = vector.broadcast %cst_57 : f32 to vector<8x784xf32>
    %65 = arith.maximumf %63, %64 : vector<8x784xf32>
    %c64 = arith.constant 64 : index
    %c0_58 = arith.constant 0 : index
    %66 = vector.load %arg9[%c64, %c0_58] : memref<72x784xf32, #tpu.memory_space<vmem>>, vector<8x784xf32>
    tpu.vector_store %arg9[%c64, %c0_58], %65 {strides = array<i32>} : memref<72x784xf32, #tpu.memory_space<vmem>>, vector<8x784xf32>,
    %c0_59 = arith.constant 0 : index
    %c0_60 = arith.constant 0 : index
    %67 = vector.load %arg5[%c0_59, %c0_60] : memref<16x1xf32, #tpu.memory_space<vmem>>, vector<16x1xf32>
    %68 = vector.shape_cast %67 : vector<16x1xf32> to vector<16x1xf32>
    %69 = vector.broadcast %68 : vector<16x1xf32> to vector<16x784xf32>
    %c0_61 = arith.constant 0 : index
    %c0_62 = arith.constant 0 : index
    %70 = vector.load %arg4[%c0_61, %c0_62] : memref<16x72xf32, #tpu.memory_space<vmem>>, vector<16x72xf32>
    %c0_63 = arith.constant 0 : index
    %c0_64 = arith.constant 0 : index
    %71 = vector.load %arg9[%c0_63, %c0_64] : memref<72x784xf32, #tpu.memory_space<vmem>>, vector<72x784xf32>
    %cst_65 = arith.constant dense<0.000000e+00> : vector<16x784xf32>
    %72 = tpu.matmul %70, %71, %cst_65 {dimension_numbers = #tpu.dot_dimension_numbers<[1], [0], [0], [1], [0, 0, 1, 1], [], []>} : vector<16x72xf32>, vector<72x784xf32>, vector<16x784xf32> -> vector<16x784xf32>
    %73 = arith.addf %72, %69 : vector<16x784xf32>
    %cst_66 = arith.constant 0.000000e+00 : f32
    %74 = vector.broadcast %cst_66 : f32 to vector<16x784xf32>
    %75 = arith.maximumf %73, %74 : vector<16x784xf32>
    %cst_67 = arith.constant 0.000000e+00 : f32
    %76 = vector.broadcast %cst_67 : f32 to vector<5x1xf32>
    %c0_68 = arith.constant 0 : index
    %c0_69 = arith.constant 0 : index
    %c0_70 = arith.constant 0 : index
    %77 = vector.load %arg6[%c0_68, %c0_69, %c0_70] : memref<16x5x784xf32, #tpu.memory_space<vmem>>, vector<1x5x784xf32>
    %78 = vector.shape_cast %77 : vector<1x5x784xf32> to vector<5x784xf32>
    %79 = vector.extract_strided_slice %75 {offsets = [0, 0], sizes = [1, 784], strides = [1, 1]} : vector<16x784xf32> to vector<1x784xf32>
    %80 = vector.broadcast %79 : vector<1x784xf32> to vector<5x784xf32>
    %81 = arith.mulf %78, %80 : vector<5x784xf32>
    %cst_71 = arith.constant dense<0.000000e+00> : vector<5xf32>
    %82 = vector.multi_reduction <add>, %81, %cst_71 [1] : vector<5x784xf32> to vector<5xf32>
    %83 = vector.shape_cast %82 : vector<5xf32> to vector<5x1xf32>
    %84 = arith.addf %76, %83 : vector<5x1xf32>
    %c1_72 = arith.constant 1 : index
    %c0_73 = arith.constant 0 : index
    %c0_74 = arith.constant 0 : index
    %85 = vector.load %arg6[%c1_72, %c0_73, %c0_74] : memref<16x5x784xf32, #tpu.memory_space<vmem>>, vector<1x5x784xf32>
    %86 = vector.shape_cast %85 : vector<1x5x784xf32> to vector<5x784xf32>
    %87 = vector.extract_strided_slice %75 {offsets = [1, 0], sizes = [1, 784], strides = [1, 1]} : vector<16x784xf32> to vector<1x784xf32>
    %88 = vector.broadcast %87 : vector<1x784xf32> to vector<5x784xf32>
    %89 = arith.mulf %86, %88 : vector<5x784xf32>
    %cst_75 = arith.constant dense<0.000000e+00> : vector<5xf32>
    %90 = vector.multi_reduction <add>, %89, %cst_75 [1] : vector<5x784xf32> to vector<5xf32>
    %91 = vector.shape_cast %90 : vector<5xf32> to vector<5x1xf32>
    %92 = arith.addf %84, %91 : vector<5x1xf32>
    %c2_76 = arith.constant 2 : index
    %c0_77 = arith.constant 0 : index
    %c0_78 = arith.constant 0 : index
    %93 = vector.load %arg6[%c2_76, %c0_77, %c0_78] : memref<16x5x784xf32, #tpu.memory_space<vmem>>, vector<1x5x784xf32>
    %94 = vector.shape_cast %93 : vector<1x5x784xf32> to vector<5x784xf32>
    %95 = vector.extract_strided_slice %75 {offsets = [2, 0], sizes = [1, 784], strides = [1, 1]} : vector<16x784xf32> to vector<1x784xf32>
    %96 = vector.broadcast %95 : vector<1x784xf32> to vector<5x784xf32>
    %97 = arith.mulf %94, %96 : vector<5x784xf32>
    %cst_79 = arith.constant dense<0.000000e+00> : vector<5xf32>
    %98 = vector.multi_reduction <add>, %97, %cst_79 [1] : vector<5x784xf32> to vector<5xf32>
    %99 = vector.shape_cast %98 : vector<5xf32> to vector<5x1xf32>
    %100 = arith.addf %92, %99 : vector<5x1xf32>
    %c3_80 = arith.constant 3 : index
    %c0_81 = arith.constant 0 : index
    %c0_82 = arith.constant 0 : index
    %101 = vector.load %arg6[%c3_80, %c0_81, %c0_82] : memref<16x5x784xf32, #tpu.memory_space<vmem>>, vector<1x5x784xf32>
    %102 = vector.shape_cast %101 : vector<1x5x784xf32> to vector<5x784xf32>
    %103 = vector.extract_strided_slice %75 {offsets = [3, 0], sizes = [1, 784], strides = [1, 1]} : vector<16x784xf32> to vector<1x784xf32>
    %104 = vector.broadcast %103 : vector<1x784xf32> to vector<5x784xf32>
    %105 = arith.mulf %102, %104 : vector<5x784xf32>
    %cst_83 = arith.constant dense<0.000000e+00> : vector<5xf32>
    %106 = vector.multi_reduction <add>, %105, %cst_83 [1] : vector<5x784xf32> to vector<5xf32>
    %107 = vector.shape_cast %106 : vector<5xf32> to vector<5x1xf32>
    %108 = arith.addf %100, %107 : vector<5x1xf32>
    %c4_84 = arith.constant 4 : index
    %c0_85 = arith.constant 0 : index
    %c0_86 = arith.constant 0 : index
    %109 = vector.load %arg6[%c4_84, %c0_85, %c0_86] : memref<16x5x784xf32, #tpu.memory_space<vmem>>, vector<1x5x784xf32>
    %110 = vector.shape_cast %109 : vector<1x5x784xf32> to vector<5x784xf32>
    %111 = vector.extract_strided_slice %75 {offsets = [4, 0], sizes = [1, 784], strides = [1, 1]} : vector<16x784xf32> to vector<1x784xf32>
    %112 = vector.broadcast %111 : vector<1x784xf32> to vector<5x784xf32>
    %113 = arith.mulf %110, %112 : vector<5x784xf32>
    %cst_87 = arith.constant dense<0.000000e+00> : vector<5xf32>
    %114 = vector.multi_reduction <add>, %113, %cst_87 [1] : vector<5x784xf32> to vector<5xf32>
    %115 = vector.shape_cast %114 : vector<5xf32> to vector<5x1xf32>
    %116 = arith.addf %108, %115 : vector<5x1xf32>
    %c5_88 = arith.constant 5 : index
    %c0_89 = arith.constant 0 : index
    %c0_90 = arith.constant 0 : index
    %117 = vector.load %arg6[%c5_88, %c0_89, %c0_90] : memref<16x5x784xf32, #tpu.memory_space<vmem>>, vector<1x5x784xf32>
    %118 = vector.shape_cast %117 : vector<1x5x784xf32> to vector<5x784xf32>
    %119 = vector.extract_strided_slice %75 {offsets = [5, 0], sizes = [1, 784], strides = [1, 1]} : vector<16x784xf32> to vector<1x784xf32>
    %120 = vector.broadcast %119 : vector<1x784xf32> to vector<5x784xf32>
    %121 = arith.mulf %118, %120 : vector<5x784xf32>
    %cst_91 = arith.constant dense<0.000000e+00> : vector<5xf32>
    %122 = vector.multi_reduction <add>, %121, %cst_91 [1] : vector<5x784xf32> to vector<5xf32>
    %123 = vector.shape_cast %122 : vector<5xf32> to vector<5x1xf32>
    %124 = arith.addf %116, %123 : vector<5x1xf32>
    %c6_92 = arith.constant 6 : index
    %c0_93 = arith.constant 0 : index
    %c0_94 = arith.constant 0 : index
    %125 = vector.load %arg6[%c6_92, %c0_93, %c0_94] : memref<16x5x784xf32, #tpu.memory_space<vmem>>, vector<1x5x784xf32>
    %126 = vector.shape_cast %125 : vector<1x5x784xf32> to vector<5x784xf32>
    %127 = vector.extract_strided_slice %75 {offsets = [6, 0], sizes = [1, 784], strides = [1, 1]} : vector<16x784xf32> to vector<1x784xf32>
    %128 = vector.broadcast %127 : vector<1x784xf32> to vector<5x784xf32>
    %129 = arith.mulf %126, %128 : vector<5x784xf32>
    %cst_95 = arith.constant dense<0.000000e+00> : vector<5xf32>
    %130 = vector.multi_reduction <add>, %129, %cst_95 [1] : vector<5x784xf32> to vector<5xf32>
    %131 = vector.shape_cast %130 : vector<5xf32> to vector<5x1xf32>
    %132 = arith.addf %124, %131 : vector<5x1xf32>
    %c7_96 = arith.constant 7 : index
    %c0_97 = arith.constant 0 : index
    %c0_98 = arith.constant 0 : index
    %133 = vector.load %arg6[%c7_96, %c0_97, %c0_98] : memref<16x5x784xf32, #tpu.memory_space<vmem>>, vector<1x5x784xf32>
    %134 = vector.shape_cast %133 : vector<1x5x784xf32> to vector<5x784xf32>
    %135 = vector.extract_strided_slice %75 {offsets = [7, 0], sizes = [1, 784], strides = [1, 1]} : vector<16x784xf32> to vector<1x784xf32>
    %136 = vector.broadcast %135 : vector<1x784xf32> to vector<5x784xf32>
    %137 = arith.mulf %134, %136 : vector<5x784xf32>
    %cst_99 = arith.constant dense<0.000000e+00> : vector<5xf32>
    %138 = vector.multi_reduction <add>, %137, %cst_99 [1] : vector<5x784xf32> to vector<5xf32>
    %139 = vector.shape_cast %138 : vector<5xf32> to vector<5x1xf32>
    %140 = arith.addf %132, %139 : vector<5x1xf32>
    %c8_100 = arith.constant 8 : index
    %c0_101 = arith.constant 0 : index
    %c0_102 = arith.constant 0 : index
    %141 = vector.load %arg6[%c8_100, %c0_101, %c0_102] : memref<16x5x784xf32, #tpu.memory_space<vmem>>, vector<1x5x784xf32>
    %142 = vector.shape_cast %141 : vector<1x5x784xf32> to vector<5x784xf32>
    %143 = vector.extract_strided_slice %75 {offsets = [8, 0], sizes = [1, 784], strides = [1, 1]} : vector<16x784xf32> to vector<1x784xf32>
    %144 = vector.broadcast %143 : vector<1x784xf32> to vector<5x784xf32>
    %145 = arith.mulf %142, %144 : vector<5x784xf32>
    %cst_103 = arith.constant dense<0.000000e+00> : vector<5xf32>
    %146 = vector.multi_reduction <add>, %145, %cst_103 [1] : vector<5x784xf32> to vector<5xf32>
    %147 = vector.shape_cast %146 : vector<5xf32> to vector<5x1xf32>
    %148 = arith.addf %140, %147 : vector<5x1xf32>
    %c9 = arith.constant 9 : index
    %c0_104 = arith.constant 0 : index
    %c0_105 = arith.constant 0 : index
    %149 = vector.load %arg6[%c9, %c0_104, %c0_105] : memref<16x5x784xf32, #tpu.memory_space<vmem>>, vector<1x5x784xf32>
    %150 = vector.shape_cast %149 : vector<1x5x784xf32> to vector<5x784xf32>
    %151 = vector.extract_strided_slice %75 {offsets = [9, 0], sizes = [1, 784], strides = [1, 1]} : vector<16x784xf32> to vector<1x784xf32>
    %152 = vector.broadcast %151 : vector<1x784xf32> to vector<5x784xf32>
    %153 = arith.mulf %150, %152 : vector<5x784xf32>
    %cst_106 = arith.constant dense<0.000000e+00> : vector<5xf32>
    %154 = vector.multi_reduction <add>, %153, %cst_106 [1] : vector<5x784xf32> to vector<5xf32>
    %155 = vector.shape_cast %154 : vector<5xf32> to vector<5x1xf32>
    %156 = arith.addf %148, %155 : vector<5x1xf32>
    %c10 = arith.constant 10 : index
    %c0_107 = arith.constant 0 : index
    %c0_108 = arith.constant 0 : index
    %157 = vector.load %arg6[%c10, %c0_107, %c0_108] : memref<16x5x784xf32, #tpu.memory_space<vmem>>, vector<1x5x784xf32>
    %158 = vector.shape_cast %157 : vector<1x5x784xf32> to vector<5x784xf32>
    %159 = vector.extract_strided_slice %75 {offsets = [10, 0], sizes = [1, 784], strides = [1, 1]} : vector<16x784xf32> to vector<1x784xf32>
    %160 = vector.broadcast %159 : vector<1x784xf32> to vector<5x784xf32>
    %161 = arith.mulf %158, %160 : vector<5x784xf32>
    %cst_109 = arith.constant dense<0.000000e+00> : vector<5xf32>
    %162 = vector.multi_reduction <add>, %161, %cst_109 [1] : vector<5x784xf32> to vector<5xf32>
    %163 = vector.shape_cast %162 : vector<5xf32> to vector<5x1xf32>
    %164 = arith.addf %156, %163 : vector<5x1xf32>
    %c11 = arith.constant 11 : index
    %c0_110 = arith.constant 0 : index
    %c0_111 = arith.constant 0 : index
    %165 = vector.load %arg6[%c11, %c0_110, %c0_111] : memref<16x5x784xf32, #tpu.memory_space<vmem>>, vector<1x5x784xf32>
    %166 = vector.shape_cast %165 : vector<1x5x784xf32> to vector<5x784xf32>
    %167 = vector.extract_strided_slice %75 {offsets = [11, 0], sizes = [1, 784], strides = [1, 1]} : vector<16x784xf32> to vector<1x784xf32>
    %168 = vector.broadcast %167 : vector<1x784xf32> to vector<5x784xf32>
    %169 = arith.mulf %166, %168 : vector<5x784xf32>
    %cst_112 = arith.constant dense<0.000000e+00> : vector<5xf32>
    %170 = vector.multi_reduction <add>, %169, %cst_112 [1] : vector<5x784xf32> to vector<5xf32>
    %171 = vector.shape_cast %170 : vector<5xf32> to vector<5x1xf32>
    %172 = arith.addf %164, %171 : vector<5x1xf32>
    %c12 = arith.constant 12 : index
    %c0_113 = arith.constant 0 : index
    %c0_114 = arith.constant 0 : index
    %173 = vector.load %arg6[%c12, %c0_113, %c0_114] : memref<16x5x784xf32, #tpu.memory_space<vmem>>, vector<1x5x784xf32>
    %174 = vector.shape_cast %173 : vector<1x5x784xf32> to vector<5x784xf32>
    %175 = vector.extract_strided_slice %75 {offsets = [12, 0], sizes = [1, 784], strides = [1, 1]} : vector<16x784xf32> to vector<1x784xf32>
    %176 = vector.broadcast %175 : vector<1x784xf32> to vector<5x784xf32>
    %177 = arith.mulf %174, %176 : vector<5x784xf32>
    %cst_115 = arith.constant dense<0.000000e+00> : vector<5xf32>
    %178 = vector.multi_reduction <add>, %177, %cst_115 [1] : vector<5x784xf32> to vector<5xf32>
    %179 = vector.shape_cast %178 : vector<5xf32> to vector<5x1xf32>
    %180 = arith.addf %172, %179 : vector<5x1xf32>
    %c13 = arith.constant 13 : index
    %c0_116 = arith.constant 0 : index
    %c0_117 = arith.constant 0 : index
    %181 = vector.load %arg6[%c13, %c0_116, %c0_117] : memref<16x5x784xf32, #tpu.memory_space<vmem>>, vector<1x5x784xf32>
    %182 = vector.shape_cast %181 : vector<1x5x784xf32> to vector<5x784xf32>
    %183 = vector.extract_strided_slice %75 {offsets = [13, 0], sizes = [1, 784], strides = [1, 1]} : vector<16x784xf32> to vector<1x784xf32>
    %184 = vector.broadcast %183 : vector<1x784xf32> to vector<5x784xf32>
    %185 = arith.mulf %182, %184 : vector<5x784xf32>
    %cst_118 = arith.constant dense<0.000000e+00> : vector<5xf32>
    %186 = vector.multi_reduction <add>, %185, %cst_118 [1] : vector<5x784xf32> to vector<5xf32>
    %187 = vector.shape_cast %186 : vector<5xf32> to vector<5x1xf32>
    %188 = arith.addf %180, %187 : vector<5x1xf32>
    %c14 = arith.constant 14 : index
    %c0_119 = arith.constant 0 : index
    %c0_120 = arith.constant 0 : index
    %189 = vector.load %arg6[%c14, %c0_119, %c0_120] : memref<16x5x784xf32, #tpu.memory_space<vmem>>, vector<1x5x784xf32>
    %190 = vector.shape_cast %189 : vector<1x5x784xf32> to vector<5x784xf32>
    %191 = vector.extract_strided_slice %75 {offsets = [14, 0], sizes = [1, 784], strides = [1, 1]} : vector<16x784xf32> to vector<1x784xf32>
    %192 = vector.broadcast %191 : vector<1x784xf32> to vector<5x784xf32>
    %193 = arith.mulf %190, %192 : vector<5x784xf32>
    %cst_121 = arith.constant dense<0.000000e+00> : vector<5xf32>
    %194 = vector.multi_reduction <add>, %193, %cst_121 [1] : vector<5x784xf32> to vector<5xf32>
    %195 = vector.shape_cast %194 : vector<5xf32> to vector<5x1xf32>
    %196 = arith.addf %188, %195 : vector<5x1xf32>
    %c15 = arith.constant 15 : index
    %c0_122 = arith.constant 0 : index
    %c0_123 = arith.constant 0 : index
    %197 = vector.load %arg6[%c15, %c0_122, %c0_123] : memref<16x5x784xf32, #tpu.memory_space<vmem>>, vector<1x5x784xf32>
    %198 = vector.shape_cast %197 : vector<1x5x784xf32> to vector<5x784xf32>
    %199 = vector.extract_strided_slice %75 {offsets = [15, 0], sizes = [1, 784], strides = [1, 1]} : vector<16x784xf32> to vector<1x784xf32>
    %200 = vector.broadcast %199 : vector<1x784xf32> to vector<5x784xf32>
    %201 = arith.mulf %198, %200 : vector<5x784xf32>
    %cst_124 = arith.constant dense<0.000000e+00> : vector<5xf32>
    %202 = vector.multi_reduction <add>, %201, %cst_124 [1] : vector<5x784xf32> to vector<5xf32>
    %203 = vector.shape_cast %202 : vector<5xf32> to vector<5x1xf32>
    %204 = arith.addf %196, %203 : vector<5x1xf32>
    %c0_125 = arith.constant 0 : index
    %c0_126 = arith.constant 0 : index
    %205 = vector.load %arg7[%c0_125, %c0_126] : memref<5x1xf32, #tpu.memory_space<vmem>>, vector<5x1xf32>
    %206 = arith.addf %204, %205 : vector<5x1xf32>
    %207 = vector.shape_cast %206 : vector<5x1xf32> to vector<1x5x1xf32>
    %c0_127 = arith.constant 0 : index
    %c0_128 = arith.constant 0 : index
    %c0_129 = arith.constant 0 : index
    %208 = vector.load %arg8[%c0_127, %c0_128, %c0_129] : memref<1x5x1xf32, #tpu.memory_space<vmem>>, vector<1x5x1xf32>
    tpu.vector_store %arg8[%c0_127, %c0_128, %c0_129], %207 {strides = array<i32>} : memref<1x5x1xf32, #tpu.memory_space<vmem>>, vector<1x5x1xf32>,
    return
  }
  func.func @transform_0(%arg0: i32) -> (i32, i32, i32, i32) {
    %c0_i32 = arith.constant 0 : i32
    %c0_i32_0 = arith.constant 0 : i32
    %c0_i32_1 = arith.constant 0 : i32
    %c0_i32_2 = arith.constant 0 : i32
    return %arg0, %c0_i32, %c0_i32_0, %c0_i32_1 : i32, i32, i32, i32
  }
  func.func @transform_1(%arg0: i32) -> (i32, i32) {
    %c0_i32 = arith.constant 0 : i32
    %c0_i32_0 = arith.constant 0 : i32
    %c0_i32_1 = arith.constant 0 : i32
    return %c0_i32, %c0_i32_0 : i32, i32
  }
  func.func @transform_2(%arg0: i32) -> (i32, i32) {
    %c0_i32 = arith.constant 0 : i32
    %c0_i32_0 = arith.constant 0 : i32
    %c0_i32_1 = arith.constant 0 : i32
    return %c0_i32, %c0_i32_0 : i32, i32
  }
  func.func @transform_3(%arg0: i32) -> (i32, i32) {
    %c0_i32 = arith.constant 0 : i32
    %c0_i32_0 = arith.constant 0 : i32
    %c0_i32_1 = arith.constant 0 : i32
    return %c0_i32, %c0_i32_0 : i32, i32
  }
  func.func @transform_4(%arg0: i32) -> (i32, i32) {
    %c0_i32 = arith.constant 0 : i32
    %c0_i32_0 = arith.constant 0 : i32
    %c0_i32_1 = arith.constant 0 : i32
    return %c0_i32, %c0_i32_0 : i32, i32
  }
  func.func @transform_5(%arg0: i32) -> (i32, i32, i32) {
    %c0_i32 = arith.constant 0 : i32
    %c0_i32_0 = arith.constant 0 : i32
    %c0_i32_1 = arith.constant 0 : i32
    %c0_i32_2 = arith.constant 0 : i32
    return %c0_i32, %c0_i32_0, %c0_i32_1 : i32, i32, i32
  }
  func.func @transform_6(%arg0: i32) -> (i32, i32) {
    %c0_i32 = arith.constant 0 : i32
    %c0_i32_0 = arith.constant 0 : i32
    %c0_i32_1 = arith.constant 0 : i32
    return %c0_i32, %c0_i32_0 : i32, i32
  }
  func.func @transform_7(%arg0: i32) -> (i32, i32, i32) {
    %c0_i32 = arith.constant 0 : i32
    %c0_i32_0 = arith.constant 0 : i32
    %c0_i32_1 = arith.constant 0 : i32
    return %arg0, %c0_i32, %c0_i32_0 : i32, i32, i32
  }
}

</mosaic_0001>

<llo_original>
// kernel: tiny_conv_forward.1
$region0: #{tiny_conv_forward.1}
  #allocation0 [shape = 'u32[]', space=smem, size = 0x4, offset = 0x4, fixed_abs, tag = 'smem constant byte address 0x4 - core index']
  #allocation1 [shape = 'u32[72,128]{1,0:T(1,128)}', space=vmem, size = 0x9000, scoped, tag = 'internal scratch']
  #allocation2 [shape = 'f32[72,784]{1,0:T(8,128)}', space=vmem, size = 0x3f000, scoped, tag = 'scratch operand']
  %s0 = inlined_call_operand.vmem [shape: bf16[2,9,27,784], index: 0, kind: input, shape index: {}]
  %s1 = inlined_call_operand.vmem [shape: bf16[8,27], index: 1, kind: input, shape index: {}]
  %s2 = inlined_call_operand.vmem [shape: f32[8,1], index: 2, kind: input, shape index: {}]
  %s3 = inlined_call_operand.vmem [shape: f32[16,72], index: 3, kind: input, shape index: {}]
  %s4 = inlined_call_operand.vmem [shape: f32[16,1], index: 4, kind: input, shape index: {}]
  %s5 = inlined_call_operand.vmem [shape: f32[16,5,784], index: 5, kind: input, shape index: {}]
  %s6 = inlined_call_operand.vmem [shape: f32[5,1], index: 6, kind: input, shape index: {}]
  %s7 = inlined_call_operand.vmem [shape: f32[2,5,1], index: 7, kind: output, shape index: {}]
  %s8 = sld [smem:[#allocation0]]
  $region61: #{tiny_conv_forward.1} parent=0
    _
  %s10 = ssub.s32 1, %s8
  %s11 = scalar_select 0, %s10, %s8
  loop: start=0, step=1, limit=4
  $region2: #{tiny_conv_forward.1} parent=0 // loop_pre_header
    _
  $region3: #{tiny_conv_forward.1} parent=0 // loop_header
    %s13 = sphi 0, %s17
    %p14 = scmp.ge.s32.totalorder %s13, 4
    %s23 = sphi 0, %s25
    %s26 = sphi 0, %s23
    %s27 = sphi 0, %s26
    %s43 = sphi 0, %s27
    %s47 = sphi 0, %s47
    %s49 = sphi 0, %s47
    %s50 = sphi 0, %s49
    %s64 = sphi 0, %s50
    %s68 = sphi 0, %s68
    %s70 = sphi 0, %s68
    %s71 = sphi 0, %s70
    %s85 = sphi 0, %s71
    %s89 = sphi 0, %s89
    %s91 = sphi 0, %s89
    %s92 = sphi 0, %s91
    %s106 = sphi 0, %s92
    %s110 = sphi 0, %s110
    %s112 = sphi 0, %s110
    %s113 = sphi 0, %s112
    %s127 = sphi 0, %s113
    %s131 = sphi 0, %s131
    %s133 = sphi 0, %s131
    %s134 = sphi 0, %s133
    %s148 = sphi 0, %s134
    %s152 = sphi 0, %s152
    %s154 = sphi 0, %s152
    %s155 = sphi 0, %s154
    %s169 = sphi 0, %s155
    %s175 = sphi 0, %s177
    %s178 = sphi 0, %s175
    %s179 = sphi 0, %s178
    %s195 = sphi 0, %s179
  $region4: #{tiny_conv_forward.1} parent=0 // loop_header_branch
    %16 = sbr.rel (%p14) target = $region8
  $region5: #{tiny_conv_forward.1} parent=0 // loop_body
    %s18 = ssub.s32 %s13, 1
    %s19 = ssub.s32 %s13, 2
    %s20 = sadd.s32 %s13, 1
    %s21 = ssub.s32 %s13, %s20
    %p22 = scmp.eq.s32.totalorder %s21, 0
    %s24 = sadd.s32 %s23, 1
    %s25 = scalar_select %p22, %s23, %s24
    %p28 = pneg %p22
    %p29 = scmp.eq.s32.totalorder %s13, 1
    %p30 = por %p28, %p29
    %p31 = scmp.ne.s32.totalorder %s23, %s26
    %p32 = scmp.eq.s32.totalorder %s13, 0
    %p33 = por %p31, %p32
    %p34 = scmp.ne.s32.totalorder %s23, %s26
    %p35 = scmp.eq.s32.totalorder %s18, 1
    %p36 = por %p34, %p35
    %p37 = scmp.ne.s32.totalorder %s26, %s27
    %p38 = scmp.eq.s32.totalorder %s18, 0
    %p39 = por %p37, %p38
    %p40 = scmp.ne.s32.totalorder %s26, %s27
    %p41 = scmp.eq.s32.totalorder %s19, 1
    %p42 = por %p40, %p41
    %p44 = scmp.ne.s32.totalorder %s27, %s43
    %p45 = scmp.eq.s32.totalorder %s19, 0
    %p46 = por %p44, %p45
    %s48 = sadd.s32 %s47, 1
    %p51 = scmp.eq.s32.totalorder %s13, 1
    %p52 = scmp.ne.s32.totalorder %s47, %s49
    %p53 = scmp.eq.s32.totalorder %s13, 0
    %p54 = por %p52, %p53
    %p55 = scmp.ne.s32.totalorder %s47, %s49
    %p56 = scmp.eq.s32.totalorder %s18, 1
    %p57 = por %p55, %p56
    %p58 = scmp.ne.s32.totalorder %s49, %s50
    %p59 = scmp.eq.s32.totalorder %s18, 0
    %p60 = por %p58, %p59
    %p61 = scmp.ne.s32.totalorder %s49, %s50
    %p62 = scmp.eq.s32.totalorder %s19, 1
    %p63 = por %p61, %p62
    %p65 = scmp.ne.s32.totalorder %s50, %s64
    %p66 = scmp.eq.s32.totalorder %s19, 0
    %p67 = por %p65, %p66
    %s69 = sadd.s32 %s68, 1
    %p72 = scmp.eq.s32.totalorder %s13, 1
    %p73 = scmp.ne.s32.totalorder %s68, %s70
    %p74 = scmp.eq.s32.totalorder %s13, 0
    %p75 = por %p73, %p74
    %p76 = scmp.ne.s32.totalorder %s68, %s70
    %p77 = scmp.eq.s32.totalorder %s18, 1
    %p78 = por %p76, %p77
    %p79 = scmp.ne.s32.totalorder %s70, %s71
    %p80 = scmp.eq.s32.totalorder %s18, 0
    %p81 = por %p79, %p80
    %p82 = scmp.ne.s32.totalorder %s70, %s71
    %p83 = scmp.eq.s32.totalorder %s19, 1
    %p84 = por %p82, %p83
    %p86 = scmp.ne.s32.totalorder %s71, %s85
    %p87 = scmp.eq.s32.totalorder %s19, 0
    %p88 = por %p86, %p87
    %s90 = sadd.s32 %s89, 1
    %p93 = scmp.eq.s32.totalorder %s13, 1
    %p94 = scmp.ne.s32.totalorder %s89, %s91
    %p95 = scmp.eq.s32.totalorder %s13, 0
    %p96 = por %p94, %p95
    %p97 = scmp.ne.s32.totalorder %s89, %s91
    %p98 = scmp.eq.s32.totalorder %s18, 1
    %p99 = por %p97, %p98
    %p100 = scmp.ne.s32.totalorder %s91, %s92
    %p101 = scmp.eq.s32.totalorder %s18, 0
    %p102 = por %p100, %p101
    %p103 = scmp.ne.s32.totalorder %s91, %s92
    %p104 = scmp.eq.s32.totalorder %s19, 1
    %p105 = por %p103, %p104
    %p107 = scmp.ne.s32.totalorder %s92, %s106
    %p108 = scmp.eq.s32.totalorder %s19, 0
    %p109 = por %p107, %p108
    %s111 = sadd.s32 %s110, 1
    %p114 = scmp.eq.s32.totalorder %s13, 1
    %p115 = scmp.ne.s32.totalorder %s110, %s112
    %p116 = scmp.eq.s32.totalorder %s13, 0
    %p117 = por %p115, %p116
    %p118 = scmp.ne.s32.totalorder %s110, %s112
    %p119 = scmp.eq.s32.totalorder %s18, 1
    %p120 = por %p118, %p119
    %p121 = scmp.ne.s32.totalorder %s112, %s113
    %p122 = scmp.eq.s32.totalorder %s18, 0
    %p123 = por %p121, %p122
    %p124 = scmp.ne.s32.totalorder %s112, %s113
    %p125 = scmp.eq.s32.totalorder %s19, 1
    %p126 = por %p124, %p125
    %p128 = scmp.ne.s32.totalorder %s113, %s127
    %p129 = scmp.eq.s32.totalorder %s19, 0
    %p130 = por %p128, %p129
    %s132 = sadd.s32 %s131, 1
    %p135 = scmp.eq.s32.totalorder %s13, 1
    %p136 = scmp.ne.s32.totalorder %s131, %s133
    %p137 = scmp.eq.s32.totalorder %s13, 0
    %p138 = por %p136, %p137
    %p139 = scmp.ne.s32.totalorder %s131, %s133
    %p140 = scmp.eq.s32.totalorder %s18, 1
    %p141 = por %p139, %p140
    %p142 = scmp.ne.s32.totalorder %s133, %s134
    %p143 = scmp.eq.s32.totalorder %s18, 0
    %p144 = por %p142, %p143
    %p145 = scmp.ne.s32.totalorder %s133, %s134
    %p146 = scmp.eq.s32.totalorder %s19, 1
    %p147 = por %p145, %p146
    %p149 = scmp.ne.s32.totalorder %s134, %s148
    %p150 = scmp.eq.s32.totalorder %s19, 0
    %p151 = por %p149, %p150
    %s153 = sadd.s32 %s152, 1
    %p156 = scmp.eq.s32.totalorder %s13, 1
    %p157 = scmp.ne.s32.totalorder %s152, %s154
    %p158 = scmp.eq.s32.totalorder %s13, 0
    %p159 = por %p157, %p158
    %p160 = scmp.ne.s32.totalorder %s152, %s154
    %p161 = scmp.eq.s32.totalorder %s18, 1
    %p162 = por %p160, %p161
    %p163 = scmp.ne.s32.totalorder %s154, %s155
    %p164 = scmp.eq.s32.totalorder %s18, 0
    %p165 = por %p163, %p164
    %p166 = scmp.ne.s32.totalorder %s154, %s155
    %p167 = scmp.eq.s32.totalorder %s19, 1
    %p168 = por %p166, %p167
    %p170 = scmp.ne.s32.totalorder %s155, %s169
    %p171 = scmp.eq.s32.totalorder %s19, 0
    %p172 = por %p170, %p171
    %s173 = ssub.s32 %s13, %s20
    %p174 = scmp.eq.s32.totalorder %s173, 0
    %s176 = sadd.s32 %s175, 1
    %s177 = scalar_select %p174, %s175, %s176
    %p180 = pneg %p174
    %p181 = scmp.eq.s32.totalorder %s13, 1
    %p182 = por %p180, %p181
    %p183 = scmp.ne.s32.totalorder %s175, %s178
    %p184 = scmp.eq.s32.totalorder %s13, 0
    %p185 = por %p183, %p184
    %p186 = scmp.ne.s32.totalorder %s175, %s178
    %p187 = scmp.eq.s32.totalorder %s18, 1
    %p188 = por %p186, %p187
    %p189 = scmp.ne.s32.totalorder %s178, %s179
    %p190 = scmp.eq.s32.totalorder %s18, 0
    %p191 = por %p189, %p190
    %p192 = scmp.ne.s32.totalorder %s178, %s179
    %p193 = scmp.eq.s32.totalorder %s19, 1
    %p194 = por %p192, %p193
    %p196 = scmp.ne.s32.totalorder %s179, %s195
    %p197 = scmp.eq.s32.totalorder %s19, 0
    %p198 = por %p196, %p197
    %p199 = scmp.le.s32.totalorder 1, %s13
    %p200 = scmp.lt.s32.totalorder %s13, 3
    %p201 = pnand %p199, %p200
    %p202 = pneg %p201
    // Predicated region
    $region9: #{tiny_conv_forward.1} parent=5 // pred_check
      _
    $region10: #{tiny_conv_forward.1} parent=5 // pred_check_branch
      %204 = sbr.rel (%p201) target = $region12
    $region11: #{tiny_conv_forward.1} parent=5 // pred_region
      %s205 = ssub.s32 %s13, 1
      // Predicated region
      $region13: #{tiny_conv_forward.1} parent=11 // pred_check
        %p206 = pneg %p60
      $region14: #{tiny_conv_forward.1} parent=11 // pred_check_branch
        %208 = sbr.rel (%p206) target = $region16
      $region15: #{tiny_conv_forward.1} parent=11 // pred_region
        _
      $region16: #{tiny_conv_forward.1} parent=11 // pred_fallthru
        _
      // Predicated region
      $region17: #{tiny_conv_forward.1} parent=11 // pred_check
        %p209 = pneg %p81
      $region18: #{tiny_conv_forward.1} parent=11 // pred_check_branch
        %211 = sbr.rel (%p209) target = $region20
      $region19: #{tiny_conv_forward.1} parent=11 // pred_region
        _
      $region20: #{tiny_conv_forward.1} parent=11 // pred_fallthru
        _
      // Predicated region
      $region21: #{tiny_conv_forward.1} parent=11 // pred_check
        %p212 = pneg %p102
      $region22: #{tiny_conv_forward.1} parent=11 // pred_check_branch
        %214 = sbr.rel (%p212) target = $region24
      $region23: #{tiny_conv_forward.1} parent=11 // pred_region
        _
      $region24: #{tiny_conv_forward.1} parent=11 // pred_fallthru
        _
      // Predicated region
      $region25: #{tiny_conv_forward.1} parent=11 // pred_check
        %p215 = pneg %p123
      $region26: #{tiny_conv_forward.1} parent=11 // pred_check_branch
        %217 = sbr.rel (%p215) target = $region28
      $region27: #{tiny_conv_forward.1} parent=11 // pred_region
        _
      $region28: #{tiny_conv_forward.1} parent=11 // pred_fallthru
        _
      // Predicated region
      $region29: #{tiny_conv_forward.1} parent=11 // pred_check
        %p218 = pneg %p144
      $region30: #{tiny_conv_forward.1} parent=11 // pred_check_branch
        %220 = sbr.rel (%p218) target = $region32
      $region31: #{tiny_conv_forward.1} parent=11 // pred_region
        _
      $region32: #{tiny_conv_forward.1} parent=11 // pred_fallthru
        _
      // Predicated region
      $region33: #{tiny_conv_forward.1} parent=11 // pred_check
        %p221 = pneg %p165
      $region34: #{tiny_conv_forward.1} parent=11 // pred_check_branch
        %223 = sbr.rel (%p221) target = $region36
      $region35: #{tiny_conv_forward.1} parent=11 // pred_region
        _
      $region36: #{tiny_conv_forward.1} parent=11 // pred_fallthru
        _
    $region12: #{tiny_conv_forward.1} parent=5 // pred_fallthru
      _
    %p224 = scmp.lt.s32.totalorder %s13, 2
    // Predicated region
    $region37: #{tiny_conv_forward.1} parent=5 // pred_check
      %p225 = pneg %p224
    $region38: #{tiny_conv_forward.1} parent=5 // pred_check_branch
      %227 = sbr.rel (%p225) target = $region40
    $region39: #{tiny_conv_forward.1} parent=5 // pred_region
      // Predicated region
      $region41: #{tiny_conv_forward.1} parent=39 // pred_check
        %p228 = pneg %p33
      $region42: #{tiny_conv_forward.1} parent=39 // pred_check_branch
        %230 = sbr.rel (%p228) target = $region44
      $region43: #{tiny_conv_forward.1} parent=39 // pred_region
        %p231 = scmp.lt.s32.totalorder %s13, 1
        %s232 = scalar_select %p231, %s13, 1
        %s233 = smul.addr %s232, 252
        %s234 = smul.addr %s233, 4
        %s235 = scalar_lea.vmem %s0, %s234
      $region44: #{tiny_conv_forward.1} parent=39 // pred_fallthru
        _
    $region40: #{tiny_conv_forward.1} parent=5 // pred_fallthru
      _
    %p236 = scmp.le.s32.totalorder 1, %s13
    %p237 = scmp.lt.s32.totalorder %s13, 3
    %p238 = pnand %p236, %p237
    %p239 = pneg %p238
    // Predicated region
    $region45: #{tiny_conv_forward.1} parent=5 // pred_check
      _
    $region46: #{tiny_conv_forward.1} parent=5 // pred_check_branch
      %241 = sbr.rel (%p238) target = $region48
    $region47: #{tiny_conv_forward.1} parent=5 // pred_region
      %s242 = ssub.s32 %s13, 1
      %p243 = scmp.lt.s32.totalorder %s18, 1
      %s244 = scalar_select %p243, %s18, 1
      %s245 = smul.addr %s244, 252
      %s246 = smul.addr %s245, 4
      %s247 = scalar_lea.vmem %s0, %s246
      %p248 = pneg %p39
      %p249 = pneg %p36
      %p250 = pneg %p60
      %p251 = pneg %p57
      %p252 = pneg %p81
      %p253 = pneg %p78
      %p254 = pneg %p102
      %p255 = pneg %p99
      %p256 = pneg %p123
      %p257 = pneg %p120
      %p258 = pneg %p144
      %p259 = pneg %p141
      %p260 = pneg %p165
      %p261 = pneg %p162
      %p262 = pneg %p191
      %p263 = pneg %p188
      %p264 = scmp.lt.s32.totalorder %s18, 1
      %s265 = scalar_select %p264, %s18, 1
      %s266 = smul.addr %s265, 8
      %s267 = scalar_lea.vmem %s7, %s266
      %p268 = scmp.lt.s32.totalorder %s18, 1
      %s269 = scalar_select %p268, %s18, 1
      %s270 = smul.addr %s269, 252
      %s271 = smul.addr %s270, 4
      %s272 = scalar_lea.vmem %s0, %s271
      %p273 = scmp.lt.s32.totalorder %s18, 1
      %s274 = scalar_select %p273, %s18, 1
      %s275 = smul.addr %s274, 8
      %s276 = scalar_lea.vmem %s7, %s275
      %v278 = vld [vmem:[%s1] sm:$0xf]
      %v279 = vld [vmem:[%s2] sm:$0xff]
      %281 = vset.pattern.permute.xlu0 0
      %282 = vperm.xlu0 %281, %v279
      %v283 = vpop.permute.xlu0 %282
      %v285 = vld [vmem:[%s272] sm:$0xff]
      %v286 = vld [vmem:[%s272 + $0x8] sm:$0xff]
      %v287 = vld [vmem:[%s272 + $0x10] sm:$0xff]
      %v288 = vld [vmem:[%s272 + $0x18] sm:$0xf]
      %v289 = vld [vmem:[%s272 + $0x1c] sm:$0xff]
      %v290 = vld [vmem:[%s272 + $0x24] sm:$0xff]
      %v291 = vld [vmem:[%s272 + $0x2c] sm:$0xff]
      %v292 = vld [vmem:[%s272 + $0x34] sm:$0xf]
      %v293 = vld [vmem:[%s272 + $0x38] sm:$0xff]
      %v294 = vld [vmem:[%s272 + $0x40] sm:$0xff]
      %v295 = vld [vmem:[%s272 + $0x48] sm:$0xff]
      %v296 = vld [vmem:[%s272 + $0x50] sm:$0xf]
      %v297 = vld [vmem:[%s272 + $0x54] sm:$0x33]
      %v298 = vld [vmem:[%s272 + $0x5c] sm:$0x33]
      %v299 = vld [vmem:[%s272 + $0x64] sm:$0x33]
      %v300 = vld [vmem:[%s272 + $0x6c] sm:$0x3]
      %v317 = vunpack.c.l.b16 %v285
      %v318 = vunpack.c.h.b16 %v285
      %v319 = vunpack.c.l.b16 %v286
      %v320 = vunpack.c.h.b16 %v286
      %v321 = vunpack.c.l.b16 %v287
      %v322 = vunpack.c.h.b16 %v287
      %v323 = vunpack.c.l.b16 %v288
      %v324 = vunpack.c.l.b16 %v289
      %v325 = vunpack.c.h.b16 %v289
      %v326 = vunpack.c.l.b16 %v290
      %v327 = vunpack.c.h.b16 %v290
      %v328 = vunpack.c.l.b16 %v291
      %v329 = vunpack.c.h.b16 %v291
      %v330 = vunpack.c.l.b16 %v292
      %v331 = vunpack.c.l.b16 %v293
      %v332 = vunpack.c.h.b16 %v293
      %v333 = vunpack.c.l.b16 %v294
      %v334 = vunpack.c.h.b16 %v294
      %v335 = vunpack.c.l.b16 %v295
      %v336 = vunpack.c.h.b16 %v295
      %v337 = vunpack.c.l.b16 %v296
      %v338 = vunpack.c.l.b16 %v297
      %v339 = vunpack.c.h.b16 %v297
      %v340 = vunpack.c.l.b16 %v298
      %v341 = vunpack.c.h.b16 %v298
      %v342 = vunpack.c.l.b16 %v299
      %v343 = vunpack.c.h.b16 %v299
      %v344 = vunpack.c.l.b16 %v300
      %v345 = vpack.c.b16 %v324, %v317
      %v346 = vpack.c.b16 %v325, %v318
      %v347 = vpack.c.b16 %v326, %v319
      %v348 = vpack.c.b16 %v327, %v320
      %v349 = vpack.c.b16 %v328, %v321
      %v350 = vpack.c.b16 %v329, %v322
      %v351 = vpack.c.b16 %v330, %v323
      %v352 = vpack.c.b16 %v338, %v331
      %v353 = vpack.c.b16 %v339, %v332
      %v354 = vpack.c.b16 %v340, %v333
      %v355 = vpack.c.b16 %v341, %v334
      %v356 = vpack.c.b16 %v342, %v335
      %v357 = vpack.c.b16 %v343, %v336
      %v358 = vpack.c.b16 %v344, %v337
      %vm366 = vcmask 220160
      %v368 = vsel %vm366, %v278, 0
      %vm370 = vcmask 1044480
      %vm371 = vcmask 1045504
      %v372 = vsel %vm370, 4294967295, 65535
      %v373 = vsel %vm371, %v372, 0
      %v375 = vand.u32 %v352, %v373
      %v378 = vand.u32 %v353, %v373
      %v381 = vand.u32 %v354, %v373
      %v384 = vand.u32 %v355, %v373
      %v387 = vand.u32 %v356, %v373
      %v390 = vand.u32 %v357, %v373
      %v393 = vand.u32 %v358, %v373
      %395 = vmatpush.bf16.msra.mxu0 0
      %396 = vmatpush.bf16.msra.mxu0 0
      %397 = vmatpush.bf16.msra.mxu0 0
      %398 = vmatpush.bf16.msra.mxu0 0
      %399 = vmatpush.bf16.msra.mxu0 0
      %400 = vmatpush.bf16.msra.mxu0 0
      %401 = vmatpush.bf16.msra.mxu0 %v375
      %402 = vmatpush.bf16.msra.mxu0 %v345
      %403 = vmatmul.bf16.gmra.mxu0 %v368
      %v404 = vpop.f32.mrf.mxu0
      %v405 = vadd.f32 %v283, %v404
      %v406 = vpop.f32.mrf.mxu0
      %407 = vdwg.mxu0
      %408 = vmatpush.bf16.msra.mxu0 0
      %409 = vmatpush.bf16.msra.mxu0 0
      %410 = vmatpush.bf16.msra.mxu0 0
      %411 = vmatpush.bf16.msra.mxu0 0
      %412 = vmatpush.bf16.msra.mxu0 0
      %413 = vmatpush.bf16.msra.mxu0 0
      %414 = vmatpush.bf16.msra.mxu0 %v378
      %415 = vmatpush.bf16.msra.mxu0 %v346
      %416 = vmatmul.bf16.gmra.mxu0 %v368
      %v417 = vpop.f32.mrf.mxu0
      %v418 = vadd.f32 %v283, %v417
      %v419 = vpop.f32.mrf.mxu0
      %420 = vdwg.mxu0
      %421 = vmatpush.bf16.msra.mxu0 0
      %422 = vmatpush.bf16.msra.mxu0 0
      %423 = vmatpush.bf16.msra.mxu0 0
      %424 = vmatpush.bf16.msra.mxu0 0
      %425 = vmatpush.bf16.msra.mxu0 0
      %426 = vmatpush.bf16.msra.mxu0 0
      %427 = vmatpush.bf16.msra.mxu0 %v381
      %428 = vmatpush.bf16.msra.mxu0 %v347
      %429 = vmatmul.bf16.gmra.mxu0 %v368
      %v430 = vpop.f32.mrf.mxu0
      %v431 = vadd.f32 %v283, %v430
      %v432 = vpop.f32.mrf.mxu0
      %433 = vdwg.mxu0
      %434 = vmatpush.bf16.msra.mxu0 0
      %435 = vmatpush.bf16.msra.mxu0 0
      %436 = vmatpush.bf16.msra.mxu0 0
      %437 = vmatpush.bf16.msra.mxu0 0
      %438 = vmatpush.bf16.msra.mxu0 0
      %439 = vmatpush.bf16.msra.mxu0 0
      %440 = vmatpush.bf16.msra.mxu0 %v384
      %441 = vmatpush.bf16.msra.mxu0 %v348
      %442 = vmatmul.bf16.gmra.mxu0 %v368
      %v443 = vpop.f32.mrf.mxu0
      %v444 = vadd.f32 %v283, %v443
      %v445 = vpop.f32.mrf.mxu0
      %446 = vdwg.mxu0
      %447 = vmatpush.bf16.msra.mxu0 0
      %448 = vmatpush.bf16.msra.mxu0 0
      %449 = vmatpush.bf16.msra.mxu0 0
      %450 = vmatpush.bf16.msra.mxu0 0
      %451 = vmatpush.bf16.msra.mxu0 0
      %452 = vmatpush.bf16.msra.mxu0 0
      %453 = vmatpush.bf16.msra.mxu0 %v387
      %454 = vmatpush.bf16.msra.mxu0 %v349
      %455 = vmatmul.bf16.gmra.mxu0 %v368
      %v456 = vpop.f32.mrf.mxu0
      %v457 = vadd.f32 %v283, %v456
      %v458 = vpop.f32.mrf.mxu0
      %459 = vdwg.mxu0
      %460 = vmatpush.bf16.msra.mxu0 0
      %461 = vmatpush.bf16.msra.mxu0 0
      %462 = vmatpush.bf16.msra.mxu0 0
      %463 = vmatpush.bf16.msra.mxu0 0
      %464 = vmatpush.bf16.msra.mxu0 0
      %465 = vmatpush.bf16.msra.mxu0 0
      %466 = vmatpush.bf16.msra.mxu0 %v390
      %467 = vmatpush.bf16.msra.mxu0 %v350
      %468 = vmatmul.bf16.gmra.mxu0 %v368
      %v469 = vpop.f32.mrf.mxu0
      %v470 = vadd.f32 %v283, %v469
      %v471 = vpop.f32.mrf.mxu0
      %472 = vdwg.mxu0
      %473 = vmatpush.bf16.msra.mxu0 0
      %474 = vmatpush.bf16.msra.mxu0 0
      %475 = vmatpush.bf16.msra.mxu0 0
      %476 = vmatpush.bf16.msra.mxu0 0
      %477 = vmatpush.bf16.msra.mxu0 0
      %478 = vmatpush.bf16.msra.mxu0 0
      %479 = vmatpush.bf16.msra.mxu0 %v393
      %480 = vmatpush.bf16.msra.mxu0 %v351
      %481 = vmatmul.bf16.gmra.mxu0 %v368
      %v482 = vpop.f32.mrf.mxu0
      %v483 = vadd.f32 %v283, %v482
      %v484 = vpop.f32.mrf.mxu0
      %485 = vdwg.mxu0
      %v486 = vmax.f32 %v405, 0.0
      %v487 = vmax.f32 %v418, 0.0
      %v488 = vmax.f32 %v431, 0.0
      %v489 = vmax.f32 %v444, 0.0
      %v490 = vmax.f32 %v457, 0.0
      %v491 = vmax.f32 %v470, 0.0
      %v492 = vmax.f32 %v483, 0.0
      %493 = vst [vmem:[#allocation2] sm:$0xff] %v486
      %494 = vst [vmem:[#allocation2 + $0x8] sm:$0xff] %v487
      %495 = vst [vmem:[#allocation2 + $0x10] sm:$0xff] %v488
      %496 = vst [vmem:[#allocation2 + $0x18] sm:$0xff] %v489
      %497 = vst [vmem:[#allocation2 + $0x20] sm:$0xff] %v490
      %498 = vst [vmem:[#allocation2 + $0x28] sm:$0xff] %v491
      %vm499 = vcmask 130048
      %500 = vst.msk [vmem:[#allocation2 + $0x30] sm:$0xff] %vm499, %v492
      %s501 = scalar_lea.vmem %s272, 112
      %v502 = vld [vmem:[%s501] sm:$0xff]
      %v503 = vld [vmem:[%s501 + $0x8] sm:$0xff]
      %v504 = vld [vmem:[%s501 + $0x10] sm:$0xff]
      %v505 = vld [vmem:[%s501 + $0x18] sm:$0xf]
      %v506 = vld [vmem:[%s501 + $0x1c] sm:$0xff]
      %v507 = vld [vmem:[%s501 + $0x24] sm:$0xff]
      %v508 = vld [vmem:[%s501 + $0x2c] sm:$0xff]
      %v509 = vld [vmem:[%s501 + $0x34] sm:$0xf]
      %v510 = vld [vmem:[%s501 + $0x38] sm:$0xff]
      %v511 = vld [vmem:[%s501 + $0x40] sm:$0xff]
      %v512 = vld [vmem:[%s501 + $0x48] sm:$0xff]
      %v513 = vld [vmem:[%s501 + $0x50] sm:$0xf]
      %v514 = vld [vmem:[%s501 + $0x54] sm:$0x33]
      %v515 = vld [vmem:[%s501 + $0x5c] sm:$0x33]
      %v516 = vld [vmem:[%s501 + $0x64] sm:$0x33]
      %v517 = vld [vmem:[%s501 + $0x6c] sm:$0x3]
      %v534 = vunpack.c.l.b16 %v502
      %v535 = vunpack.c.h.b16 %v502
      %v536 = vunpack.c.l.b16 %v503
      %v537 = vunpack.c.h.b16 %v503
      %v538 = vunpack.c.l.b16 %v504
      %v539 = vunpack.c.h.b16 %v504
      %v540 = vunpack.c.l.b16 %v505
      %v541 = vunpack.c.l.b16 %v506
      %v542 = vunpack.c.h.b16 %v506
      %v543 = vunpack.c.l.b16 %v507
      %v544 = vunpack.c.h.b16 %v507
      %v545 = vunpack.c.l.b16 %v508
      %v546 = vunpack.c.h.b16 %v508
      %v547 = vunpack.c.l.b16 %v509
      %v548 = vunpack.c.l.b16 %v510
      %v549 = vunpack.c.h.b16 %v510
      %v550 = vunpack.c.l.b16 %v511
      %v551 = vunpack.c.h.b16 %v511
      %v552 = vunpack.c.l.b16 %v512
      %v553 = vunpack.c.h.b16 %v512
      %v554 = vunpack.c.l.b16 %v513
      %v555 = vunpack.c.l.b16 %v514
      %v556 = vunpack.c.h.b16 %v514
      %v557 = vunpack.c.l.b16 %v515
      %v558 = vunpack.c.h.b16 %v515
      %v559 = vunpack.c.l.b16 %v516
      %v560 = vunpack.c.h.b16 %v516
      %v561 = vunpack.c.l.b16 %v517
      %v562 = vpack.c.b16 %v541, %v534
      %v563 = vpack.c.b16 %v542, %v535
      %v564 = vpack.c.b16 %v543, %v536
      %v565 = vpack.c.b16 %v544, %v537
      %v566 = vpack.c.b16 %v545, %v538
      %v567 = vpack.c.b16 %v546, %v539
      %v568 = vpack.c.b16 %v547, %v540
      %v569 = vpack.c.b16 %v555, %v548
      %v570 = vpack.c.b16 %v556, %v549
      %v571 = vpack.c.b16 %v557, %v550
      %v572 = vpack.c.b16 %v558, %v551
      %v573 = vpack.c.b16 %v559, %v552
      %v574 = vpack.c.b16 %v560, %v553
      %v575 = vpack.c.b16 %v561, %v554
      %v584 = vand.u32 %v569, %v373
      %v587 = vand.u32 %v570, %v373
      %v590 = vand.u32 %v571, %v373
      %v593 = vand.u32 %v572, %v373
      %v596 = vand.u32 %v573, %v373
      %v599 = vand.u32 %v574, %v373
      %v602 = vand.u32 %v575, %v373
      %604 = vmatpush.bf16.msra.mxu0 0
      %605 = vmatpush.bf16.msra.mxu0 0
      %606 = vmatpush.bf16.msra.mxu0 0
      %607 = vmatpush.bf16.msra.mxu0 0
      %608 = vmatpush.bf16.msra.mxu0 0
      %609 = vmatpush.bf16.msra.mxu0 0
      %610 = vmatpush.bf16.msra.mxu0 %v584
      %611 = vmatpush.bf16.msra.mxu0 %v562
      %612 = vmatmul.bf16.gmra.mxu0 %v368
      %v613 = vpop.f32.mrf.mxu0
      %v614 = vadd.f32 %v283, %v613
      %v615 = vpop.f32.mrf.mxu0
      %616 = vdwg.mxu0
      %617 = vmatpush.bf16.msra.mxu0 0
      %618 = vmatpush.bf16.msra.mxu0 0
      %619 = vmatpush.bf16.msra.mxu0 0
      %620 = vmatpush.bf16.msra.mxu0 0
      %621 = vmatpush.bf16.msra.mxu0 0
      %622 = vmatpush.bf16.msra.mxu0 0
      %623 = vmatpush.bf16.msra.mxu0 %v587
      %624 = vmatpush.bf16.msra.mxu0 %v563
      %625 = vmatmul.bf16.gmra.mxu0 %v368
      %v626 = vpop.f32.mrf.mxu0
      %v627 = vadd.f32 %v283, %v626
      %v628 = vpop.f32.mrf.mxu0
      %629 = vdwg.mxu0
      %630 = vmatpush.bf16.msra.mxu0 0
      %631 = vmatpush.bf16.msra.mxu0 0
      %632 = vmatpush.bf16.msra.mxu0 0
      %633 = vmatpush.bf16.msra.mxu0 0
      %634 = vmatpush.bf16.msra.mxu0 0
      %635 = vmatpush.bf16.msra.mxu0 0
      %636 = vmatpush.bf16.msra.mxu0 %v590
      %637 = vmatpush.bf16.msra.mxu0 %v564
      %638 = vmatmul.bf16.gmra.mxu0 %v368
      %v639 = vpop.f32.mrf.mxu0
      %v640 = vadd.f32 %v283, %v639
      %v641 = vpop.f32.mrf.mxu0
      %642 = vdwg.mxu0
      %643 = vmatpush.bf16.msra.mxu0 0
      %644 = vmatpush.bf16.msra.mxu0 0
      %645 = vmatpush.bf16.msra.mxu0 0
      %646 = vmatpush.bf16.msra.mxu0 0
      %647 = vmatpush.bf16.msra.mxu0 0
      %648 = vmatpush.bf16.msra.mxu0 0
      %649 = vmatpush.bf16.msra.mxu0 %v593
      %650 = vmatpush.bf16.msra.mxu0 %v565
      %651 = vmatmul.bf16.gmra.mxu0 %v368
      %v652 = vpop.f32.mrf.mxu0
      %v653 = vadd.f32 %v283, %v652
      %v654 = vpop.f32.mrf.mxu0
      %655 = vdwg.mxu0
      %656 = vmatpush.bf16.msra.mxu0 0
      %657 = vmatpush.bf16.msra.mxu0 0
      %658 = vmatpush.bf16.msra.mxu0 0
      %659 = vmatpush.bf16.msra.mxu0 0
      %660 = vmatpush.bf16.msra.mxu0 0
      %661 = vmatpush.bf16.msra.mxu0 0
      %662 = vmatpush.bf16.msra.mxu0 %v596
      %663 = vmatpush.bf16.msra.mxu0 %v566
      %664 = vmatmul.bf16.gmra.mxu0 %v368
      %v665 = vpop.f32.mrf.mxu0
      %v666 = vadd.f32 %v283, %v665
      %v667 = vpop.f32.mrf.mxu0
      %668 = vdwg.mxu0
      %669 = vmatpush.bf16.msra.mxu0 0
      %670 = vmatpush.bf16.msra.mxu0 0
      %671 = vmatpush.bf16.msra.mxu0 0
      %672 = vmatpush.bf16.msra.mxu0 0
      %673 = vmatpush.bf16.msra.mxu0 0
      %674 = vmatpush.bf16.msra.mxu0 0
      %675 = vmatpush.bf16.msra.mxu0 %v599
      %676 = vmatpush.bf16.msra.mxu0 %v567
      %677 = vmatmul.bf16.gmra.mxu0 %v368
      %v678 = vpop.f32.mrf.mxu0
      %v679 = vadd.f32 %v283, %v678
      %v680 = vpop.f32.mrf.mxu0
      %681 = vdwg.mxu0
      %682 = vmatpush.bf16.msra.mxu0 0
      %683 = vmatpush.bf16.msra.mxu0 0
      %684 = vmatpush.bf16.msra.mxu0 0
      %685 = vmatpush.bf16.msra.mxu0 0
      %686 = vmatpush.bf16.msra.mxu0 0
      %687 = vmatpush.bf16.msra.mxu0 0
      %688 = vmatpush.bf16.msra.mxu0 %v602
      %689 = vmatpush.bf16.msra.mxu0 %v568
      %690 = vmatmul.bf16.gmra.mxu0 %v368
      %v691 = vpop.f32.mrf.mxu0
      %v692 = vadd.f32 %v283, %v691
      %v693 = vpop.f32.mrf.mxu0
      %694 = vdwg.mxu0
      %v695 = vmax.f32 %v614, 0.0
      %v696 = vmax.f32 %v627, 0.0
      %v697 = vmax.f32 %v640, 0.0
      %v698 = vmax.f32 %v653, 0.0
      %v699 = vmax.f32 %v666, 0.0
      %v700 = vmax.f32 %v679, 0.0
      %v701 = vmax.f32 %v692, 0.0
      %702 = vst [vmem:[#allocation2 + $0x38] sm:$0xff] %v695
      %703 = vst [vmem:[#allocation2 + $0x40] sm:$0xff] %v696
      %704 = vst [vmem:[#allocation2 + $0x48] sm:$0xff] %v697
      %705 = vst [vmem:[#allocation2 + $0x50] sm:$0xff] %v698
      %706 = vst [vmem:[#allocation2 + $0x58] sm:$0xff] %v699
      %707 = vst [vmem:[#allocation2 + $0x60] sm:$0xff] %v700
      %708 = vst.msk [vmem:[#allocation2 + $0x68] sm:$0xff] %vm499, %v701
      %s709 = scalar_lea.vmem %s272, 224
      %v710 = vld [vmem:[%s709] sm:$0xff]
      %v711 = vld [vmem:[%s709 + $0x8] sm:$0xff]
      %v712 = vld [vmem:[%s709 + $0x10] sm:$0xff]
      %v713 = vld [vmem:[%s709 + $0x18] sm:$0xf]
      %v714 = vld [vmem:[%s709 + $0x1c] sm:$0xff]
      %v715 = vld [vmem:[%s709 + $0x24] sm:$0xff]
      %v716 = vld [vmem:[%s709 + $0x2c] sm:$0xff]
      %v717 = vld [vmem:[%s709 + $0x34] sm:$0xf]
      %v718 = vld [vmem:[%s709 + $0x38] sm:$0xff]
      %v719 = vld [vmem:[%s709 + $0x40] sm:$0xff]
      %v720 = vld [vmem:[%s709 + $0x48] sm:$0xff]
      %v721 = vld [vmem:[%s709 + $0x50] sm:$0xf]
      %v722 = vld [vmem:[%s709 + $0x54] sm:$0x33]
      %v723 = vld [vmem:[%s709 + $0x5c] sm:$0x33]
      %v724 = vld [vmem:[%s709 + $0x64] sm:$0x33]
      %v725 = vld [vmem:[%s709 + $0x6c] sm:$0x3]
      %v742 = vunpack.c.l.b16 %v710
      %v743 = vunpack.c.h.b16 %v710
      %v744 = vunpack.c.l.b16 %v711
      %v745 = vunpack.c.h.b16 %v711
      %v746 = vunpack.c.l.b16 %v712
      %v747 = vunpack.c.h.b16 %v712
      %v748 = vunpack.c.l.b16 %v713
      %v749 = vunpack.c.l.b16 %v714
      %v750 = vunpack.c.h.b16 %v714
      %v751 = vunpack.c.l.b16 %v715
      %v752 = vunpack.c.h.b16 %v715
      %v753 = vunpack.c.l.b16 %v716
      %v754 = vunpack.c.h.b16 %v716
      %v755 = vunpack.c.l.b16 %v717
      %v756 = vunpack.c.l.b16 %v718
      %v757 = vunpack.c.h.b16 %v718
      %v758 = vunpack.c.l.b16 %v719
      %v759 = vunpack.c.h.b16 %v719
      %v760 = vunpack.c.l.b16 %v720
      %v761 = vunpack.c.h.b16 %v720
      %v762 = vunpack.c.l.b16 %v721
      %v763 = vunpack.c.l.b16 %v722
      %v764 = vunpack.c.h.b16 %v722
      %v765 = vunpack.c.l.b16 %v723
      %v766 = vunpack.c.h.b16 %v723
      %v767 = vunpack.c.l.b16 %v724
      %v768 = vunpack.c.h.b16 %v724
      %v769 = vunpack.c.l.b16 %v725
      %v770 = vpack.c.b16 %v749, %v742
      %v771 = vpack.c.b16 %v750, %v743
      %v772 = vpack.c.b16 %v751, %v744
      %v773 = vpack.c.b16 %v752, %v745
      %v774 = vpack.c.b16 %v753, %v746
      %v775 = vpack.c.b16 %v754, %v747
      %v776 = vpack.c.b16 %v755, %v748
      %v777 = vpack.c.b16 %v763, %v756
      %v778 = vpack.c.b16 %v764, %v757
      %v779 = vpack.c.b16 %v765, %v758
      %v780 = vpack.c.b16 %v766, %v759
      %v781 = vpack.c.b16 %v767, %v760
      %v782 = vpack.c.b16 %v768, %v761
      %v783 = vpack.c.b16 %v769, %v762
      %v792 = vand.u32 %v777, %v373
      %v795 = vand.u32 %v778, %v373
      %v798 = vand.u32 %v779, %v373
      %v801 = vand.u32 %v780, %v373
      %v804 = vand.u32 %v781, %v373
      %v807 = vand.u32 %v782, %v373
      %v810 = vand.u32 %v783, %v373
      %812 = vmatpush.bf16.msra.mxu0 0
      %813 = vmatpush.bf16.msra.mxu0 0
      %814 = vmatpush.bf16.msra.mxu0 0
      %815 = vmatpush.bf16.msra.mxu0 0
      %816 = vmatpush.bf16.msra.mxu0 0
      %817 = vmatpush.bf16.msra.mxu0 0
      %818 = vmatpush.bf16.msra.mxu0 %v792
      %819 = vmatpush.bf16.msra.mxu0 %v770
      %820 = vmatmul.bf16.gmra.mxu0 %v368
      %v821 = vpop.f32.mrf.mxu0
      %v822 = vadd.f32 %v283, %v821
      %v823 = vpop.f32.mrf.mxu0
      %824 = vdwg.mxu0
      %825 = vmatpush.bf16.msra.mxu0 0
      %826 = vmatpush.bf16.msra.mxu0 0
      %827 = vmatpush.bf16.msra.mxu0 0
      %828 = vmatpush.bf16.msra.mxu0 0
      %829 = vmatpush.bf16.msra.mxu0 0
      %830 = vmatpush.bf16.msra.mxu0 0
      %831 = vmatpush.bf16.msra.mxu0 %v795
      %832 = vmatpush.bf16.msra.mxu0 %v771
      %833 = vmatmul.bf16.gmra.mxu0 %v368
      %v834 = vpop.f32.mrf.mxu0
      %v835 = vadd.f32 %v283, %v834
      %v836 = vpop.f32.mrf.mxu0
      %837 = vdwg.mxu0
      %838 = vmatpush.bf16.msra.mxu0 0
      %839 = vmatpush.bf16.msra.mxu0 0
      %840 = vmatpush.bf16.msra.mxu0 0
      %841 = vmatpush.bf16.msra.mxu0 0
      %842 = vmatpush.bf16.msra.mxu0 0
      %843 = vmatpush.bf16.msra.mxu0 0
      %844 = vmatpush.bf16.msra.mxu0 %v798
      %845 = vmatpush.bf16.msra.mxu0 %v772
      %846 = vmatmul.bf16.gmra.mxu0 %v368
      %v847 = vpop.f32.mrf.mxu0
      %v848 = vadd.f32 %v283, %v847
      %v849 = vpop.f32.mrf.mxu0
      %850 = vdwg.mxu0
      %851 = vmatpush.bf16.msra.mxu0 0
      %852 = vmatpush.bf16.msra.mxu0 0
      %853 = vmatpush.bf16.msra.mxu0 0
      %854 = vmatpush.bf16.msra.mxu0 0
      %855 = vmatpush.bf16.msra.mxu0 0
      %856 = vmatpush.bf16.msra.mxu0 0
      %857 = vmatpush.bf16.msra.mxu0 %v801
      %858 = vmatpush.bf16.msra.mxu0 %v773
      %859 = vmatmul.bf16.gmra.mxu0 %v368
      %v860 = vpop.f32.mrf.mxu0
      %v861 = vadd.f32 %v283, %v860
      %v862 = vpop.f32.mrf.mxu0
      %863 = vdwg.mxu0
      %864 = vmatpush.bf16.msra.mxu0 0
      %865 = vmatpush.bf16.msra.mxu0 0
      %866 = vmatpush.bf16.msra.mxu0 0
      %867 = vmatpush.bf16.msra.mxu0 0
      %868 = vmatpush.bf16.msra.mxu0 0
      %869 = vmatpush.bf16.msra.mxu0 0
      %870 = vmatpush.bf16.msra.mxu0 %v804
      %871 = vmatpush.bf16.msra.mxu0 %v774
      %872 = vmatmul.bf16.gmra.mxu0 %v368
      %v873 = vpop.f32.mrf.mxu0
      %v874 = vadd.f32 %v283, %v873
      %v875 = vpop.f32.mrf.mxu0
      %876 = vdwg.mxu0
      %877 = vmatpush.bf16.msra.mxu0 0
      %878 = vmatpush.bf16.msra.mxu0 0
      %879 = vmatpush.bf16.msra.mxu0 0
      %880 = vmatpush.bf16.msra.mxu0 0
      %881 = vmatpush.bf16.msra.mxu0 0
      %882 = vmatpush.bf16.msra.mxu0 0
      %883 = vmatpush.bf16.msra.mxu0 %v807
      %884 = vmatpush.bf16.msra.mxu0 %v775
      %885 = vmatmul.bf16.gmra.mxu0 %v368
      %v886 = vpop.f32.mrf.mxu0
      %v887 = vadd.f32 %v283, %v886
      %v888 = vpop.f32.mrf.mxu0
      %889 = vdwg.mxu0
      %890 = vmatpush.bf16.msra.mxu0 0
      %891 = vmatpush.bf16.msra.mxu0 0
      %892 = vmatpush.bf16.msra.mxu0 0
      %893 = vmatpush.bf16.msra.mxu0 0
      %894 = vmatpush.bf16.msra.mxu0 0
      %895 = vmatpush.bf16.msra.mxu0 0
      %896 = vmatpush.bf16.msra.mxu0 %v810
      %897 = vmatpush.bf16.msra.mxu0 %v776
      %898 = vmatmul.bf16.gmra.mxu0 %v368
      %v899 = vpop.f32.mrf.mxu0
      %v900 = vadd.f32 %v283, %v899
      %v901 = vpop.f32.mrf.mxu0
      %902 = vdwg.mxu0
      %v903 = vmax.f32 %v822, 0.0
      %v904 = vmax.f32 %v835, 0.0
      %v905 = vmax.f32 %v848, 0.0
      %v906 = vmax.f32 %v861, 0.0
      %v907 = vmax.f32 %v874, 0.0
      %v908 = vmax.f32 %v887, 0.0
      %v909 = vmax.f32 %v900, 0.0
      %910 = vst [vmem:[#allocation2 + $0x70] sm:$0xff] %v903
      %911 = vst [vmem:[#allocation2 + $0x78] sm:$0xff] %v904
      %912 = vst [vmem:[#allocation2 + $0x80] sm:$0xff] %v905
      %913 = vst [vmem:[#allocation2 + $0x88] sm:$0xff] %v906
      %914 = vst [vmem:[#allocation2 + $0x90] sm:$0xff] %v907
      %915 = vst [vmem:[#allocation2 + $0x98] sm:$0xff] %v908
      %916 = vst.msk [vmem:[#allocation2 + $0xa0] sm:$0xff] %vm499, %v909
      %s917 = scalar_lea.vmem %s272, 336
      %v918 = vld [vmem:[%s917] sm:$0xff]
      %v919 = vld [vmem:[%s917 + $0x8] sm:$0xff]
      %v920 = vld [vmem:[%s917 + $0x10] sm:$0xff]
      %v921 = vld [vmem:[%s917 + $0x18] sm:$0xf]
      %v922 = vld [vmem:[%s917 + $0x1c] sm:$0xff]
      %v923 = vld [vmem:[%s917 + $0x24] sm:$0xff]
      %v924 = vld [vmem:[%s917 + $0x2c] sm:$0xff]
      %v925 = vld [vmem:[%s917 + $0x34] sm:$0xf]
      %v926 = vld [vmem:[%s917 + $0x38] sm:$0xff]
      %v927 = vld [vmem:[%s917 + $0x40] sm:$0xff]
      %v928 = vld [vmem:[%s917 + $0x48] sm:$0xff]
      %v929 = vld [vmem:[%s917 + $0x50] sm:$0xf]
      %v930 = vld [vmem:[%s917 + $0x54] sm:$0x33]
      %v931 = vld [vmem:[%s917 + $0x5c] sm:$0x33]
      %v932 = vld [vmem:[%s917 + $0x64] sm:$0x33]
      %v933 = vld [vmem:[%s917 + $0x6c] sm:$0x3]
      %v950 = vunpack.c.l.b16 %v918
      %v951 = vunpack.c.h.b16 %v918
      %v952 = vunpack.c.l.b16 %v919
      %v953 = vunpack.c.h.b16 %v919
      %v954 = vunpack.c.l.b16 %v920
      %v955 = vunpack.c.h.b16 %v920
      %v956 = vunpack.c.l.b16 %v921
      %v957 = vunpack.c.l.b16 %v922
      %v958 = vunpack.c.h.b16 %v922
      %v959 = vunpack.c.l.b16 %v923
      %v960 = vunpack.c.h.b16 %v923
      %v961 = vunpack.c.l.b16 %v924
      %v962 = vunpack.c.h.b16 %v924
      %v963 = vunpack.c.l.b16 %v925
      %v964 = vunpack.c.l.b16 %v926
      %v965 = vunpack.c.h.b16 %v926
      %v966 = vunpack.c.l.b16 %v927
      %v967 = vunpack.c.h.b16 %v927
      %v968 = vunpack.c.l.b16 %v928
      %v969 = vunpack.c.h.b16 %v928
      %v970 = vunpack.c.l.b16 %v929
      %v971 = vunpack.c.l.b16 %v930
      %v972 = vunpack.c.h.b16 %v930
      %v973 = vunpack.c.l.b16 %v931
      %v974 = vunpack.c.h.b16 %v931
      %v975 = vunpack.c.l.b16 %v932
      %v976 = vunpack.c.h.b16 %v932
      %v977 = vunpack.c.l.b16 %v933
      %v978 = vpack.c.b16 %v957, %v950
      %v979 = vpack.c.b16 %v958, %v951
      %v980 = vpack.c.b16 %v959, %v952
      %v981 = vpack.c.b16 %v960, %v953
      %v982 = vpack.c.b16 %v961, %v954
      %v983 = vpack.c.b16 %v962, %v955
      %v984 = vpack.c.b16 %v963, %v956
      %v985 = vpack.c.b16 %v971, %v964
      %v986 = vpack.c.b16 %v972, %v965
      %v987 = vpack.c.b16 %v973, %v966
      %v988 = vpack.c.b16 %v974, %v967
      %v989 = vpack.c.b16 %v975, %v968
      %v990 = vpack.c.b16 %v976, %v969
      %v991 = vpack.c.b16 %v977, %v970
      %v1000 = vand.u32 %v985, %v373
      %v1003 = vand.u32 %v986, %v373
      %v1006 = vand.u32 %v987, %v373
      %v1009 = vand.u32 %v988, %v373
      %v1012 = vand.u32 %v989, %v373
      %v1015 = vand.u32 %v990, %v373
      %v1018 = vand.u32 %v991, %v373
      %1020 = vmatpush.bf16.msra.mxu0 0
      %1021 = vmatpush.bf16.msra.mxu0 0
      %1022 = vmatpush.bf16.msra.mxu0 0
      %1023 = vmatpush.bf16.msra.mxu0 0
      %1024 = vmatpush.bf16.msra.mxu0 0
      %1025 = vmatpush.bf16.msra.mxu0 0
      %1026 = vmatpush.bf16.msra.mxu0 %v1000
      %1027 = vmatpush.bf16.msra.mxu0 %v978
      %1028 = vmatmul.bf16.gmra.mxu0 %v368
      %v1029 = vpop.f32.mrf.mxu0
      %v1030 = vadd.f32 %v283, %v1029
      %v1031 = vpop.f32.mrf.mxu0
      %1032 = vdwg.mxu0
      %1033 = vmatpush.bf16.msra.mxu0 0
      %1034 = vmatpush.bf16.msra.mxu0 0
      %1035 = vmatpush.bf16.msra.mxu0 0
      %1036 = vmatpush.bf16.msra.mxu0 0
      %1037 = vmatpush.bf16.msra.mxu0 0
      %1038 = vmatpush.bf16.msra.mxu0 0
      %1039 = vmatpush.bf16.msra.mxu0 %v1003
      %1040 = vmatpush.bf16.msra.mxu0 %v979
      %1041 = vmatmul.bf16.gmra.mxu0 %v368
      %v1042 = vpop.f32.mrf.mxu0
      %v1043 = vadd.f32 %v283, %v1042
      %v1044 = vpop.f32.mrf.mxu0
      %1045 = vdwg.mxu0
      %1046 = vmatpush.bf16.msra.mxu0 0
      %1047 = vmatpush.bf16.msra.mxu0 0
      %1048 = vmatpush.bf16.msra.mxu0 0
      %1049 = vmatpush.bf16.msra.mxu0 0
      %1050 = vmatpush.bf16.msra.mxu0 0
      %1051 = vmatpush.bf16.msra.mxu0 0
      %1052 = vmatpush.bf16.msra.mxu0 %v1006
      %1053 = vmatpush.bf16.msra.mxu0 %v980
      %1054 = vmatmul.bf16.gmra.mxu0 %v368
      %v1055 = vpop.f32.mrf.mxu0
      %v1056 = vadd.f32 %v283, %v1055
      %v1057 = vpop.f32.mrf.mxu0
      %1058 = vdwg.mxu0
      %1059 = vmatpush.bf16.msra.mxu0 0
      %1060 = vmatpush.bf16.msra.mxu0 0
      %1061 = vmatpush.bf16.msra.mxu0 0
      %1062 = vmatpush.bf16.msra.mxu0 0
      %1063 = vmatpush.bf16.msra.mxu0 0
      %1064 = vmatpush.bf16.msra.mxu0 0
      %1065 = vmatpush.bf16.msra.mxu0 %v1009
      %1066 = vmatpush.bf16.msra.mxu0 %v981
      %1067 = vmatmul.bf16.gmra.mxu0 %v368
      %v1068 = vpop.f32.mrf.mxu0
      %v1069 = vadd.f32 %v283, %v1068
      %v1070 = vpop.f32.mrf.mxu0
      %1071 = vdwg.mxu0
      %1072 = vmatpush.bf16.msra.mxu0 0
      %1073 = vmatpush.bf16.msra.mxu0 0
      %1074 = vmatpush.bf16.msra.mxu0 0
      %1075 = vmatpush.bf16.msra.mxu0 0
      %1076 = vmatpush.bf16.msra.mxu0 0
      %1077 = vmatpush.bf16.msra.mxu0 0
      %1078 = vmatpush.bf16.msra.mxu0 %v1012
      %1079 = vmatpush.bf16.msra.mxu0 %v982
      %1080 = vmatmul.bf16.gmra.mxu0 %v368
      %v1081 = vpop.f32.mrf.mxu0
      %v1082 = vadd.f32 %v283, %v1081
      %v1083 = vpop.f32.mrf.mxu0
      %1084 = vdwg.mxu0
      %1085 = vmatpush.bf16.msra.mxu0 0
      %1086 = vmatpush.bf16.msra.mxu0 0
      %1087 = vmatpush.bf16.msra.mxu0 0
      %1088 = vmatpush.bf16.msra.mxu0 0
      %1089 = vmatpush.bf16.msra.mxu0 0
      %1090 = vmatpush.bf16.msra.mxu0 0
      %1091 = vmatpush.bf16.msra.mxu0 %v1015
      %1092 = vmatpush.bf16.msra.mxu0 %v983
      %1093 = vmatmul.bf16.gmra.mxu0 %v368
      %v1094 = vpop.f32.mrf.mxu0
      %v1095 = vadd.f32 %v283, %v1094
      %v1096 = vpop.f32.mrf.mxu0
      %1097 = vdwg.mxu0
      %1098 = vmatpush.bf16.msra.mxu0 0
      %1099 = vmatpush.bf16.msra.mxu0 0
      %1100 = vmatpush.bf16.msra.mxu0 0
      %1101 = vmatpush.bf16.msra.mxu0 0
      %1102 = vmatpush.bf16.msra.mxu0 0
      %1103 = vmatpush.bf16.msra.mxu0 0
      %1104 = vmatpush.bf16.msra.mxu0 %v1018
      %1105 = vmatpush.bf16.msra.mxu0 %v984
      %1106 = vmatmul.bf16.gmra.mxu0 %v368
      %v1107 = vpop.f32.mrf.mxu0
      %v1108 = vadd.f32 %v283, %v1107
      %v1109 = vpop.f32.mrf.mxu0
      %1110 = vdwg.mxu0
      %v1111 = vmax.f32 %v1030, 0.0
      %v1112 = vmax.f32 %v1043, 0.0
      %v1113 = vmax.f32 %v1056, 0.0
      %v1114 = vmax.f32 %v1069, 0.0
      %v1115 = vmax.f32 %v1082, 0.0
      %v1116 = vmax.f32 %v1095, 0.0
      %v1117 = vmax.f32 %v1108, 0.0
      %1118 = vst [vmem:[#allocation2 + $0xa8] sm:$0xff] %v1111
      %1119 = vst [vmem:[#allocation2 + $0xb0] sm:$0xff] %v1112
      %1120 = vst [vmem:[#allocation2 + $0xb8] sm:$0xff] %v1113
      %1121 = vst [vmem:[#allocation2 + $0xc0] sm:$0xff] %v1114
      %1122 = vst [vmem:[#allocation2 + $0xc8] sm:$0xff] %v1115
      %1123 = vst [vmem:[#allocation2 + $0xd0] sm:$0xff] %v1116
      %1124 = vst.msk [vmem:[#allocation2 + $0xd8] sm:$0xff] %vm499, %v1117
      %s1125 = scalar_lea.vmem %s272, 448
      %v1126 = vld [vmem:[%s1125] sm:$0xff]
      %v1127 = vld [vmem:[%s1125 + $0x8] sm:$0xff]
      %v1128 = vld [vmem:[%s1125 + $0x10] sm:$0xff]
      %v1129 = vld [vmem:[%s1125 + $0x18] sm:$0xf]
      %v1130 = vld [vmem:[%s1125 + $0x1c] sm:$0xff]
      %v1131 = vld [vmem:[%s1125 + $0x24] sm:$0xff]
      %v1132 = vld [vmem:[%s1125 + $0x2c] sm:$0xff]
      %v1133 = vld [vmem:[%s1125 + $0x34] sm:$0xf]
      %v1134 = vld [vmem:[%s1125 + $0x38] sm:$0xff]
      %v1135 = vld [vmem:[%s1125 + $0x40] sm:$0xff]
      %v1136 = vld [vmem:[%s1125 + $0x48] sm:$0xff]
      %v1137 = vld [vmem:[%s1125 + $0x50] sm:$0xf]
      %v1138 = vld [vmem:[%s1125 + $0x54] sm:$0x33]
      %v1139 = vld [vmem:[%s1125 + $0x5c] sm:$0x33]
      %v1140 = vld [vmem:[%s1125 + $0x64] sm:$0x33]
      %v1141 = vld [vmem:[%s1125 + $0x6c] sm:$0x3]
      %v1158 = vunpack.c.l.b16 %v1126
      %v1159 = vunpack.c.h.b16 %v1126
      %v1160 = vunpack.c.l.b16 %v1127
      %v1161 = vunpack.c.h.b16 %v1127
      %v1162 = vunpack.c.l.b16 %v1128
      %v1163 = vunpack.c.h.b16 %v1128
      %v1164 = vunpack.c.l.b16 %v1129
      %v1165 = vunpack.c.l.b16 %v1130
      %v1166 = vunpack.c.h.b16 %v1130
      %v1167 = vunpack.c.l.b16 %v1131
      %v1168 = vunpack.c.h.b16 %v1131
      %v1169 = vunpack.c.l.b16 %v1132
      %v1170 = vunpack.c.h.b16 %v1132
      %v1171 = vunpack.c.l.b16 %v1133
      %v1172 = vunpack.c.l.b16 %v1134
      %v1173 = vunpack.c.h.b16 %v1134
      %v1174 = vunpack.c.l.b16 %v1135
      %v1175 = vunpack.c.h.b16 %v1135
      %v1176 = vunpack.c.l.b16 %v1136
      %v1177 = vunpack.c.h.b16 %v1136
      %v1178 = vunpack.c.l.b16 %v1137
      %v1179 = vunpack.c.l.b16 %v1138
      %v1180 = vunpack.c.h.b16 %v1138
      %v1181 = vunpack.c.l.b16 %v1139
      %v1182 = vunpack.c.h.b16 %v1139
      %v1183 = vunpack.c.l.b16 %v1140
      %v1184 = vunpack.c.h.b16 %v1140
      %v1185 = vunpack.c.l.b16 %v1141
      %v1186 = vpack.c.b16 %v1165, %v1158
      %v1187 = vpack.c.b16 %v1166, %v1159
      %v1188 = vpack.c.b16 %v1167, %v1160
      %v1189 = vpack.c.b16 %v1168, %v1161
      %v1190 = vpack.c.b16 %v1169, %v1162
      %v1191 = vpack.c.b16 %v1170, %v1163
      %v1192 = vpack.c.b16 %v1171, %v1164
      %v1193 = vpack.c.b16 %v1179, %v1172
      %v1194 = vpack.c.b16 %v1180, %v1173
      %v1195 = vpack.c.b16 %v1181, %v1174
      %v1196 = vpack.c.b16 %v1182, %v1175
      %v1197 = vpack.c.b16 %v1183, %v1176
      %v1198 = vpack.c.b16 %v1184, %v1177
      %v1199 = vpack.c.b16 %v1185, %v1178
      %v1208 = vand.u32 %v1193, %v373
      %v1211 = vand.u32 %v1194, %v373
      %v1214 = vand.u32 %v1195, %v373
      %v1217 = vand.u32 %v1196, %v373
      %v1220 = vand.u32 %v1197, %v373
      %v1223 = vand.u32 %v1198, %v373
      %v1226 = vand.u32 %v1199, %v373
      %1228 = vmatpush.bf16.msra.mxu0 0
      %1229 = vmatpush.bf16.msra.mxu0 0
      %1230 = vmatpush.bf16.msra.mxu0 0
      %1231 = vmatpush.bf16.msra.mxu0 0
      %1232 = vmatpush.bf16.msra.mxu0 0
      %1233 = vmatpush.bf16.msra.mxu0 0
      %1234 = vmatpush.bf16.msra.mxu0 %v1208
      %1235 = vmatpush.bf16.msra.mxu0 %v1186
      %1236 = vmatmul.bf16.gmra.mxu0 %v368
      %v1237 = vpop.f32.mrf.mxu0
      %v1238 = vadd.f32 %v283, %v1237
      %v1239 = vpop.f32.mrf.mxu0
      %1240 = vdwg.mxu0
      %1241 = vmatpush.bf16.msra.mxu0 0
      %1242 = vmatpush.bf16.msra.mxu0 0
      %1243 = vmatpush.bf16.msra.mxu0 0
      %1244 = vmatpush.bf16.msra.mxu0 0
      %1245 = vmatpush.bf16.msra.mxu0 0
      %1246 = vmatpush.bf16.msra.mxu0 0
      %1247 = vmatpush.bf16.msra.mxu0 %v1211
      %1248 = vmatpush.bf16.msra.mxu0 %v1187
      %1249 = vmatmul.bf16.gmra.mxu0 %v368
      %v1250 = vpop.f32.mrf.mxu0
      %v1251 = vadd.f32 %v283, %v1250
      %v1252 = vpop.f32.mrf.mxu0
      %1253 = vdwg.mxu0
      %1254 = vmatpush.bf16.msra.mxu0 0
      %1255 = vmatpush.bf16.msra.mxu0 0
      %1256 = vmatpush.bf16.msra.mxu0 0
      %1257 = vmatpush.bf16.msra.mxu0 0
      %1258 = vmatpush.bf16.msra.mxu0 0
      %1259 = vmatpush.bf16.msra.mxu0 0
      %1260 = vmatpush.bf16.msra.mxu0 %v1214
      %1261 = vmatpush.bf16.msra.mxu0 %v1188
      %1262 = vmatmul.bf16.gmra.mxu0 %v368
      %v1263 = vpop.f32.mrf.mxu0
      %v1264 = vadd.f32 %v283, %v1263
      %v1265 = vpop.f32.mrf.mxu0
      %1266 = vdwg.mxu0
      %1267 = vmatpush.bf16.msra.mxu0 0
      %1268 = vmatpush.bf16.msra.mxu0 0
      %1269 = vmatpush.bf16.msra.mxu0 0
      %1270 = vmatpush.bf16.msra.mxu0 0
      %1271 = vmatpush.bf16.msra.mxu0 0
      %1272 = vmatpush.bf16.msra.mxu0 0
      %1273 = vmatpush.bf16.msra.mxu0 %v1217
      %1274 = vmatpush.bf16.msra.mxu0 %v1189
      %1275 = vmatmul.bf16.gmra.mxu0 %v368
      %v1276 = vpop.f32.mrf.mxu0
      %v1277 = vadd.f32 %v283, %v1276
      %v1278 = vpop.f32.mrf.mxu0
      %1279 = vdwg.mxu0
      %1280 = vmatpush.bf16.msra.mxu0 0
      %1281 = vmatpush.bf16.msra.mxu0 0
      %1282 = vmatpush.bf16.msra.mxu0 0
      %1283 = vmatpush.bf16.msra.mxu0 0
      %1284 = vmatpush.bf16.msra.mxu0 0
      %1285 = vmatpush.bf16.msra.mxu0 0
      %1286 = vmatpush.bf16.msra.mxu0 %v1220
      %1287 = vmatpush.bf16.msra.mxu0 %v1190
      %1288 = vmatmul.bf16.gmra.mxu0 %v368
      %v1289 = vpop.f32.mrf.mxu0
      %v1290 = vadd.f32 %v283, %v1289
      %v1291 = vpop.f32.mrf.mxu0
      %1292 = vdwg.mxu0
      %1293 = vmatpush.bf16.msra.mxu0 0
      %1294 = vmatpush.bf16.msra.mxu0 0
      %1295 = vmatpush.bf16.msra.mxu0 0
      %1296 = vmatpush.bf16.msra.mxu0 0
      %1297 = vmatpush.bf16.msra.mxu0 0
      %1298 = vmatpush.bf16.msra.mxu0 0
      %1299 = vmatpush.bf16.msra.mxu0 %v1223
      %1300 = vmatpush.bf16.msra.mxu0 %v1191
      %1301 = vmatmul.bf16.gmra.mxu0 %v368
      %v1302 = vpop.f32.mrf.mxu0
      %v1303 = vadd.f32 %v283, %v1302
      %v1304 = vpop.f32.mrf.mxu0
      %1305 = vdwg.mxu0
      %1306 = vmatpush.bf16.msra.mxu0 0
      %1307 = vmatpush.bf16.msra.mxu0 0
      %1308 = vmatpush.bf16.msra.mxu0 0
      %1309 = vmatpush.bf16.msra.mxu0 0
      %1310 = vmatpush.bf16.msra.mxu0 0
      %1311 = vmatpush.bf16.msra.mxu0 0
      %1312 = vmatpush.bf16.msra.mxu0 %v1226
      %1313 = vmatpush.bf16.msra.mxu0 %v1192
      %1314 = vmatmul.bf16.gmra.mxu0 %v368
      %v1315 = vpop.f32.mrf.mxu0
      %v1316 = vadd.f32 %v283, %v1315
      %v1317 = vpop.f32.mrf.mxu0
      %1318 = vdwg.mxu0
      %v1319 = vmax.f32 %v1238, 0.0
      %v1320 = vmax.f32 %v1251, 0.0
      %v1321 = vmax.f32 %v1264, 0.0
      %v1322 = vmax.f32 %v1277, 0.0
      %v1323 = vmax.f32 %v1290, 0.0
      %v1324 = vmax.f32 %v1303, 0.0
      %v1325 = vmax.f32 %v1316, 0.0
      %1326 = vst [vmem:[#allocation2 + $0xe0] sm:$0xff] %v1319
      %1327 = vst [vmem:[#allocation2 + $0xe8] sm:$0xff] %v1320
      %1328 = vst [vmem:[#allocation2 + $0xf0] sm:$0xff] %v1321
      %1329 = vst [vmem:[#allocation2 + $0xf8] sm:$0xff] %v1322
      %1330 = vst [vmem:[#allocation2 + $0x100] sm:$0xff] %v1323
      %1331 = vst [vmem:[#allocation2 + $0x108] sm:$0xff] %v1324
      %1332 = vst.msk [vmem:[#allocation2 + $0x110] sm:$0xff] %vm499, %v1325
      %s1333 = scalar_lea.vmem %s272, 560
      %v1334 = vld [vmem:[%s1333] sm:$0xff]
      %v1335 = vld [vmem:[%s1333 + $0x8] sm:$0xff]
      %v1336 = vld [vmem:[%s1333 + $0x10] sm:$0xff]
      %v1337 = vld [vmem:[%s1333 + $0x18] sm:$0xf]
      %v1338 = vld [vmem:[%s1333 + $0x1c] sm:$0xff]
      %v1339 = vld [vmem:[%s1333 + $0x24] sm:$0xff]
      %v1340 = vld [vmem:[%s1333 + $0x2c] sm:$0xff]
      %v1341 = vld [vmem:[%s1333 + $0x34] sm:$0xf]
      %v1342 = vld [vmem:[%s1333 + $0x38] sm:$0xff]
      %v1343 = vld [vmem:[%s1333 + $0x40] sm:$0xff]
      %v1344 = vld [vmem:[%s1333 + $0x48] sm:$0xff]
      %v1345 = vld [vmem:[%s1333 + $0x50] sm:$0xf]
      %v1346 = vld [vmem:[%s1333 + $0x54] sm:$0x33]
      %v1347 = vld [vmem:[%s1333 + $0x5c] sm:$0x33]
      %v1348 = vld [vmem:[%s1333 + $0x64] sm:$0x33]
      %v1349 = vld [vmem:[%s1333 + $0x6c] sm:$0x3]
      %v1366 = vunpack.c.l.b16 %v1334
      %v1367 = vunpack.c.h.b16 %v1334
      %v1368 = vunpack.c.l.b16 %v1335
      %v1369 = vunpack.c.h.b16 %v1335
      %v1370 = vunpack.c.l.b16 %v1336
      %v1371 = vunpack.c.h.b16 %v1336
      %v1372 = vunpack.c.l.b16 %v1337
      %v1373 = vunpack.c.l.b16 %v1338
      %v1374 = vunpack.c.h.b16 %v1338
      %v1375 = vunpack.c.l.b16 %v1339
      %v1376 = vunpack.c.h.b16 %v1339
      %v1377 = vunpack.c.l.b16 %v1340
      %v1378 = vunpack.c.h.b16 %v1340
      %v1379 = vunpack.c.l.b16 %v1341
      %v1380 = vunpack.c.l.b16 %v1342
      %v1381 = vunpack.c.h.b16 %v1342
      %v1382 = vunpack.c.l.b16 %v1343
      %v1383 = vunpack.c.h.b16 %v1343
      %v1384 = vunpack.c.l.b16 %v1344
      %v1385 = vunpack.c.h.b16 %v1344
      %v1386 = vunpack.c.l.b16 %v1345
      %v1387 = vunpack.c.l.b16 %v1346
      %v1388 = vunpack.c.h.b16 %v1346
      %v1389 = vunpack.c.l.b16 %v1347
      %v1390 = vunpack.c.h.b16 %v1347
      %v1391 = vunpack.c.l.b16 %v1348
      %v1392 = vunpack.c.h.b16 %v1348
      %v1393 = vunpack.c.l.b16 %v1349
      %v1394 = vpack.c.b16 %v1373, %v1366
      %v1395 = vpack.c.b16 %v1374, %v1367
      %v1396 = vpack.c.b16 %v1375, %v1368
      %v1397 = vpack.c.b16 %v1376, %v1369
      %v1398 = vpack.c.b16 %v1377, %v1370
      %v1399 = vpack.c.b16 %v1378, %v1371
      %v1400 = vpack.c.b16 %v1379, %v1372
      %v1401 = vpack.c.b16 %v1387, %v1380
      %v1402 = vpack.c.b16 %v1388, %v1381
      %v1403 = vpack.c.b16 %v1389, %v1382
      %v1404 = vpack.c.b16 %v1390, %v1383
      %v1405 = vpack.c.b16 %v1391, %v1384
      %v1406 = vpack.c.b16 %v1392, %v1385
      %v1407 = vpack.c.b16 %v1393, %v1386
      %v1416 = vand.u32 %v1401, %v373
      %v1419 = vand.u32 %v1402, %v373
      %v1422 = vand.u32 %v1403, %v373
      %v1425 = vand.u32 %v1404, %v373
      %v1428 = vand.u32 %v1405, %v373
      %v1431 = vand.u32 %v1406, %v373
      %v1434 = vand.u32 %v1407, %v373
      %1436 = vmatpush.bf16.msra.mxu0 0
      %1437 = vmatpush.bf16.msra.mxu0 0
      %1438 = vmatpush.bf16.msra.mxu0 0
      %1439 = vmatpush.bf16.msra.mxu0 0
      %1440 = vmatpush.bf16.msra.mxu0 0
      %1441 = vmatpush.bf16.msra.mxu0 0
      %1442 = vmatpush.bf16.msra.mxu0 %v1416
      %1443 = vmatpush.bf16.msra.mxu0 %v1394
      %1444 = vmatmul.bf16.gmra.mxu0 %v368
      %v1445 = vpop.f32.mrf.mxu0
      %v1446 = vadd.f32 %v283, %v1445
      %v1447 = vpop.f32.mrf.mxu0
      %1448 = vdwg.mxu0
      %1449 = vmatpush.bf16.msra.mxu0 0
      %1450 = vmatpush.bf16.msra.mxu0 0
      %1451 = vmatpush.bf16.msra.mxu0 0
      %1452 = vmatpush.bf16.msra.mxu0 0
      %1453 = vmatpush.bf16.msra.mxu0 0
      %1454 = vmatpush.bf16.msra.mxu0 0
      %1455 = vmatpush.bf16.msra.mxu0 %v1419
      %1456 = vmatpush.bf16.msra.mxu0 %v1395
      %1457 = vmatmul.bf16.gmra.mxu0 %v368
      %v1458 = vpop.f32.mrf.mxu0
      %v1459 = vadd.f32 %v283, %v1458
      %v1460 = vpop.f32.mrf.mxu0
      %1461 = vdwg.mxu0
      %1462 = vmatpush.bf16.msra.mxu0 0
      %1463 = vmatpush.bf16.msra.mxu0 0
      %1464 = vmatpush.bf16.msra.mxu0 0
      %1465 = vmatpush.bf16.msra.mxu0 0
      %1466 = vmatpush.bf16.msra.mxu0 0
      %1467 = vmatpush.bf16.msra.mxu0 0
      %1468 = vmatpush.bf16.msra.mxu0 %v1422
      %1469 = vmatpush.bf16.msra.mxu0 %v1396
      %1470 = vmatmul.bf16.gmra.mxu0 %v368
      %v1471 = vpop.f32.mrf.mxu0
      %v1472 = vadd.f32 %v283, %v1471
      %v1473 = vpop.f32.mrf.mxu0
      %1474 = vdwg.mxu0
      %1475 = vmatpush.bf16.msra.mxu0 0
      %1476 = vmatpush.bf16.msra.mxu0 0
      %1477 = vmatpush.bf16.msra.mxu0 0
      %1478 = vmatpush.bf16.msra.mxu0 0
      %1479 = vmatpush.bf16.msra.mxu0 0
      %1480 = vmatpush.bf16.msra.mxu0 0
      %1481 = vmatpush.bf16.msra.mxu0 %v1425
      %1482 = vmatpush.bf16.msra.mxu0 %v1397
      %1483 = vmatmul.bf16.gmra.mxu0 %v368
      %v1484 = vpop.f32.mrf.mxu0
      %v1485 = vadd.f32 %v283, %v1484
      %v1486 = vpop.f32.mrf.mxu0
      %1487 = vdwg.mxu0
      %1488 = vmatpush.bf16.msra.mxu0 0
      %1489 = vmatpush.bf16.msra.mxu0 0
      %1490 = vmatpush.bf16.msra.mxu0 0
      %1491 = vmatpush.bf16.msra.mxu0 0
      %1492 = vmatpush.bf16.msra.mxu0 0
      %1493 = vmatpush.bf16.msra.mxu0 0
      %1494 = vmatpush.bf16.msra.mxu0 %v1428
      %1495 = vmatpush.bf16.msra.mxu0 %v1398
      %1496 = vmatmul.bf16.gmra.mxu0 %v368
      %v1497 = vpop.f32.mrf.mxu0
      %v1498 = vadd.f32 %v283, %v1497
      %v1499 = vpop.f32.mrf.mxu0
      %1500 = vdwg.mxu0
      %1501 = vmatpush.bf16.msra.mxu0 0
      %1502 = vmatpush.bf16.msra.mxu0 0
      %1503 = vmatpush.bf16.msra.mxu0 0
      %1504 = vmatpush.bf16.msra.mxu0 0
      %1505 = vmatpush.bf16.msra.mxu0 0
      %1506 = vmatpush.bf16.msra.mxu0 0
      %1507 = vmatpush.bf16.msra.mxu0 %v1431
      %1508 = vmatpush.bf16.msra.mxu0 %v1399
      %1509 = vmatmul.bf16.gmra.mxu0 %v368
      %v1510 = vpop.f32.mrf.mxu0
      %v1511 = vadd.f32 %v283, %v1510
      %v1512 = vpop.f32.mrf.mxu0
      %1513 = vdwg.mxu0
      %1514 = vmatpush.bf16.msra.mxu0 0
      %1515 = vmatpush.bf16.msra.mxu0 0
      %1516 = vmatpush.bf16.msra.mxu0 0
      %1517 = vmatpush.bf16.msra.mxu0 0
      %1518 = vmatpush.bf16.msra.mxu0 0
      %1519 = vmatpush.bf16.msra.mxu0 0
      %1520 = vmatpush.bf16.msra.mxu0 %v1434
      %1521 = vmatpush.bf16.msra.mxu0 %v1400
      %1522 = vmatmul.bf16.gmra.mxu0 %v368
      %v1523 = vpop.f32.mrf.mxu0
      %v1524 = vadd.f32 %v283, %v1523
      %v1525 = vpop.f32.mrf.mxu0
      %1526 = vdwg.mxu0
      %v1527 = vmax.f32 %v1446, 0.0
      %v1528 = vmax.f32 %v1459, 0.0
      %v1529 = vmax.f32 %v1472, 0.0
      %v1530 = vmax.f32 %v1485, 0.0
      %v1531 = vmax.f32 %v1498, 0.0
      %v1532 = vmax.f32 %v1511, 0.0
      %v1533 = vmax.f32 %v1524, 0.0
      %1534 = vst [vmem:[#allocation2 + $0x118] sm:$0xff] %v1527
      %1535 = vst [vmem:[#allocation2 + $0x120] sm:$0xff] %v1528
      %1536 = vst [vmem:[#allocation2 + $0x128] sm:$0xff] %v1529
      %1537 = vst [vmem:[#allocation2 + $0x130] sm:$0xff] %v1530
      %1538 = vst [vmem:[#allocation2 + $0x138] sm:$0xff] %v1531
      %1539 = vst [vmem:[#allocation2 + $0x140] sm:$0xff] %v1532
      %1540 = vst.msk [vmem:[#allocation2 + $0x148] sm:$0xff] %vm499, %v1533
      %s1541 = scalar_lea.vmem %s272, 672
      %v1542 = vld [vmem:[%s1541] sm:$0xff]
      %v1543 = vld [vmem:[%s1541 + $0x8] sm:$0xff]
      %v1544 = vld [vmem:[%s1541 + $0x10] sm:$0xff]
      %v1545 = vld [vmem:[%s1541 + $0x18] sm:$0xf]
      %v1546 = vld [vmem:[%s1541 + $0x1c] sm:$0xff]
      %v1547 = vld [vmem:[%s1541 + $0x24] sm:$0xff]
      %v1548 = vld [vmem:[%s1541 + $0x2c] sm:$0xff]
      %v1549 = vld [vmem:[%s1541 + $0x34] sm:$0xf]
      %v1550 = vld [vmem:[%s1541 + $0x38] sm:$0xff]
      %v1551 = vld [vmem:[%s1541 + $0x40] sm:$0xff]
      %v1552 = vld [vmem:[%s1541 + $0x48] sm:$0xff]
      %v1553 = vld [vmem:[%s1541 + $0x50] sm:$0xf]
      %v1554 = vld [vmem:[%s1541 + $0x54] sm:$0x33]
      %v1555 = vld [vmem:[%s1541 + $0x5c] sm:$0x33]
      %v1556 = vld [vmem:[%s1541 + $0x64] sm:$0x33]
      %v1557 = vld [vmem:[%s1541 + $0x6c] sm:$0x3]
      %v1574 = vunpack.c.l.b16 %v1542
      %v1575 = vunpack.c.h.b16 %v1542
      %v1576 = vunpack.c.l.b16 %v1543
      %v1577 = vunpack.c.h.b16 %v1543
      %v1578 = vunpack.c.l.b16 %v1544
      %v1579 = vunpack.c.h.b16 %v1544
      %v1580 = vunpack.c.l.b16 %v1545
      %v1581 = vunpack.c.l.b16 %v1546
      %v1582 = vunpack.c.h.b16 %v1546
      %v1583 = vunpack.c.l.b16 %v1547
      %v1584 = vunpack.c.h.b16 %v1547
      %v1585 = vunpack.c.l.b16 %v1548
      %v1586 = vunpack.c.h.b16 %v1548
      %v1587 = vunpack.c.l.b16 %v1549
      %v1588 = vunpack.c.l.b16 %v1550
      %v1589 = vunpack.c.h.b16 %v1550
      %v1590 = vunpack.c.l.b16 %v1551
      %v1591 = vunpack.c.h.b16 %v1551
      %v1592 = vunpack.c.l.b16 %v1552
      %v1593 = vunpack.c.h.b16 %v1552
      %v1594 = vunpack.c.l.b16 %v1553
      %v1595 = vunpack.c.l.b16 %v1554
      %v1596 = vunpack.c.h.b16 %v1554
      %v1597 = vunpack.c.l.b16 %v1555
      %v1598 = vunpack.c.h.b16 %v1555
      %v1599 = vunpack.c.l.b16 %v1556
      %v1600 = vunpack.c.h.b16 %v1556
      %v1601 = vunpack.c.l.b16 %v1557
      %v1602 = vpack.c.b16 %v1581, %v1574
      %v1603 = vpack.c.b16 %v1582, %v1575
      %v1604 = vpack.c.b16 %v1583, %v1576
      %v1605 = vpack.c.b16 %v1584, %v1577
      %v1606 = vpack.c.b16 %v1585, %v1578
      %v1607 = vpack.c.b16 %v1586, %v1579
      %v1608 = vpack.c.b16 %v1587, %v1580
      %v1609 = vpack.c.b16 %v1595, %v1588
      %v1610 = vpack.c.b16 %v1596, %v1589
      %v1611 = vpack.c.b16 %v1597, %v1590
      %v1612 = vpack.c.b16 %v1598, %v1591
      %v1613 = vpack.c.b16 %v1599, %v1592
      %v1614 = vpack.c.b16 %v1600, %v1593
      %v1615 = vpack.c.b16 %v1601, %v1594
      %v1624 = vand.u32 %v1609, %v373
      %v1627 = vand.u32 %v1610, %v373
      %v1630 = vand.u32 %v1611, %v373
      %v1633 = vand.u32 %v1612, %v373
      %v1636 = vand.u32 %v1613, %v373
      %v1639 = vand.u32 %v1614, %v373
      %v1642 = vand.u32 %v1615, %v373
      %1644 = vmatpush.bf16.msra.mxu0 0
      %1645 = vmatpush.bf16.msra.mxu0 0
      %1646 = vmatpush.bf16.msra.mxu0 0
      %1647 = vmatpush.bf16.msra.mxu0 0
      %1648 = vmatpush.bf16.msra.mxu0 0
      %1649 = vmatpush.bf16.msra.mxu0 0
      %1650 = vmatpush.bf16.msra.mxu0 %v1624
      %1651 = vmatpush.bf16.msra.mxu0 %v1602
      %1652 = vmatmul.bf16.gmra.mxu0 %v368
      %v1653 = vpop.f32.mrf.mxu0
      %v1654 = vadd.f32 %v283, %v1653
      %v1655 = vpop.f32.mrf.mxu0
      %1656 = vdwg.mxu0
      %1657 = vmatpush.bf16.msra.mxu0 0
      %1658 = vmatpush.bf16.msra.mxu0 0
      %1659 = vmatpush.bf16.msra.mxu0 0
      %1660 = vmatpush.bf16.msra.mxu0 0
      %1661 = vmatpush.bf16.msra.mxu0 0
      %1662 = vmatpush.bf16.msra.mxu0 0
      %1663 = vmatpush.bf16.msra.mxu0 %v1627
      %1664 = vmatpush.bf16.msra.mxu0 %v1603
      %1665 = vmatmul.bf16.gmra.mxu0 %v368
      %v1666 = vpop.f32.mrf.mxu0
      %v1667 = vadd.f32 %v283, %v1666
      %v1668 = vpop.f32.mrf.mxu0
      %1669 = vdwg.mxu0
      %1670 = vmatpush.bf16.msra.mxu0 0
      %1671 = vmatpush.bf16.msra.mxu0 0
      %1672 = vmatpush.bf16.msra.mxu0 0
      %1673 = vmatpush.bf16.msra.mxu0 0
      %1674 = vmatpush.bf16.msra.mxu0 0
      %1675 = vmatpush.bf16.msra.mxu0 0
      %1676 = vmatpush.bf16.msra.mxu0 %v1630
      %1677 = vmatpush.bf16.msra.mxu0 %v1604
      %1678 = vmatmul.bf16.gmra.mxu0 %v368
      %v1679 = vpop.f32.mrf.mxu0
      %v1680 = vadd.f32 %v283, %v1679
      %v1681 = vpop.f32.mrf.mxu0
      %1682 = vdwg.mxu0
      %1683 = vmatpush.bf16.msra.mxu0 0
      %1684 = vmatpush.bf16.msra.mxu0 0
      %1685 = vmatpush.bf16.msra.mxu0 0
      %1686 = vmatpush.bf16.msra.mxu0 0
      %1687 = vmatpush.bf16.msra.mxu0 0
      %1688 = vmatpush.bf16.msra.mxu0 0
      %1689 = vmatpush.bf16.msra.mxu0 %v1633
      %1690 = vmatpush.bf16.msra.mxu0 %v1605
      %1691 = vmatmul.bf16.gmra.mxu0 %v368
      %v1692 = vpop.f32.mrf.mxu0
      %v1693 = vadd.f32 %v283, %v1692
      %v1694 = vpop.f32.mrf.mxu0
      %1695 = vdwg.mxu0
      %1696 = vmatpush.bf16.msra.mxu0 0
      %1697 = vmatpush.bf16.msra.mxu0 0
      %1698 = vmatpush.bf16.msra.mxu0 0
      %1699 = vmatpush.bf16.msra.mxu0 0
      %1700 = vmatpush.bf16.msra.mxu0 0
      %1701 = vmatpush.bf16.msra.mxu0 0
      %1702 = vmatpush.bf16.msra.mxu0 %v1636
      %1703 = vmatpush.bf16.msra.mxu0 %v1606
      %1704 = vmatmul.bf16.gmra.mxu0 %v368
      %v1705 = vpop.f32.mrf.mxu0
      %v1706 = vadd.f32 %v283, %v1705
      %v1707 = vpop.f32.mrf.mxu0
      %1708 = vdwg.mxu0
      %1709 = vmatpush.bf16.msra.mxu0 0
      %1710 = vmatpush.bf16.msra.mxu0 0
      %1711 = vmatpush.bf16.msra.mxu0 0
      %1712 = vmatpush.bf16.msra.mxu0 0
      %1713 = vmatpush.bf16.msra.mxu0 0
      %1714 = vmatpush.bf16.msra.mxu0 0
      %1715 = vmatpush.bf16.msra.mxu0 %v1639
      %1716 = vmatpush.bf16.msra.mxu0 %v1607
      %1717 = vmatmul.bf16.gmra.mxu0 %v368
      %v1718 = vpop.f32.mrf.mxu0
      %v1719 = vadd.f32 %v283, %v1718
      %v1720 = vpop.f32.mrf.mxu0
      %1721 = vdwg.mxu0
      %1722 = vmatpush.bf16.msra.mxu0 0
      %1723 = vmatpush.bf16.msra.mxu0 0
      %1724 = vmatpush.bf16.msra.mxu0 0
      %1725 = vmatpush.bf16.msra.mxu0 0
      %1726 = vmatpush.bf16.msra.mxu0 0
      %1727 = vmatpush.bf16.msra.mxu0 0
      %1728 = vmatpush.bf16.msra.mxu0 %v1642
      %1729 = vmatpush.bf16.msra.mxu0 %v1608
      %1730 = vmatmul.bf16.gmra.mxu0 %v368
      %v1731 = vpop.f32.mrf.mxu0
      %v1732 = vadd.f32 %v283, %v1731
      %v1733 = vpop.f32.mrf.mxu0
      %1734 = vdwg.mxu0
      %v1735 = vmax.f32 %v1654, 0.0
      %v1736 = vmax.f32 %v1667, 0.0
      %v1737 = vmax.f32 %v1680, 0.0
      %v1738 = vmax.f32 %v1693, 0.0
      %v1739 = vmax.f32 %v1706, 0.0
      %v1740 = vmax.f32 %v1719, 0.0
      %v1741 = vmax.f32 %v1732, 0.0
      %1742 = vst [vmem:[#allocation2 + $0x150] sm:$0xff] %v1735
      %1743 = vst [vmem:[#allocation2 + $0x158] sm:$0xff] %v1736
      %1744 = vst [vmem:[#allocation2 + $0x160] sm:$0xff] %v1737
      %1745 = vst [vmem:[#allocation2 + $0x168] sm:$0xff] %v1738
      %1746 = vst [vmem:[#allocation2 + $0x170] sm:$0xff] %v1739
      %1747 = vst [vmem:[#allocation2 + $0x178] sm:$0xff] %v1740
      %1748 = vst.msk [vmem:[#allocation2 + $0x180] sm:$0xff] %vm499, %v1741
      %s1749 = scalar_lea.vmem %s272, 784
      %v1750 = vld [vmem:[%s1749] sm:$0xff]
      %v1751 = vld [vmem:[%s1749 + $0x8] sm:$0xff]
      %v1752 = vld [vmem:[%s1749 + $0x10] sm:$0xff]
      %v1753 = vld [vmem:[%s1749 + $0x18] sm:$0xf]
      %v1754 = vld [vmem:[%s1749 + $0x1c] sm:$0xff]
      %v1755 = vld [vmem:[%s1749 + $0x24] sm:$0xff]
      %v1756 = vld [vmem:[%s1749 + $0x2c] sm:$0xff]
      %v1757 = vld [vmem:[%s1749 + $0x34] sm:$0xf]
      %v1758 = vld [vmem:[%s1749 + $0x38] sm:$0xff]
      %v1759 = vld [vmem:[%s1749 + $0x40] sm:$0xff]
      %v1760 = vld [vmem:[%s1749 + $0x48] sm:$0xff]
      %v1761 = vld [vmem:[%s1749 + $0x50] sm:$0xf]
      %v1762 = vld [vmem:[%s1749 + $0x54] sm:$0x33]
      %v1763 = vld [vmem:[%s1749 + $0x5c] sm:$0x33]
      %v1764 = vld [vmem:[%s1749 + $0x64] sm:$0x33]
      %v1765 = vld [vmem:[%s1749 + $0x6c] sm:$0x3]
      %v1782 = vunpack.c.l.b16 %v1750
      %v1783 = vunpack.c.h.b16 %v1750
      %v1784 = vunpack.c.l.b16 %v1751
      %v1785 = vunpack.c.h.b16 %v1751
      %v1786 = vunpack.c.l.b16 %v1752
      %v1787 = vunpack.c.h.b16 %v1752
      %v1788 = vunpack.c.l.b16 %v1753
      %v1789 = vunpack.c.l.b16 %v1754
      %v1790 = vunpack.c.h.b16 %v1754
      %v1791 = vunpack.c.l.b16 %v1755
      %v1792 = vunpack.c.h.b16 %v1755
      %v1793 = vunpack.c.l.b16 %v1756
      %v1794 = vunpack.c.h.b16 %v1756
      %v1795 = vunpack.c.l.b16 %v1757
      %v1796 = vunpack.c.l.b16 %v1758
      %v1797 = vunpack.c.h.b16 %v1758
      %v1798 = vunpack.c.l.b16 %v1759
      %v1799 = vunpack.c.h.b16 %v1759
      %v1800 = vunpack.c.l.b16 %v1760
      %v1801 = vunpack.c.h.b16 %v1760
      %v1802 = vunpack.c.l.b16 %v1761
      %v1803 = vunpack.c.l.b16 %v1762
      %v1804 = vunpack.c.h.b16 %v1762
      %v1805 = vunpack.c.l.b16 %v1763
      %v1806 = vunpack.c.h.b16 %v1763
      %v1807 = vunpack.c.l.b16 %v1764
      %v1808 = vunpack.c.h.b16 %v1764
      %v1809 = vunpack.c.l.b16 %v1765
      %v1810 = vpack.c.b16 %v1789, %v1782
      %v1811 = vpack.c.b16 %v1790, %v1783
      %v1812 = vpack.c.b16 %v1791, %v1784
      %v1813 = vpack.c.b16 %v1792, %v1785
      %v1814 = vpack.c.b16 %v1793, %v1786
      %v1815 = vpack.c.b16 %v1794, %v1787
      %v1816 = vpack.c.b16 %v1795, %v1788
      %v1817 = vpack.c.b16 %v1803, %v1796
      %v1818 = vpack.c.b16 %v1804, %v1797
      %v1819 = vpack.c.b16 %v1805, %v1798
      %v1820 = vpack.c.b16 %v1806, %v1799
      %v1821 = vpack.c.b16 %v1807, %v1800
      %v1822 = vpack.c.b16 %v1808, %v1801
      %v1823 = vpack.c.b16 %v1809, %v1802
      %v1832 = vand.u32 %v1817, %v373
      %v1835 = vand.u32 %v1818, %v373
      %v1838 = vand.u32 %v1819, %v373
      %v1841 = vand.u32 %v1820, %v373
      %v1844 = vand.u32 %v1821, %v373
      %v1847 = vand.u32 %v1822, %v373
      %v1850 = vand.u32 %v1823, %v373
      %1852 = vmatpush.bf16.msra.mxu0 0
      %1853 = vmatpush.bf16.msra.mxu0 0
      %1854 = vmatpush.bf16.msra.mxu0 0
      %1855 = vmatpush.bf16.msra.mxu0 0
      %1856 = vmatpush.bf16.msra.mxu0 0
      %1857 = vmatpush.bf16.msra.mxu0 0
      %1858 = vmatpush.bf16.msra.mxu0 %v1832
      %1859 = vmatpush.bf16.msra.mxu0 %v1810
      %1860 = vmatmul.bf16.gmra.mxu0 %v368
      %v1861 = vpop.f32.mrf.mxu0
      %v1862 = vadd.f32 %v283, %v1861
      %v1863 = vpop.f32.mrf.mxu0
      %1864 = vdwg.mxu0
      %1865 = vmatpush.bf16.msra.mxu0 0
      %1866 = vmatpush.bf16.msra.mxu0 0
      %1867 = vmatpush.bf16.msra.mxu0 0
      %1868 = vmatpush.bf16.msra.mxu0 0
      %1869 = vmatpush.bf16.msra.mxu0 0
      %1870 = vmatpush.bf16.msra.mxu0 0
      %1871 = vmatpush.bf16.msra.mxu0 %v1835
      %1872 = vmatpush.bf16.msra.mxu0 %v1811
      %1873 = vmatmul.bf16.gmra.mxu0 %v368
      %v1874 = vpop.f32.mrf.mxu0
      %v1875 = vadd.f32 %v283, %v1874
      %v1876 = vpop.f32.mrf.mxu0
      %1877 = vdwg.mxu0
      %1878 = vmatpush.bf16.msra.mxu0 0
      %1879 = vmatpush.bf16.msra.mxu0 0
      %1880 = vmatpush.bf16.msra.mxu0 0
      %1881 = vmatpush.bf16.msra.mxu0 0
      %1882 = vmatpush.bf16.msra.mxu0 0
      %1883 = vmatpush.bf16.msra.mxu0 0
      %1884 = vmatpush.bf16.msra.mxu0 %v1838
      %1885 = vmatpush.bf16.msra.mxu0 %v1812
      %1886 = vmatmul.bf16.gmra.mxu0 %v368
      %v1887 = vpop.f32.mrf.mxu0
      %v1888 = vadd.f32 %v283, %v1887
      %v1889 = vpop.f32.mrf.mxu0
      %1890 = vdwg.mxu0
      %1891 = vmatpush.bf16.msra.mxu0 0
      %1892 = vmatpush.bf16.msra.mxu0 0
      %1893 = vmatpush.bf16.msra.mxu0 0
      %1894 = vmatpush.bf16.msra.mxu0 0
      %1895 = vmatpush.bf16.msra.mxu0 0
      %1896 = vmatpush.bf16.msra.mxu0 0
      %1897 = vmatpush.bf16.msra.mxu0 %v1841
      %1898 = vmatpush.bf16.msra.mxu0 %v1813
      %1899 = vmatmul.bf16.gmra.mxu0 %v368
      %v1900 = vpop.f32.mrf.mxu0
      %v1901 = vadd.f32 %v283, %v1900
      %v1902 = vpop.f32.mrf.mxu0
      %1903 = vdwg.mxu0
      %1904 = vmatpush.bf16.msra.mxu0 0
      %1905 = vmatpush.bf16.msra.mxu0 0
      %1906 = vmatpush.bf16.msra.mxu0 0
      %1907 = vmatpush.bf16.msra.mxu0 0
      %1908 = vmatpush.bf16.msra.mxu0 0
      %1909 = vmatpush.bf16.msra.mxu0 0
      %1910 = vmatpush.bf16.msra.mxu0 %v1844
      %1911 = vmatpush.bf16.msra.mxu0 %v1814
      %1912 = vmatmul.bf16.gmra.mxu0 %v368
      %v1913 = vpop.f32.mrf.mxu0
      %v1914 = vadd.f32 %v283, %v1913
      %v1915 = vpop.f32.mrf.mxu0
      %1916 = vdwg.mxu0
      %1917 = vmatpush.bf16.msra.mxu0 0
      %1918 = vmatpush.bf16.msra.mxu0 0
      %1919 = vmatpush.bf16.msra.mxu0 0
      %1920 = vmatpush.bf16.msra.mxu0 0
      %1921 = vmatpush.bf16.msra.mxu0 0
      %1922 = vmatpush.bf16.msra.mxu0 0
      %1923 = vmatpush.bf16.msra.mxu0 %v1847
      %1924 = vmatpush.bf16.msra.mxu0 %v1815
      %1925 = vmatmul.bf16.gmra.mxu0 %v368
      %v1926 = vpop.f32.mrf.mxu0
      %v1927 = vadd.f32 %v283, %v1926
      %v1928 = vpop.f32.mrf.mxu0
      %1929 = vdwg.mxu0
      %1930 = vmatpush.bf16.msra.mxu0 0
      %1931 = vmatpush.bf16.msra.mxu0 0
      %1932 = vmatpush.bf16.msra.mxu0 0
      %1933 = vmatpush.bf16.msra.mxu0 0
      %1934 = vmatpush.bf16.msra.mxu0 0
      %1935 = vmatpush.bf16.msra.mxu0 0
      %1936 = vmatpush.bf16.msra.mxu0 %v1850
      %1937 = vmatpush.bf16.msra.mxu0 %v1816
      %1938 = vmatmul.bf16.gmra.mxu0 %v368
      %v1939 = vpop.f32.mrf.mxu0
      %v1940 = vadd.f32 %v283, %v1939
      %v1941 = vpop.f32.mrf.mxu0
      %1942 = vdwg.mxu0
      %v1943 = vmax.f32 %v1862, 0.0
      %v1944 = vmax.f32 %v1875, 0.0
      %v1945 = vmax.f32 %v1888, 0.0
      %v1946 = vmax.f32 %v1901, 0.0
      %v1947 = vmax.f32 %v1914, 0.0
      %v1948 = vmax.f32 %v1927, 0.0
      %v1949 = vmax.f32 %v1940, 0.0
      %1950 = vst [vmem:[#allocation2 + $0x188] sm:$0xff] %v1943
      %1951 = vst [vmem:[#allocation2 + $0x190] sm:$0xff] %v1944
      %1952 = vst [vmem:[#allocation2 + $0x198] sm:$0xff] %v1945
      %1953 = vst [vmem:[#allocation2 + $0x1a0] sm:$0xff] %v1946
      %1954 = vst [vmem:[#allocation2 + $0x1a8] sm:$0xff] %v1947
      %1955 = vst [vmem:[#allocation2 + $0x1b0] sm:$0xff] %v1948
      %1956 = vst.msk [vmem:[#allocation2 + $0x1b8] sm:$0xff] %vm499, %v1949
      %s1957 = scalar_lea.vmem %s272, 896
      %v1958 = vld [vmem:[%s1957] sm:$0xff]
      %v1959 = vld [vmem:[%s1957 + $0x8] sm:$0xff]
      %v1960 = vld [vmem:[%s1957 + $0x10] sm:$0xff]
      %v1961 = vld [vmem:[%s1957 + $0x18] sm:$0xf]
      %v1962 = vld [vmem:[%s1957 + $0x1c] sm:$0xff]
      %v1963 = vld [vmem:[%s1957 + $0x24] sm:$0xff]
      %v1964 = vld [vmem:[%s1957 + $0x2c] sm:$0xff]
      %v1965 = vld [vmem:[%s1957 + $0x34] sm:$0xf]
      %v1966 = vld [vmem:[%s1957 + $0x38] sm:$0xff]
      %v1967 = vld [vmem:[%s1957 + $0x40] sm:$0xff]
      %v1968 = vld [vmem:[%s1957 + $0x48] sm:$0xff]
      %v1969 = vld [vmem:[%s1957 + $0x50] sm:$0xf]
      %v1970 = vld [vmem:[%s1957 + $0x54] sm:$0x33]
      %v1971 = vld [vmem:[%s1957 + $0x5c] sm:$0x33]
      %v1972 = vld [vmem:[%s1957 + $0x64] sm:$0x33]
      %v1973 = vld [vmem:[%s1957 + $0x6c] sm:$0x3]
      %v1990 = vunpack.c.l.b16 %v1958
      %v1991 = vunpack.c.h.b16 %v1958
      %v1992 = vunpack.c.l.b16 %v1959
      %v1993 = vunpack.c.h.b16 %v1959
      %v1994 = vunpack.c.l.b16 %v1960
      %v1995 = vunpack.c.h.b16 %v1960
      %v1996 = vunpack.c.l.b16 %v1961
      %v1997 = vunpack.c.l.b16 %v1962
      %v1998 = vunpack.c.h.b16 %v1962
      %v1999 = vunpack.c.l.b16 %v1963
      %v2000 = vunpack.c.h.b16 %v1963
      %v2001 = vunpack.c.l.b16 %v1964
      %v2002 = vunpack.c.h.b16 %v1964
      %v2003 = vunpack.c.l.b16 %v1965
      %v2004 = vunpack.c.l.b16 %v1966
      %v2005 = vunpack.c.h.b16 %v1966
      %v2006 = vunpack.c.l.b16 %v1967
      %v2007 = vunpack.c.h.b16 %v1967
      %v2008 = vunpack.c.l.b16 %v1968
      %v2009 = vunpack.c.h.b16 %v1968
      %v2010 = vunpack.c.l.b16 %v1969
      %v2011 = vunpack.c.l.b16 %v1970
      %v2012 = vunpack.c.h.b16 %v1970
      %v2013 = vunpack.c.l.b16 %v1971
      %v2014 = vunpack.c.h.b16 %v1971
      %v2015 = vunpack.c.l.b16 %v1972
      %v2016 = vunpack.c.h.b16 %v1972
      %v2017 = vunpack.c.l.b16 %v1973
      %v2018 = vpack.c.b16 %v1997, %v1990
      %v2019 = vpack.c.b16 %v1998, %v1991
      %v2020 = vpack.c.b16 %v1999, %v1992
      %v2021 = vpack.c.b16 %v2000, %v1993
      %v2022 = vpack.c.b16 %v2001, %v1994
      %v2023 = vpack.c.b16 %v2002, %v1995
      %v2024 = vpack.c.b16 %v2003, %v1996
      %v2025 = vpack.c.b16 %v2011, %v2004
      %v2026 = vpack.c.b16 %v2012, %v2005
      %v2027 = vpack.c.b16 %v2013, %v2006
      %v2028 = vpack.c.b16 %v2014, %v2007
      %v2029 = vpack.c.b16 %v2015, %v2008
      %v2030 = vpack.c.b16 %v2016, %v2009
      %v2031 = vpack.c.b16 %v2017, %v2010
      %v2040 = vand.u32 %v2025, %v373
      %v2043 = vand.u32 %v2026, %v373
      %v2046 = vand.u32 %v2027, %v373
      %v2049 = vand.u32 %v2028, %v373
      %v2052 = vand.u32 %v2029, %v373
      %v2055 = vand.u32 %v2030, %v373
      %v2058 = vand.u32 %v2031, %v373
      %2060 = vmatpush.bf16.msra.mxu0 0
      %2061 = vmatpush.bf16.msra.mxu0 0
      %2062 = vmatpush.bf16.msra.mxu0 0
      %2063 = vmatpush.bf16.msra.mxu0 0
      %2064 = vmatpush.bf16.msra.mxu0 0
      %2065 = vmatpush.bf16.msra.mxu0 0
      %2066 = vmatpush.bf16.msra.mxu0 %v2040
      %2067 = vmatpush.bf16.msra.mxu0 %v2018
      %2068 = vmatmul.bf16.gmra.mxu0 %v368
      %v2069 = vpop.f32.mrf.mxu0
      %v2070 = vadd.f32 %v283, %v2069
      %v2071 = vpop.f32.mrf.mxu0
      %2072 = vdwg.mxu0
      %2073 = vmatpush.bf16.msra.mxu0 0
      %2074 = vmatpush.bf16.msra.mxu0 0
      %2075 = vmatpush.bf16.msra.mxu0 0
      %2076 = vmatpush.bf16.msra.mxu0 0
      %2077 = vmatpush.bf16.msra.mxu0 0
      %2078 = vmatpush.bf16.msra.mxu0 0
      %2079 = vmatpush.bf16.msra.mxu0 %v2043
      %2080 = vmatpush.bf16.msra.mxu0 %v2019
      %2081 = vmatmul.bf16.gmra.mxu0 %v368
      %v2082 = vpop.f32.mrf.mxu0
      %v2083 = vadd.f32 %v283, %v2082
      %v2084 = vpop.f32.mrf.mxu0
      %2085 = vdwg.mxu0
      %2086 = vmatpush.bf16.msra.mxu0 0
      %2087 = vmatpush.bf16.msra.mxu0 0
      %2088 = vmatpush.bf16.msra.mxu0 0
      %2089 = vmatpush.bf16.msra.mxu0 0
      %2090 = vmatpush.bf16.msra.mxu0 0
      %2091 = vmatpush.bf16.msra.mxu0 0
      %2092 = vmatpush.bf16.msra.mxu0 %v2046
      %2093 = vmatpush.bf16.msra.mxu0 %v2020
      %2094 = vmatmul.bf16.gmra.mxu0 %v368
      %v2095 = vpop.f32.mrf.mxu0
      %v2096 = vadd.f32 %v283, %v2095
      %v2097 = vpop.f32.mrf.mxu0
      %2098 = vdwg.mxu0
      %2099 = vmatpush.bf16.msra.mxu0 0
      %2100 = vmatpush.bf16.msra.mxu0 0
      %2101 = vmatpush.bf16.msra.mxu0 0
      %2102 = vmatpush.bf16.msra.mxu0 0
      %2103 = vmatpush.bf16.msra.mxu0 0
      %2104 = vmatpush.bf16.msra.mxu0 0
      %2105 = vmatpush.bf16.msra.mxu0 %v2049
      %2106 = vmatpush.bf16.msra.mxu0 %v2021
      %2107 = vmatmul.bf16.gmra.mxu0 %v368
      %v2108 = vpop.f32.mrf.mxu0
      %v2109 = vadd.f32 %v283, %v2108
      %v2110 = vpop.f32.mrf.mxu0
      %2111 = vdwg.mxu0
      %2112 = vmatpush.bf16.msra.mxu0 0
      %2113 = vmatpush.bf16.msra.mxu0 0
      %2114 = vmatpush.bf16.msra.mxu0 0
      %2115 = vmatpush.bf16.msra.mxu0 0
      %2116 = vmatpush.bf16.msra.mxu0 0
      %2117 = vmatpush.bf16.msra.mxu0 0
      %2118 = vmatpush.bf16.msra.mxu0 %v2052
      %2119 = vmatpush.bf16.msra.mxu0 %v2022
      %2120 = vmatmul.bf16.gmra.mxu0 %v368
      %v2121 = vpop.f32.mrf.mxu0
      %v2122 = vadd.f32 %v283, %v2121
      %v2123 = vpop.f32.mrf.mxu0
      %2124 = vdwg.mxu0
      %2125 = vmatpush.bf16.msra.mxu0 0
      %2126 = vmatpush.bf16.msra.mxu0 0
      %2127 = vmatpush.bf16.msra.mxu0 0
      %2128 = vmatpush.bf16.msra.mxu0 0
      %2129 = vmatpush.bf16.msra.mxu0 0
      %2130 = vmatpush.bf16.msra.mxu0 0
      %2131 = vmatpush.bf16.msra.mxu0 %v2055
      %2132 = vmatpush.bf16.msra.mxu0 %v2023
      %2133 = vmatmul.bf16.gmra.mxu0 %v368
      %v2134 = vpop.f32.mrf.mxu0
      %v2135 = vadd.f32 %v283, %v2134
      %v2136 = vpop.f32.mrf.mxu0
      %2137 = vdwg.mxu0
      %2138 = vmatpush.bf16.msra.mxu0 0
      %2139 = vmatpush.bf16.msra.mxu0 0
      %2140 = vmatpush.bf16.msra.mxu0 0
      %2141 = vmatpush.bf16.msra.mxu0 0
      %2142 = vmatpush.bf16.msra.mxu0 0
      %2143 = vmatpush.bf16.msra.mxu0 0
      %2144 = vmatpush.bf16.msra.mxu0 %v2058
      %2145 = vmatpush.bf16.msra.mxu0 %v2024
      %2146 = vmatmul.bf16.gmra.mxu0 %v368
      %v2147 = vpop.f32.mrf.mxu0
      %v2148 = vadd.f32 %v283, %v2147
      %v2149 = vpop.f32.mrf.mxu0
      %2150 = vdwg.mxu0
      %v2151 = vmax.f32 %v2070, 0.0
      %v2152 = vmax.f32 %v2083, 0.0
      %v2153 = vmax.f32 %v2096, 0.0
      %v2154 = vmax.f32 %v2109, 0.0
      %v2155 = vmax.f32 %v2122, 0.0
      %v2156 = vmax.f32 %v2135, 0.0
      %v2157 = vmax.f32 %v2148, 0.0
      %2158 = vst [vmem:[#allocation2 + $0x1c0] sm:$0xff] %v2151
      %2159 = vst [vmem:[#allocation2 + $0x1c8] sm:$0xff] %v2152
      %2160 = vst [vmem:[#allocation2 + $0x1d0] sm:$0xff] %v2153
      %2161 = vst [vmem:[#allocation2 + $0x1d8] sm:$0xff] %v2154
      %2162 = vst [vmem:[#allocation2 + $0x1e0] sm:$0xff] %v2155
      %2163 = vst [vmem:[#allocation2 + $0x1e8] sm:$0xff] %v2156
      %2164 = vst.msk [vmem:[#allocation2 + $0x1f0] sm:$0xff] %vm499, %v2157
      %v2165 = vld [vmem:[%s4] sm:$0xff]
      %v2166 = vld [vmem:[%s4 + $0x8] sm:$0xff]
      %2168 = vset.pattern.permute.xlu0 0
      %2169 = vperm.xlu0 %2168, %v2165
      %v2170 = vpop.permute.xlu0 %2169
      %2173 = vset.pattern.permute.xlu0 0
      %2174 = vperm.xlu0 %2173, %v2166
      %v2175 = vpop.permute.xlu0 %2174
      %v2177 = vld [vmem:[%s3] sm:$0xff]
      %v2178 = vld [vmem:[%s3 + $0x8] sm:$0xff]
      %v2179 = vld [vmem:[#allocation2] sm:$0xff]
      %v2180 = vld [vmem:[#allocation2 + $0x8] sm:$0xff]
      %v2181 = vld [vmem:[#allocation2 + $0x10] sm:$0xff]
      %v2182 = vld [vmem:[#allocation2 + $0x18] sm:$0xff]
      %v2183 = vld [vmem:[#allocation2 + $0x20] sm:$0xff]
      %v2184 = vld [vmem:[#allocation2 + $0x28] sm:$0xff]
      %v2185 = vld [vmem:[#allocation2 + $0x30] sm:$0xff]
      %v2186 = vld [vmem:[#allocation2 + $0x38] sm:$0xff]
      %v2187 = vld [vmem:[#allocation2 + $0x40] sm:$0xff]
      %v2188 = vld [vmem:[#allocation2 + $0x48] sm:$0xff]
      %v2189 = vld [vmem:[#allocation2 + $0x50] sm:$0xff]
      %v2190 = vld [vmem:[#allocation2 + $0x58] sm:$0xff]
      %v2191 = vld [vmem:[#allocation2 + $0x60] sm:$0xff]
      %v2192 = vld [vmem:[#allocation2 + $0x68] sm:$0xff]
      %v2193 = vld [vmem:[#allocation2 + $0x70] sm:$0xff]
      %v2194 = vld [vmem:[#allocation2 + $0x78] sm:$0xff]
      %v2195 = vld [vmem:[#allocation2 + $0x80] sm:$0xff]
      %v2196 = vld [vmem:[#allocation2 + $0x88] sm:$0xff]
      %v2197 = vld [vmem:[#allocation2 + $0x90] sm:$0xff]
      %v2198 = vld [vmem:[#allocation2 + $0x98] sm:$0xff]
      %v2199 = vld [vmem:[#allocation2 + $0xa0] sm:$0xff]
      %v2200 = vld [vmem:[#allocation2 + $0xa8] sm:$0xff]
      %v2201 = vld [vmem:[#allocation2 + $0xb0] sm:$0xff]
      %v2202 = vld [vmem:[#allocation2 + $0xb8] sm:$0xff]
      %v2203 = vld [vmem:[#allocation2 + $0xc0] sm:$0xff]
      %v2204 = vld [vmem:[#allocation2 + $0xc8] sm:$0xff]
      %v2205 = vld [vmem:[#allocation2 + $0xd0] sm:$0xff]
      %v2206 = vld [vmem:[#allocation2 + $0xd8] sm:$0xff]
      %v2207 = vld [vmem:[#allocation2 + $0xe0] sm:$0xff]
      %v2208 = vld [vmem:[#allocation2 + $0xe8] sm:$0xff]
      %v2209 = vld [vmem:[#allocation2 + $0xf0] sm:$0xff]
      %v2210 = vld [vmem:[#allocation2 + $0xf8] sm:$0xff]
      %v2211 = vld [vmem:[#allocation2 + $0x100] sm:$0xff]
      %v2212 = vld [vmem:[#allocation2 + $0x108] sm:$0xff]
      %v2213 = vld [vmem:[#allocation2 + $0x110] sm:$0xff]
      %v2214 = vld [vmem:[#allocation2 + $0x118] sm:$0xff]
      %v2215 = vld [vmem:[#allocation2 + $0x120] sm:$0xff]
      %v2216 = vld [vmem:[#allocation2 + $0x128] sm:$0xff]
      %v2217 = vld [vmem:[#allocation2 + $0x130] sm:$0xff]
      %v2218 = vld [vmem:[#allocation2 + $0x138] sm:$0xff]
      %v2219 = vld [vmem:[#allocation2 + $0x140] sm:$0xff]
      %v2220 = vld [vmem:[#allocation2 + $0x148] sm:$0xff]
      %v2221 = vld [vmem:[#allocation2 + $0x150] sm:$0xff]
      %v2222 = vld [vmem:[#allocation2 + $0x158] sm:$0xff]
      %v2223 = vld [vmem:[#allocation2 + $0x160] sm:$0xff]
      %v2224 = vld [vmem:[#allocation2 + $0x168] sm:$0xff]
      %v2225 = vld [vmem:[#allocation2 + $0x170] sm:$0xff]
      %v2226 = vld [vmem:[#allocation2 + $0x178] sm:$0xff]
      %v2227 = vld [vmem:[#allocation2 + $0x180] sm:$0xff]
      %v2228 = vld [vmem:[#allocation2 + $0x188] sm:$0xff]
      %v2229 = vld [vmem:[#allocation2 + $0x190] sm:$0xff]
      %v2230 = vld [vmem:[#allocation2 + $0x198] sm:$0xff]
      %v2231 = vld [vmem:[#allocation2 + $0x1a0] sm:$0xff]
      %v2232 = vld [vmem:[#allocation2 + $0x1a8] sm:$0xff]
      %v2233 = vld [vmem:[#allocation2 + $0x1b0] sm:$0xff]
      %v2234 = vld [vmem:[#allocation2 + $0x1b8] sm:$0xff]
      %v2235 = vld [vmem:[#allocation2 + $0x1c0] sm:$0xff]
      %v2236 = vld [vmem:[#allocation2 + $0x1c8] sm:$0xff]
      %v2237 = vld [vmem:[#allocation2 + $0x1d0] sm:$0xff]
      %v2238 = vld [vmem:[#allocation2 + $0x1d8] sm:$0xff]
      %v2239 = vld [vmem:[#allocation2 + $0x1e0] sm:$0xff]
      %v2240 = vld [vmem:[#allocation2 + $0x1e8] sm:$0xff]
      %v2241 = vld [vmem:[#allocation2 + $0x1f0] sm:$0xff]
      %vm2242 = vcmask 588800
      %v2244 = vsel %vm2242, %v2177, 0
      %v2247 = vsel %vm2242, %v2178, 0
      %2249 = vmatpush.msra.mxu0 0.0
      %2250 = vmatpush.msra.mxu0 0.0
      %2251 = vmatpush.msra.mxu0 0.0
      %2252 = vmatpush.msra.mxu0 0.0
      %2253 = vmatpush.msra.mxu0 0.0
      %2254 = vmatpush.msra.mxu0 0.0
      %2255 = vmatpush.msra.mxu0 0.0
      %2256 = vmatpush.msra.mxu0 %v2235
      %2257 = vmatpush.msra.mxu0 %v2228
      %2258 = vmatpush.msra.mxu0 %v2221
      %2259 = vmatpush.msra.mxu0 %v2214
      %2260 = vmatpush.msra.mxu0 %v2207
      %2261 = vmatpush.msra.mxu0 %v2200
      %2262 = vmatpush.msra.mxu0 %v2193
      %2263 = vmatpush.msra.mxu0 %v2186
      %2264 = vmatpush.msra.mxu0 %v2179
      %2265 = vmatmul.f32.gmra.mxu0 %v2244
      %v2266 = vpop.f32.mrf.mxu0
      %v2267 = vadd.f32 %v2170, %v2266
      %2268 = vmatmul.f32.gmra.mxu0 %v2247
      %v2269 = vpop.f32.mrf.mxu0
      %v2270 = vadd.f32 %v2175, %v2269
      %2271 = vdwg.mxu0
      %2272 = vmatpush.msra.mxu0 0.0
      %2273 = vmatpush.msra.mxu0 0.0
      %2274 = vmatpush.msra.mxu0 0.0
      %2275 = vmatpush.msra.mxu0 0.0
      %2276 = vmatpush.msra.mxu0 0.0
      %2277 = vmatpush.msra.mxu0 0.0
      %2278 = vmatpush.msra.mxu0 0.0
      %2279 = vmatpush.msra.mxu0 %v2236
      %2280 = vmatpush.msra.mxu0 %v2229
      %2281 = vmatpush.msra.mxu0 %v2222
      %2282 = vmatpush.msra.mxu0 %v2215
      %2283 = vmatpush.msra.mxu0 %v2208
      %2284 = vmatpush.msra.mxu0 %v2201
      %2285 = vmatpush.msra.mxu0 %v2194
      %2286 = vmatpush.msra.mxu0 %v2187
      %2287 = vmatpush.msra.mxu0 %v2180
      %2288 = vmatmul.f32.gmra.mxu0 %v2244
      %v2289 = vpop.f32.mrf.mxu0
      %v2290 = vadd.f32 %v2170, %v2289
      %2291 = vmatmul.f32.gmra.mxu0 %v2247
      %v2292 = vpop.f32.mrf.mxu0
      %v2293 = vadd.f32 %v2175, %v2292
      %2294 = vdwg.mxu0
      %2295 = vmatpush.msra.mxu0 0.0
      %2296 = vmatpush.msra.mxu0 0.0
      %2297 = vmatpush.msra.mxu0 0.0
      %2298 = vmatpush.msra.mxu0 0.0
      %2299 = vmatpush.msra.mxu0 0.0
      %2300 = vmatpush.msra.mxu0 0.0
      %2301 = vmatpush.msra.mxu0 0.0
      %2302 = vmatpush.msra.mxu0 %v2237
      %2303 = vmatpush.msra.mxu0 %v2230
      %2304 = vmatpush.msra.mxu0 %v2223
      %2305 = vmatpush.msra.mxu0 %v2216
      %2306 = vmatpush.msra.mxu0 %v2209
      %2307 = vmatpush.msra.mxu0 %v2202
      %2308 = vmatpush.msra.mxu0 %v2195
      %2309 = vmatpush.msra.mxu0 %v2188
      %2310 = vmatpush.msra.mxu0 %v2181
      %2311 = vmatmul.f32.gmra.mxu0 %v2244
      %v2312 = vpop.f32.mrf.mxu0
      %v2313 = vadd.f32 %v2170, %v2312
      %2314 = vmatmul.f32.gmra.mxu0 %v2247
      %v2315 = vpop.f32.mrf.mxu0
      %v2316 = vadd.f32 %v2175, %v2315
      %2317 = vdwg.mxu0
      %2318 = vmatpush.msra.mxu0 0.0
      %2319 = vmatpush.msra.mxu0 0.0
      %2320 = vmatpush.msra.mxu0 0.0
      %2321 = vmatpush.msra.mxu0 0.0
      %2322 = vmatpush.msra.mxu0 0.0
      %2323 = vmatpush.msra.mxu0 0.0
      %2324 = vmatpush.msra.mxu0 0.0
      %2325 = vmatpush.msra.mxu0 %v2238
      %2326 = vmatpush.msra.mxu0 %v2231
      %2327 = vmatpush.msra.mxu0 %v2224
      %2328 = vmatpush.msra.mxu0 %v2217
      %2329 = vmatpush.msra.mxu0 %v2210
      %2330 = vmatpush.msra.mxu0 %v2203
      %2331 = vmatpush.msra.mxu0 %v2196
      %2332 = vmatpush.msra.mxu0 %v2189
      %2333 = vmatpush.msra.mxu0 %v2182
      %2334 = vmatmul.f32.gmra.mxu0 %v2244
      %v2335 = vpop.f32.mrf.mxu0
      %v2336 = vadd.f32 %v2170, %v2335
      %2337 = vmatmul.f32.gmra.mxu0 %v2247
      %v2338 = vpop.f32.mrf.mxu0
      %v2339 = vadd.f32 %v2175, %v2338
      %2340 = vdwg.mxu0
      %2341 = vmatpush.msra.mxu0 0.0
      %2342 = vmatpush.msra.mxu0 0.0
      %2343 = vmatpush.msra.mxu0 0.0
      %2344 = vmatpush.msra.mxu0 0.0
      %2345 = vmatpush.msra.mxu0 0.0
      %2346 = vmatpush.msra.mxu0 0.0
      %2347 = vmatpush.msra.mxu0 0.0
      %2348 = vmatpush.msra.mxu0 %v2239
      %2349 = vmatpush.msra.mxu0 %v2232
      %2350 = vmatpush.msra.mxu0 %v2225
      %2351 = vmatpush.msra.mxu0 %v2218
      %2352 = vmatpush.msra.mxu0 %v2211
      %2353 = vmatpush.msra.mxu0 %v2204
      %2354 = vmatpush.msra.mxu0 %v2197
      %2355 = vmatpush.msra.mxu0 %v2190
      %2356 = vmatpush.msra.mxu0 %v2183
      %2357 = vmatmul.f32.gmra.mxu0 %v2244
      %v2358 = vpop.f32.mrf.mxu0
      %v2359 = vadd.f32 %v2170, %v2358
      %2360 = vmatmul.f32.gmra.mxu0 %v2247
      %v2361 = vpop.f32.mrf.mxu0
      %v2362 = vadd.f32 %v2175, %v2361
      %2363 = vdwg.mxu0
      %2364 = vmatpush.msra.mxu0 0.0
      %2365 = vmatpush.msra.mxu0 0.0
      %2366 = vmatpush.msra.mxu0 0.0
      %2367 = vmatpush.msra.mxu0 0.0
      %2368 = vmatpush.msra.mxu0 0.0
      %2369 = vmatpush.msra.mxu0 0.0
      %2370 = vmatpush.msra.mxu0 0.0
      %2371 = vmatpush.msra.mxu0 %v2240
      %2372 = vmatpush.msra.mxu0 %v2233
      %2373 = vmatpush.msra.mxu0 %v2226
      %2374 = vmatpush.msra.mxu0 %v2219
      %2375 = vmatpush.msra.mxu0 %v2212
      %2376 = vmatpush.msra.mxu0 %v2205
      %2377 = vmatpush.msra.mxu0 %v2198
      %2378 = vmatpush.msra.mxu0 %v2191
      %2379 = vmatpush.msra.mxu0 %v2184
      %2380 = vmatmul.f32.gmra.mxu0 %v2244
      %v2381 = vpop.f32.mrf.mxu0
      %v2382 = vadd.f32 %v2170, %v2381
      %2383 = vmatmul.f32.gmra.mxu0 %v2247
      %v2384 = vpop.f32.mrf.mxu0
      %v2385 = vadd.f32 %v2175, %v2384
      %2386 = vdwg.mxu0
      %2387 = vmatpush.msra.mxu0 0.0
      %2388 = vmatpush.msra.mxu0 0.0
      %2389 = vmatpush.msra.mxu0 0.0
      %2390 = vmatpush.msra.mxu0 0.0
      %2391 = vmatpush.msra.mxu0 0.0
      %2392 = vmatpush.msra.mxu0 0.0
      %2393 = vmatpush.msra.mxu0 0.0
      %2394 = vmatpush.msra.mxu0 %v2241
      %2395 = vmatpush.msra.mxu0 %v2234
      %2396 = vmatpush.msra.mxu0 %v2227
      %2397 = vmatpush.msra.mxu0 %v2220
      %2398 = vmatpush.msra.mxu0 %v2213
      %2399 = vmatpush.msra.mxu0 %v2206
      %2400 = vmatpush.msra.mxu0 %v2199
      %2401 = vmatpush.msra.mxu0 %v2192
      %2402 = vmatpush.msra.mxu0 %v2185
      %2403 = vmatmul.f32.gmra.mxu0 %v2244
      %v2404 = vpop.f32.mrf.mxu0
      %v2405 = vadd.f32 %v2170, %v2404
      %2406 = vmatmul.f32.gmra.mxu0 %v2247
      %v2407 = vpop.f32.mrf.mxu0
      %v2408 = vadd.f32 %v2175, %v2407
      %2409 = vdwg.mxu0
      %v2410 = vmax.f32 %v2267, 0.0
      %v2411 = vmax.f32 %v2290, 0.0
      %v2412 = vmax.f32 %v2313, 0.0
      %v2413 = vmax.f32 %v2336, 0.0
      %v2414 = vmax.f32 %v2359, 0.0
      %v2415 = vmax.f32 %v2382, 0.0
      %v2416 = vmax.f32 %v2405, 0.0
      %v2417 = vmax.f32 %v2270, 0.0
      %v2418 = vmax.f32 %v2293, 0.0
      %v2419 = vmax.f32 %v2316, 0.0
      %v2420 = vmax.f32 %v2339, 0.0
      %v2421 = vmax.f32 %v2362, 0.0
      %v2422 = vmax.f32 %v2385, 0.0
      %v2423 = vmax.f32 %v2408, 0.0
      %v2424 = vld [vmem:[%s5] sm:$0x1f]
      %v2425 = vld [vmem:[%s5 + $0x8] sm:$0x1f]
      %v2426 = vld [vmem:[%s5 + $0x10] sm:$0x1f]
      %v2427 = vld [vmem:[%s5 + $0x18] sm:$0x1f]
      %v2428 = vld [vmem:[%s5 + $0x20] sm:$0x1f]
      %v2429 = vld [vmem:[%s5 + $0x28] sm:$0x1f]
      %v2430 = vld [vmem:[%s5 + $0x30] sm:$0x1f]
      %v2431 = vperm.slane %v2410, 0
      %v2432 = vperm.slane %v2411, 0
      %v2433 = vperm.slane %v2412, 0
      %v2434 = vperm.slane %v2413, 0
      %v2435 = vperm.slane %v2414, 0
      %v2436 = vperm.slane %v2415, 0
      %v2437 = vperm.slane %v2416, 0
      %v2438 = vmul.f32 %v2424, %v2431
      %v2439 = vmul.f32 %v2425, %v2432
      %v2440 = vmul.f32 %v2426, %v2433
      %v2441 = vmul.f32 %v2427, %v2434
      %v2442 = vmul.f32 %v2428, %v2435
      %v2443 = vmul.f32 %v2429, %v2436
      %v2444 = vmul.f32 %v2430, %v2437
      %v2445 = vsel %vm370, %v2438, 0.0
      %v2446 = vsel %vm370, %v2439, 0.0
      %v2447 = vadd.f32 %v2445, %v2446
      %v2448 = vsel %vm370, %v2440, 0.0
      %v2449 = vadd.f32 %v2447, %v2448
      %v2450 = vsel %vm370, %v2441, 0.0
      %v2451 = vadd.f32 %v2449, %v2450
      %v2452 = vsel %vm370, %v2442, 0.0
      %v2453 = vadd.f32 %v2451, %v2452
      %v2454 = vsel %vm370, %v2443, 0.0
      %v2455 = vadd.f32 %v2453, %v2454
      %vm2456 = vcmask 126976
      %v2457 = vsel %vm2456, %v2444, 0.0
      %v2458 = vadd.f32 %v2455, %v2457
      %2459 = vadd.xlane.f32.xlu0 %v2458
      %v2460 = vpop.xlane.xlu0 %2459
      %v2461 = vadd.f32 %v2460, 0.0
      %s2462 = scalar_lea.vmem %s5, 56
      %v2463 = vld [vmem:[%s2462] sm:$0x1f]
      %v2464 = vld [vmem:[%s2462 + $0x8] sm:$0x1f]
      %v2465 = vld [vmem:[%s2462 + $0x10] sm:$0x1f]
      %v2466 = vld [vmem:[%s2462 + $0x18] sm:$0x1f]
      %v2467 = vld [vmem:[%s2462 + $0x20] sm:$0x1f]
      %v2468 = vld [vmem:[%s2462 + $0x28] sm:$0x1f]
      %v2469 = vld [vmem:[%s2462 + $0x30] sm:$0x1f]
      %v2470 = vperm.slane %v2410, 1
      %v2471 = vperm.slane %v2411, 1
      %v2472 = vperm.slane %v2412, 1
      %v2473 = vperm.slane %v2413, 1
      %v2474 = vperm.slane %v2414, 1
      %v2475 = vperm.slane %v2415, 1
      %v2476 = vperm.slane %v2416, 1
      %v2477 = vmul.f32 %v2463, %v2470
      %v2478 = vmul.f32 %v2464, %v2471
      %v2479 = vmul.f32 %v2465, %v2472
      %v2480 = vmul.f32 %v2466, %v2473
      %v2481 = vmul.f32 %v2467, %v2474
      %v2482 = vmul.f32 %v2468, %v2475
      %v2483 = vmul.f32 %v2469, %v2476
      %v2484 = vsel %vm370, %v2477, 0.0
      %v2485 = vsel %vm370, %v2478, 0.0
      %v2486 = vadd.f32 %v2484, %v2485
      %v2487 = vsel %vm370, %v2479, 0.0
      %v2488 = vadd.f32 %v2486, %v2487
      %v2489 = vsel %vm370, %v2480, 0.0
      %v2490 = vadd.f32 %v2488, %v2489
      %v2491 = vsel %vm370, %v2481, 0.0
      %v2492 = vadd.f32 %v2490, %v2491
      %v2493 = vsel %vm370, %v2482, 0.0
      %v2494 = vadd.f32 %v2492, %v2493
      %v2495 = vsel %vm2456, %v2483, 0.0
      %v2496 = vadd.f32 %v2494, %v2495
      %2497 = vadd.xlane.f32.xlu0 %v2496
      %v2498 = vpop.xlane.xlu0 %2497
      %v2499 = vadd.f32 %v2461, %v2498
      %s2500 = scalar_lea.vmem %s5, 112
      %v2501 = vld [vmem:[%s2500] sm:$0x1f]
      %v2502 = vld [vmem:[%s2500 + $0x8] sm:$0x1f]
      %v2503 = vld [vmem:[%s2500 + $0x10] sm:$0x1f]
      %v2504 = vld [vmem:[%s2500 + $0x18] sm:$0x1f]
      %v2505 = vld [vmem:[%s2500 + $0x20] sm:$0x1f]
      %v2506 = vld [vmem:[%s2500 + $0x28] sm:$0x1f]
      %v2507 = vld [vmem:[%s2500 + $0x30] sm:$0x1f]
      %v2508 = vperm.slane %v2410, 2
      %v2509 = vperm.slane %v2411, 2
      %v2510 = vperm.slane %v2412, 2
      %v2511 = vperm.slane %v2413, 2
      %v2512 = vperm.slane %v2414, 2
      %v2513 = vperm.slane %v2415, 2
      %v2514 = vperm.slane %v2416, 2
      %v2515 = vmul.f32 %v2501, %v2508
      %v2516 = vmul.f32 %v2502, %v2509
      %v2517 = vmul.f32 %v2503, %v2510
      %v2518 = vmul.f32 %v2504, %v2511
      %v2519 = vmul.f32 %v2505, %v2512
      %v2520 = vmul.f32 %v2506, %v2513
      %v2521 = vmul.f32 %v2507, %v2514
      %v2522 = vsel %vm370, %v2515, 0.0
      %v2523 = vsel %vm370, %v2516, 0.0
      %v2524 = vadd.f32 %v2522, %v2523
      %v2525 = vsel %vm370, %v2517, 0.0
      %v2526 = vadd.f32 %v2524, %v2525
      %v2527 = vsel %vm370, %v2518, 0.0
      %v2528 = vadd.f32 %v2526, %v2527
      %v2529 = vsel %vm370, %v2519, 0.0
      %v2530 = vadd.f32 %v2528, %v2529
      %v2531 = vsel %vm370, %v2520, 0.0
      %v2532 = vadd.f32 %v2530, %v2531
      %v2533 = vsel %vm2456, %v2521, 0.0
      %v2534 = vadd.f32 %v2532, %v2533
      %2535 = vadd.xlane.f32.xlu0 %v2534
      %v2536 = vpop.xlane.xlu0 %2535
      %v2537 = vadd.f32 %v2499, %v2536
      %s2538 = scalar_lea.vmem %s5, 168
      %v2539 = vld [vmem:[%s2538] sm:$0x1f]
      %v2540 = vld [vmem:[%s2538 + $0x8] sm:$0x1f]
      %v2541 = vld [vmem:[%s2538 + $0x10] sm:$0x1f]
      %v2542 = vld [vmem:[%s2538 + $0x18] sm:$0x1f]
      %v2543 = vld [vmem:[%s2538 + $0x20] sm:$0x1f]
      %v2544 = vld [vmem:[%s2538 + $0x28] sm:$0x1f]
      %v2545 = vld [vmem:[%s2538 + $0x30] sm:$0x1f]
      %v2546 = vperm.slane %v2410, 3
      %v2547 = vperm.slane %v2411, 3
      %v2548 = vperm.slane %v2412, 3
      %v2549 = vperm.slane %v2413, 3
      %v2550 = vperm.slane %v2414, 3
      %v2551 = vperm.slane %v2415, 3
      %v2552 = vperm.slane %v2416, 3
      %v2553 = vmul.f32 %v2539, %v2546
      %v2554 = vmul.f32 %v2540, %v2547
      %v2555 = vmul.f32 %v2541, %v2548
      %v2556 = vmul.f32 %v2542, %v2549
      %v2557 = vmul.f32 %v2543, %v2550
      %v2558 = vmul.f32 %v2544, %v2551
      %v2559 = vmul.f32 %v2545, %v2552
      %v2560 = vsel %vm370, %v2553, 0.0
      %v2561 = vsel %vm370, %v2554, 0.0
      %v2562 = vadd.f32 %v2560, %v2561
      %v2563 = vsel %vm370, %v2555, 0.0
      %v2564 = vadd.f32 %v2562, %v2563
      %v2565 = vsel %vm370, %v2556, 0.0
      %v2566 = vadd.f32 %v2564, %v2565
      %v2567 = vsel %vm370, %v2557, 0.0
      %v2568 = vadd.f32 %v2566, %v2567
      %v2569 = vsel %vm370, %v2558, 0.0
      %v2570 = vadd.f32 %v2568, %v2569
      %v2571 = vsel %vm2456, %v2559, 0.0
      %v2572 = vadd.f32 %v2570, %v2571
      %2573 = vadd.xlane.f32.xlu0 %v2572
      %v2574 = vpop.xlane.xlu0 %2573
      %v2575 = vadd.f32 %v2537, %v2574
      %s2576 = scalar_lea.vmem %s5, 224
      %v2577 = vld [vmem:[%s2576] sm:$0x1f]
      %v2578 = vld [vmem:[%s2576 + $0x8] sm:$0x1f]
      %v2579 = vld [vmem:[%s2576 + $0x10] sm:$0x1f]
      %v2580 = vld [vmem:[%s2576 + $0x18] sm:$0x1f]
      %v2581 = vld [vmem:[%s2576 + $0x20] sm:$0x1f]
      %v2582 = vld [vmem:[%s2576 + $0x28] sm:$0x1f]
      %v2583 = vld [vmem:[%s2576 + $0x30] sm:$0x1f]
      %v2584 = vperm.slane %v2410, 4
      %v2585 = vperm.slane %v2411, 4
      %v2586 = vperm.slane %v2412, 4
      %v2587 = vperm.slane %v2413, 4
      %v2588 = vperm.slane %v2414, 4
      %v2589 = vperm.slane %v2415, 4
      %v2590 = vperm.slane %v2416, 4
      %v2591 = vmul.f32 %v2577, %v2584
      %v2592 = vmul.f32 %v2578, %v2585
      %v2593 = vmul.f32 %v2579, %v2586
      %v2594 = vmul.f32 %v2580, %v2587
      %v2595 = vmul.f32 %v2581, %v2588
      %v2596 = vmul.f32 %v2582, %v2589
      %v2597 = vmul.f32 %v2583, %v2590
      %v2598 = vsel %vm370, %v2591, 0.0
      %v2599 = vsel %vm370, %v2592, 0.0
      %v2600 = vadd.f32 %v2598, %v2599
      %v2601 = vsel %vm370, %v2593, 0.0
      %v2602 = vadd.f32 %v2600, %v2601
      %v2603 = vsel %vm370, %v2594, 0.0
      %v2604 = vadd.f32 %v2602, %v2603
      %v2605 = vsel %vm370, %v2595, 0.0
      %v2606 = vadd.f32 %v2604, %v2605
      %v2607 = vsel %vm370, %v2596, 0.0
      %v2608 = vadd.f32 %v2606, %v2607
      %v2609 = vsel %vm2456, %v2597, 0.0
      %v2610 = vadd.f32 %v2608, %v2609
      %2611 = vadd.xlane.f32.xlu0 %v2610
      %v2612 = vpop.xlane.xlu0 %2611
      %v2613 = vadd.f32 %v2575, %v2612
      %s2614 = scalar_lea.vmem %s5, 280
      %v2615 = vld [vmem:[%s2614] sm:$0x1f]
      %v2616 = vld [vmem:[%s2614 + $0x8] sm:$0x1f]
      %v2617 = vld [vmem:[%s2614 + $0x10] sm:$0x1f]
      %v2618 = vld [vmem:[%s2614 + $0x18] sm:$0x1f]
      %v2619 = vld [vmem:[%s2614 + $0x20] sm:$0x1f]
      %v2620 = vld [vmem:[%s2614 + $0x28] sm:$0x1f]
      %v2621 = vld [vmem:[%s2614 + $0x30] sm:$0x1f]
      %v2622 = vperm.slane %v2410, 5
      %v2623 = vperm.slane %v2411, 5
      %v2624 = vperm.slane %v2412, 5
      %v2625 = vperm.slane %v2413, 5
      %v2626 = vperm.slane %v2414, 5
      %v2627 = vperm.slane %v2415, 5
      %v2628 = vperm.slane %v2416, 5
      %v2629 = vmul.f32 %v2615, %v2622
      %v2630 = vmul.f32 %v2616, %v2623
      %v2631 = vmul.f32 %v2617, %v2624
      %v2632 = vmul.f32 %v2618, %v2625
      %v2633 = vmul.f32 %v2619, %v2626
      %v2634 = vmul.f32 %v2620, %v2627
      %v2635 = vmul.f32 %v2621, %v2628
      %v2636 = vsel %vm370, %v2629, 0.0
      %v2637 = vsel %vm370, %v2630, 0.0
      %v2638 = vadd.f32 %v2636, %v2637
      %v2639 = vsel %vm370, %v2631, 0.0
      %v2640 = vadd.f32 %v2638, %v2639
      %v2641 = vsel %vm370, %v2632, 0.0
      %v2642 = vadd.f32 %v2640, %v2641
      %v2643 = vsel %vm370, %v2633, 0.0
      %v2644 = vadd.f32 %v2642, %v2643
      %v2645 = vsel %vm370, %v2634, 0.0
      %v2646 = vadd.f32 %v2644, %v2645
      %v2647 = vsel %vm2456, %v2635, 0.0
      %v2648 = vadd.f32 %v2646, %v2647
      %2649 = vadd.xlane.f32.xlu0 %v2648
      %v2650 = vpop.xlane.xlu0 %2649
      %v2651 = vadd.f32 %v2613, %v2650
      %s2652 = scalar_lea.vmem %s5, 336
      %v2653 = vld [vmem:[%s2652] sm:$0x1f]
      %v2654 = vld [vmem:[%s2652 + $0x8] sm:$0x1f]
      %v2655 = vld [vmem:[%s2652 + $0x10] sm:$0x1f]
      %v2656 = vld [vmem:[%s2652 + $0x18] sm:$0x1f]
      %v2657 = vld [vmem:[%s2652 + $0x20] sm:$0x1f]
      %v2658 = vld [vmem:[%s2652 + $0x28] sm:$0x1f]
      %v2659 = vld [vmem:[%s2652 + $0x30] sm:$0x1f]
      %v2660 = vperm.slane %v2410, 6
      %v2661 = vperm.slane %v2411, 6
      %v2662 = vperm.slane %v2412, 6
      %v2663 = vperm.slane %v2413, 6
      %v2664 = vperm.slane %v2414, 6
      %v2665 = vperm.slane %v2415, 6
      %v2666 = vperm.slane %v2416, 6
      %v2667 = vmul.f32 %v2653, %v2660
      %v2668 = vmul.f32 %v2654, %v2661
      %v2669 = vmul.f32 %v2655, %v2662
      %v2670 = vmul.f32 %v2656, %v2663
      %v2671 = vmul.f32 %v2657, %v2664
      %v2672 = vmul.f32 %v2658, %v2665
      %v2673 = vmul.f32 %v2659, %v2666
      %v2674 = vsel %vm370, %v2667, 0.0
      %v2675 = vsel %vm370, %v2668, 0.0
      %v2676 = vadd.f32 %v2674, %v2675
      %v2677 = vsel %vm370, %v2669, 0.0
      %v2678 = vadd.f32 %v2676, %v2677
      %v2679 = vsel %vm370, %v2670, 0.0
      %v2680 = vadd.f32 %v2678, %v2679
      %v2681 = vsel %vm370, %v2671, 0.0
      %v2682 = vadd.f32 %v2680, %v2681
      %v2683 = vsel %vm370, %v2672, 0.0
      %v2684 = vadd.f32 %v2682, %v2683
      %v2685 = vsel %vm2456, %v2673, 0.0
      %v2686 = vadd.f32 %v2684, %v2685
      %2687 = vadd.xlane.f32.xlu0 %v2686
      %v2688 = vpop.xlane.xlu0 %2687
      %v2689 = vadd.f32 %v2651, %v2688
      %s2690 = scalar_lea.vmem %s5, 392
      %v2691 = vld [vmem:[%s2690] sm:$0x1f]
      %v2692 = vld [vmem:[%s2690 + $0x8] sm:$0x1f]
      %v2693 = vld [vmem:[%s2690 + $0x10] sm:$0x1f]
      %v2694 = vld [vmem:[%s2690 + $0x18] sm:$0x1f]
      %v2695 = vld [vmem:[%s2690 + $0x20] sm:$0x1f]
      %v2696 = vld [vmem:[%s2690 + $0x28] sm:$0x1f]
      %v2697 = vld [vmem:[%s2690 + $0x30] sm:$0x1f]
      %v2698 = vperm.slane %v2410, 7
      %v2699 = vperm.slane %v2411, 7
      %v2700 = vperm.slane %v2412, 7
      %v2701 = vperm.slane %v2413, 7
      %v2702 = vperm.slane %v2414, 7
      %v2703 = vperm.slane %v2415, 7
      %v2704 = vperm.slane %v2416, 7
      %v2705 = vmul.f32 %v2691, %v2698
      %v2706 = vmul.f32 %v2692, %v2699
      %v2707 = vmul.f32 %v2693, %v2700
      %v2708 = vmul.f32 %v2694, %v2701
      %v2709 = vmul.f32 %v2695, %v2702
      %v2710 = vmul.f32 %v2696, %v2703
      %v2711 = vmul.f32 %v2697, %v2704
      %v2712 = vsel %vm370, %v2705, 0.0
      %v2713 = vsel %vm370, %v2706, 0.0
      %v2714 = vadd.f32 %v2712, %v2713
      %v2715 = vsel %vm370, %v2707, 0.0
      %v2716 = vadd.f32 %v2714, %v2715
      %v2717 = vsel %vm370, %v2708, 0.0
      %v2718 = vadd.f32 %v2716, %v2717
      %v2719 = vsel %vm370, %v2709, 0.0
      %v2720 = vadd.f32 %v2718, %v2719
      %v2721 = vsel %vm370, %v2710, 0.0
      %v2722 = vadd.f32 %v2720, %v2721
      %v2723 = vsel %vm2456, %v2711, 0.0
      %v2724 = vadd.f32 %v2722, %v2723
      %2725 = vadd.xlane.f32.xlu0 %v2724
      %v2726 = vpop.xlane.xlu0 %2725
      %v2727 = vadd.f32 %v2689, %v2726
      %s2728 = scalar_lea.vmem %s5, 448
      %v2729 = vld [vmem:[%s2728] sm:$0x1f]
      %v2730 = vld [vmem:[%s2728 + $0x8] sm:$0x1f]
      %v2731 = vld [vmem:[%s2728 + $0x10] sm:$0x1f]
      %v2732 = vld [vmem:[%s2728 + $0x18] sm:$0x1f]
      %v2733 = vld [vmem:[%s2728 + $0x20] sm:$0x1f]
      %v2734 = vld [vmem:[%s2728 + $0x28] sm:$0x1f]
      %v2735 = vld [vmem:[%s2728 + $0x30] sm:$0x1f]
      %v2736 = vperm.slane %v2417, 0
      %v2737 = vperm.slane %v2418, 0
      %v2738 = vperm.slane %v2419, 0
      %v2739 = vperm.slane %v2420, 0
      %v2740 = vperm.slane %v2421, 0
      %v2741 = vperm.slane %v2422, 0
      %v2742 = vperm.slane %v2423, 0
      %v2743 = vmul.f32 %v2729, %v2736
      %v2744 = vmul.f32 %v2730, %v2737
      %v2745 = vmul.f32 %v2731, %v2738
      %v2746 = vmul.f32 %v2732, %v2739
      %v2747 = vmul.f32 %v2733, %v2740
      %v2748 = vmul.f32 %v2734, %v2741
      %v2749 = vmul.f32 %v2735, %v2742
      %v2750 = vsel %vm370, %v2743, 0.0
      %v2751 = vsel %vm370, %v2744, 0.0
      %v2752 = vadd.f32 %v2750, %v2751
      %v2753 = vsel %vm370, %v2745, 0.0
      %v2754 = vadd.f32 %v2752, %v2753
      %v2755 = vsel %vm370, %v2746, 0.0
      %v2756 = vadd.f32 %v2754, %v2755
      %v2757 = vsel %vm370, %v2747, 0.0
      %v2758 = vadd.f32 %v2756, %v2757
      %v2759 = vsel %vm370, %v2748, 0.0
      %v2760 = vadd.f32 %v2758, %v2759
      %v2761 = vsel %vm2456, %v2749, 0.0
      %v2762 = vadd.f32 %v2760, %v2761
      %2763 = vadd.xlane.f32.xlu0 %v2762
      %v2764 = vpop.xlane.xlu0 %2763
      %v2765 = vadd.f32 %v2727, %v2764
      %s2766 = scalar_lea.vmem %s5, 504
      %v2767 = vld [vmem:[%s2766] sm:$0x1f]
      %v2768 = vld [vmem:[%s2766 + $0x8] sm:$0x1f]
      %v2769 = vld [vmem:[%s2766 + $0x10] sm:$0x1f]
      %v2770 = vld [vmem:[%s2766 + $0x18] sm:$0x1f]
      %v2771 = vld [vmem:[%s2766 + $0x20] sm:$0x1f]
      %v2772 = vld [vmem:[%s2766 + $0x28] sm:$0x1f]
      %v2773 = vld [vmem:[%s2766 + $0x30] sm:$0x1f]
      %v2774 = vperm.slane %v2417, 1
      %v2775 = vperm.slane %v2418, 1
      %v2776 = vperm.slane %v2419, 1
      %v2777 = vperm.slane %v2420, 1
      %v2778 = vperm.slane %v2421, 1
      %v2779 = vperm.slane %v2422, 1
      %v2780 = vperm.slane %v2423, 1
      %v2781 = vmul.f32 %v2767, %v2774
      %v2782 = vmul.f32 %v2768, %v2775
      %v2783 = vmul.f32 %v2769, %v2776
      %v2784 = vmul.f32 %v2770, %v2777
      %v2785 = vmul.f32 %v2771, %v2778
      %v2786 = vmul.f32 %v2772, %v2779
      %v2787 = vmul.f32 %v2773, %v2780
      %v2788 = vsel %vm370, %v2781, 0.0
      %v2789 = vsel %vm370, %v2782, 0.0
      %v2790 = vadd.f32 %v2788, %v2789
      %v2791 = vsel %vm370, %v2783, 0.0
      %v2792 = vadd.f32 %v2790, %v2791
      %v2793 = vsel %vm370, %v2784, 0.0
      %v2794 = vadd.f32 %v2792, %v2793
      %v2795 = vsel %vm370, %v2785, 0.0
      %v2796 = vadd.f32 %v2794, %v2795
      %v2797 = vsel %vm370, %v2786, 0.0
      %v2798 = vadd.f32 %v2796, %v2797
      %v2799 = vsel %vm2456, %v2787, 0.0
      %v2800 = vadd.f32 %v2798, %v2799
      %2801 = vadd.xlane.f32.xlu0 %v2800
      %v2802 = vpop.xlane.xlu0 %2801
      %v2803 = vadd.f32 %v2765, %v2802
      %s2804 = scalar_lea.vmem %s5, 560
      %v2805 = vld [vmem:[%s2804] sm:$0x1f]
      %v2806 = vld [vmem:[%s2804 + $0x8] sm:$0x1f]
      %v2807 = vld [vmem:[%s2804 + $0x10] sm:$0x1f]
      %v2808 = vld [vmem:[%s2804 + $0x18] sm:$0x1f]
      %v2809 = vld [vmem:[%s2804 + $0x20] sm:$0x1f]
      %v2810 = vld [vmem:[%s2804 + $0x28] sm:$0x1f]
      %v2811 = vld [vmem:[%s2804 + $0x30] sm:$0x1f]
      %v2812 = vperm.slane %v2417, 2
      %v2813 = vperm.slane %v2418, 2
      %v2814 = vperm.slane %v2419, 2
      %v2815 = vperm.slane %v2420, 2
      %v2816 = vperm.slane %v2421, 2
      %v2817 = vperm.slane %v2422, 2
      %v2818 = vperm.slane %v2423, 2
      %v2819 = vmul.f32 %v2805, %v2812
      %v2820 = vmul.f32 %v2806, %v2813
      %v2821 = vmul.f32 %v2807, %v2814
      %v2822 = vmul.f32 %v2808, %v2815
      %v2823 = vmul.f32 %v2809, %v2816
      %v2824 = vmul.f32 %v2810, %v2817
      %v2825 = vmul.f32 %v2811, %v2818
      %v2826 = vsel %vm370, %v2819, 0.0
      %v2827 = vsel %vm370, %v2820, 0.0
      %v2828 = vadd.f32 %v2826, %v2827
      %v2829 = vsel %vm370, %v2821, 0.0
      %v2830 = vadd.f32 %v2828, %v2829
      %v2831 = vsel %vm370, %v2822, 0.0
      %v2832 = vadd.f32 %v2830, %v2831
      %v2833 = vsel %vm370, %v2823, 0.0
      %v2834 = vadd.f32 %v2832, %v2833
      %v2835 = vsel %vm370, %v2824, 0.0
      %v2836 = vadd.f32 %v2834, %v2835
      %v2837 = vsel %vm2456, %v2825, 0.0
      %v2838 = vadd.f32 %v2836, %v2837
      %2839 = vadd.xlane.f32.xlu0 %v2838
      %v2840 = vpop.xlane.xlu0 %2839
      %v2841 = vadd.f32 %v2803, %v2840
      %s2842 = scalar_lea.vmem %s5, 616
      %v2843 = vld [vmem:[%s2842] sm:$0x1f]
      %v2844 = vld [vmem:[%s2842 + $0x8] sm:$0x1f]
      %v2845 = vld [vmem:[%s2842 + $0x10] sm:$0x1f]
      %v2846 = vld [vmem:[%s2842 + $0x18] sm:$0x1f]
      %v2847 = vld [vmem:[%s2842 + $0x20] sm:$0x1f]
      %v2848 = vld [vmem:[%s2842 + $0x28] sm:$0x1f]
      %v2849 = vld [vmem:[%s2842 + $0x30] sm:$0x1f]
      %v2850 = vperm.slane %v2417, 3
      %v2851 = vperm.slane %v2418, 3
      %v2852 = vperm.slane %v2419, 3
      %v2853 = vperm.slane %v2420, 3
      %v2854 = vperm.slane %v2421, 3
      %v2855 = vperm.slane %v2422, 3
      %v2856 = vperm.slane %v2423, 3
      %v2857 = vmul.f32 %v2843, %v2850
      %v2858 = vmul.f32 %v2844, %v2851
      %v2859 = vmul.f32 %v2845, %v2852
      %v2860 = vmul.f32 %v2846, %v2853
      %v2861 = vmul.f32 %v2847, %v2854
      %v2862 = vmul.f32 %v2848, %v2855
      %v2863 = vmul.f32 %v2849, %v2856
      %v2864 = vsel %vm370, %v2857, 0.0
      %v2865 = vsel %vm370, %v2858, 0.0
      %v2866 = vadd.f32 %v2864, %v2865
      %v2867 = vsel %vm370, %v2859, 0.0
      %v2868 = vadd.f32 %v2866, %v2867
      %v2869 = vsel %vm370, %v2860, 0.0
      %v2870 = vadd.f32 %v2868, %v2869
      %v2871 = vsel %vm370, %v2861, 0.0
      %v2872 = vadd.f32 %v2870, %v2871
      %v2873 = vsel %vm370, %v2862, 0.0
      %v2874 = vadd.f32 %v2872, %v2873
      %v2875 = vsel %vm2456, %v2863, 0.0
      %v2876 = vadd.f32 %v2874, %v2875
      %2877 = vadd.xlane.f32.xlu0 %v2876
      %v2878 = vpop.xlane.xlu0 %2877
      %v2879 = vadd.f32 %v2841, %v2878
      %s2880 = scalar_lea.vmem %s5, 672
      %v2881 = vld [vmem:[%s2880] sm:$0x1f]
      %v2882 = vld [vmem:[%s2880 + $0x8] sm:$0x1f]
      %v2883 = vld [vmem:[%s2880 + $0x10] sm:$0x1f]
      %v2884 = vld [vmem:[%s2880 + $0x18] sm:$0x1f]
      %v2885 = vld [vmem:[%s2880 + $0x20] sm:$0x1f]
      %v2886 = vld [vmem:[%s2880 + $0x28] sm:$0x1f]
      %v2887 = vld [vmem:[%s2880 + $0x30] sm:$0x1f]
      %v2888 = vperm.slane %v2417, 4
      %v2889 = vperm.slane %v2418, 4
      %v2890 = vperm.slane %v2419, 4
      %v2891 = vperm.slane %v2420, 4
      %v2892 = vperm.slane %v2421, 4
      %v2893 = vperm.slane %v2422, 4
      %v2894 = vperm.slane %v2423, 4
      %v2895 = vmul.f32 %v2881, %v2888
      %v2896 = vmul.f32 %v2882, %v2889
      %v2897 = vmul.f32 %v2883, %v2890
      %v2898 = vmul.f32 %v2884, %v2891
      %v2899 = vmul.f32 %v2885, %v2892
      %v2900 = vmul.f32 %v2886, %v2893
      %v2901 = vmul.f32 %v2887, %v2894
      %v2902 = vsel %vm370, %v2895, 0.0
      %v2903 = vsel %vm370, %v2896, 0.0
      %v2904 = vadd.f32 %v2902, %v2903
      %v2905 = vsel %vm370, %v2897, 0.0
      %v2906 = vadd.f32 %v2904, %v2905
      %v2907 = vsel %vm370, %v2898, 0.0
      %v2908 = vadd.f32 %v2906, %v2907
      %v2909 = vsel %vm370, %v2899, 0.0
      %v2910 = vadd.f32 %v2908, %v2909
      %v2911 = vsel %vm370, %v2900, 0.0
      %v2912 = vadd.f32 %v2910, %v2911
      %v2913 = vsel %vm2456, %v2901, 0.0
      %v2914 = vadd.f32 %v2912, %v2913
      %2915 = vadd.xlane.f32.xlu0 %v2914
      %v2916 = vpop.xlane.xlu0 %2915
      %v2917 = vadd.f32 %v2879, %v2916
      %s2918 = scalar_lea.vmem %s5, 728
      %v2919 = vld [vmem:[%s2918] sm:$0x1f]
      %v2920 = vld [vmem:[%s2918 + $0x8] sm:$0x1f]
      %v2921 = vld [vmem:[%s2918 + $0x10] sm:$0x1f]
      %v2922 = vld [vmem:[%s2918 + $0x18] sm:$0x1f]
      %v2923 = vld [vmem:[%s2918 + $0x20] sm:$0x1f]
      %v2924 = vld [vmem:[%s2918 + $0x28] sm:$0x1f]
      %v2925 = vld [vmem:[%s2918 + $0x30] sm:$0x1f]
      %v2926 = vperm.slane %v2417, 5
      %v2927 = vperm.slane %v2418, 5
      %v2928 = vperm.slane %v2419, 5
      %v2929 = vperm.slane %v2420, 5
      %v2930 = vperm.slane %v2421, 5
      %v2931 = vperm.slane %v2422, 5
      %v2932 = vperm.slane %v2423, 5
      %v2933 = vmul.f32 %v2919, %v2926
      %v2934 = vmul.f32 %v2920, %v2927
      %v2935 = vmul.f32 %v2921, %v2928
      %v2936 = vmul.f32 %v2922, %v2929
      %v2937 = vmul.f32 %v2923, %v2930
      %v2938 = vmul.f32 %v2924, %v2931
      %v2939 = vmul.f32 %v2925, %v2932
      %v2940 = vsel %vm370, %v2933, 0.0
      %v2941 = vsel %vm370, %v2934, 0.0
      %v2942 = vadd.f32 %v2940, %v2941
      %v2943 = vsel %vm370, %v2935, 0.0
      %v2944 = vadd.f32 %v2942, %v2943
      %v2945 = vsel %vm370, %v2936, 0.0
      %v2946 = vadd.f32 %v2944, %v2945
      %v2947 = vsel %vm370, %v2937, 0.0
      %v2948 = vadd.f32 %v2946, %v2947
      %v2949 = vsel %vm370, %v2938, 0.0
      %v2950 = vadd.f32 %v2948, %v2949
      %v2951 = vsel %vm2456, %v2939, 0.0
      %v2952 = vadd.f32 %v2950, %v2951
      %2953 = vadd.xlane.f32.xlu0 %v2952
      %v2954 = vpop.xlane.xlu0 %2953
      %v2955 = vadd.f32 %v2917, %v2954
      %s2956 = scalar_lea.vmem %s5, 784
      %v2957 = vld [vmem:[%s2956] sm:$0x1f]
      %v2958 = vld [vmem:[%s2956 + $0x8] sm:$0x1f]
      %v2959 = vld [vmem:[%s2956 + $0x10] sm:$0x1f]
      %v2960 = vld [vmem:[%s2956 + $0x18] sm:$0x1f]
      %v2961 = vld [vmem:[%s2956 + $0x20] sm:$0x1f]
      %v2962 = vld [vmem:[%s2956 + $0x28] sm:$0x1f]
      %v2963 = vld [vmem:[%s2956 + $0x30] sm:$0x1f]
      %v2964 = vperm.slane %v2417, 6
      %v2965 = vperm.slane %v2418, 6
      %v2966 = vperm.slane %v2419, 6
      %v2967 = vperm.slane %v2420, 6
      %v2968 = vperm.slane %v2421, 6
      %v2969 = vperm.slane %v2422, 6
      %v2970 = vperm.slane %v2423, 6
      %v2971 = vmul.f32 %v2957, %v2964
      %v2972 = vmul.f32 %v2958, %v2965
      %v2973 = vmul.f32 %v2959, %v2966
      %v2974 = vmul.f32 %v2960, %v2967
      %v2975 = vmul.f32 %v2961, %v2968
      %v2976 = vmul.f32 %v2962, %v2969
      %v2977 = vmul.f32 %v2963, %v2970
      %v2978 = vsel %vm370, %v2971, 0.0
      %v2979 = vsel %vm370, %v2972, 0.0
      %v2980 = vadd.f32 %v2978, %v2979
      %v2981 = vsel %vm370, %v2973, 0.0
      %v2982 = vadd.f32 %v2980, %v2981
      %v2983 = vsel %vm370, %v2974, 0.0
      %v2984 = vadd.f32 %v2982, %v2983
      %v2985 = vsel %vm370, %v2975, 0.0
      %v2986 = vadd.f32 %v2984, %v2985
      %v2987 = vsel %vm370, %v2976, 0.0
      %v2988 = vadd.f32 %v2986, %v2987
      %v2989 = vsel %vm2456, %v2977, 0.0
      %v2990 = vadd.f32 %v2988, %v2989
      %2991 = vadd.xlane.f32.xlu0 %v2990
      %v2992 = vpop.xlane.xlu0 %2991
      %v2993 = vadd.f32 %v2955, %v2992
      %s2994 = scalar_lea.vmem %s5, 840
      %v2995 = vld [vmem:[%s2994] sm:$0x1f]
      %v2996 = vld [vmem:[%s2994 + $0x8] sm:$0x1f]
      %v2997 = vld [vmem:[%s2994 + $0x10] sm:$0x1f]
      %v2998 = vld [vmem:[%s2994 + $0x18] sm:$0x1f]
      %v2999 = vld [vmem:[%s2994 + $0x20] sm:$0x1f]
      %v3000 = vld [vmem:[%s2994 + $0x28] sm:$0x1f]
      %v3001 = vld [vmem:[%s2994 + $0x30] sm:$0x1f]
      %v3002 = vperm.slane %v2417, 7
      %v3003 = vperm.slane %v2418, 7
      %v3004 = vperm.slane %v2419, 7
      %v3005 = vperm.slane %v2420, 7
      %v3006 = vperm.slane %v2421, 7
      %v3007 = vperm.slane %v2422, 7
      %v3008 = vperm.slane %v2423, 7
      %v3009 = vmul.f32 %v2995, %v3002
      %v3010 = vmul.f32 %v2996, %v3003
      %v3011 = vmul.f32 %v2997, %v3004
      %v3012 = vmul.f32 %v2998, %v3005
      %v3013 = vmul.f32 %v2999, %v3006
      %v3014 = vmul.f32 %v3000, %v3007
      %v3015 = vmul.f32 %v3001, %v3008
      %v3016 = vsel %vm370, %v3009, 0.0
      %v3017 = vsel %vm370, %v3010, 0.0
      %v3018 = vadd.f32 %v3016, %v3017
      %v3019 = vsel %vm370, %v3011, 0.0
      %v3020 = vadd.f32 %v3018, %v3019
      %v3021 = vsel %vm370, %v3012, 0.0
      %v3022 = vadd.f32 %v3020, %v3021
      %v3023 = vsel %vm370, %v3013, 0.0
      %v3024 = vadd.f32 %v3022, %v3023
      %v3025 = vsel %vm370, %v3014, 0.0
      %v3026 = vadd.f32 %v3024, %v3025
      %v3027 = vsel %vm2456, %v3015, 0.0
      %v3028 = vadd.f32 %v3026, %v3027
      %3029 = vadd.xlane.f32.xlu0 %v3028
      %v3030 = vpop.xlane.xlu0 %3029
      %v3031 = vadd.f32 %v2993, %v3030
      %v3032 = vld [vmem:[%s6] sm:$0x1f]
      %v3033 = vadd.f32 %v3031, %v3032
      %vm3034 = vcmask 4096
      %3035 = vst.msk [vmem:[%s276] sm:$0x1f] %vm3034, %v3033
      %p3036 = scmp.lt.s32.totalorder %s18, 1
      %s3037 = scalar_select %p3036, %s18, 1
      %s3038 = smul.addr %s3037, 8
      %s3039 = scalar_lea.vmem %s7, %s3038
      // Predicated region
      $region49: #{tiny_conv_forward.1} parent=47 // pred_check
        %p3040 = pneg %p188
      $region50: #{tiny_conv_forward.1} parent=47 // pred_check_branch
        %3042 = sbr.rel (%p3040) target = $region52
      $region51: #{tiny_conv_forward.1} parent=47 // pred_region
        _
      $region52: #{tiny_conv_forward.1} parent=47 // pred_fallthru
        _
    $region48: #{tiny_conv_forward.1} parent=5 // pred_fallthru
      _
    %p3043 = scmp.le.s32.totalorder 2, %s13
    // Predicated region
    $region53: #{tiny_conv_forward.1} parent=5 // pred_check
      %p3044 = pneg %p3043
    $region54: #{tiny_conv_forward.1} parent=5 // pred_check_branch
      %3046 = sbr.rel (%p3044) target = $region56
    $region55: #{tiny_conv_forward.1} parent=5 // pred_region
      %s3047 = ssub.s32 %s13, 2
      // Predicated region
      $region57: #{tiny_conv_forward.1} parent=55 // pred_check
        %p3048 = pneg %p194
      $region58: #{tiny_conv_forward.1} parent=55 // pred_check_branch
        %3050 = sbr.rel (%p3048) target = $region60
      $region59: #{tiny_conv_forward.1} parent=55 // pred_region
        %p3051 = scmp.lt.s32.totalorder %s19, 1
        %s3052 = scalar_select %p3051, %s19, 1
        %s3053 = smul.addr %s3052, 8
        %s3054 = scalar_lea.vmem %s7, %s3053
      $region60: #{tiny_conv_forward.1} parent=55 // pred_fallthru
        _
    $region56: #{tiny_conv_forward.1} parent=5 // pred_fallthru
      _
  $region6: #{tiny_conv_forward.1} parent=0 // loop_footer
    %s17 = sadd.s32 1, %s13
  $region7: #{tiny_conv_forward.1} parent=0 // loop_footer_branch
    %12 = sbr.rel target = $region3
  $region8: #{tiny_conv_forward.1} parent=0 // loop_exit
    _

</llo_original>
